<compile_context>
chip_gen: v7x
topology: tpu7x:2x2x1
jax: 0.10.0
libtpu: 0.0.40
codegen_flags: <defaults>
</compile_context>

<pallas_src>
import jax
import jax.numpy as jnp
import numpy as np
from jax.experimental import pallas as pl
from jax.experimental.pallas import tpu as pltpu

_LANES = 128                      # queries per lane row
_SUBLANES = 32                    # query sublane rows per grid step (>= 8)
_Q_BLOCK = _SUBLANES * _LANES     # 4096 queries per grid step

# Row order inside the (8, N) parameter slab.
_ROW_T, _ROW_A, _ROW_B, _ROW_V, _ROW_YAW, _ROW_PITCH, _ROW_ROLL, _ROW_H = range(8)


def _unicycle_kernel(ts_ref, slab_ref, out_ref):
    """One grid step evaluates a (SUBLANES, LANES) tile of query timestamps.

    ts_ref   : (32, 128)    f32 VMEM  query timestamps
    slab_ref : (8, N)       f32 SMEM  rows = [t, a, b, v, yaw, pitch, roll, h]
    out_ref  : (7, 32, 128) f32 VMEM  rows = [a, b, v, pitch, roll, yaw, h]
    """
    ts = ts_ref[...]                               # (32, 128) full vregs
    n_t = slab_ref.shape[1]

    # --- searchsorted(t, ts, side='left') = #(t[n] < ts) ---------------------
    idx = jnp.zeros(ts.shape, jnp.int32)
    for n in range(n_t):                           # static unroll, scalar reads
        idx = idx + (slab_ref[_ROW_T, n] < ts).astype(jnp.int32)
    idx_c = jnp.minimum(idx, n_t - 1)              # "current" sample (clamped)

    # One compare per keyframe, reused for BOTH the idx and the idx-1 gathers.
    masks = [idx_c == n for n in range(1, n_t)]

    def gather(row):
        # value at idx_c and at max(idx_c - 1, 0): scalar SMEM reads + selects.
        c = jnp.full(ts.shape, slab_ref[row, 0], dtype=jnp.float32)
        p = c
        for n in range(1, n_t):
            m = masks[n - 1]
            c = jnp.where(m, slab_ref[row, n], c)
            p = jnp.where(m, slab_ref[row, n - 1], p)
        return c, p
    # TODO(synk): for N >~ 64 keyframes, replace this unrolled select-gather
    # with a bf16 one-hot matmul on the MXU (hi/lo split for bit-exact f32).

    t_c, t_p = gather(_ROW_T)
    a_c, a_p = gather(_ROW_A)
    b_c, b_p = gather(_ROW_B)
    v_c, v_p = gather(_ROW_V)
    yaw_c, yaw_p = gather(_ROW_YAW)
    pitch_c, pitch_p = gather(_ROW_PITCH)
    roll_c, roll_p = gather(_ROW_ROLL)
    h_c, h_p = gather(_ROW_H)

    before = ts < slab_ref[_ROW_T, 0]
    after = ts > slab_ref[_ROW_T, n_t - 1]
    edge = jnp.logical_or(before, after)
    exact = t_c == ts            # clamping guarantees no false positives at edges

    # --- branch 4: unicycle interpolation from idx-1 --------------------------
    delta = t_c - t_p
    delta = jnp.where(delta == 0.0, 1.0, delta)    # guard; such lanes are masked
    inv_delta = 1.0 / delta                        # one divide, reused twice
    acc = (v_c - v_p) * inv_delta
    omega = (yaw_c - yaw_p) * inv_delta
    dtq = ts - t_p
    v_i = v_p + acc * dtq
    yaw_i = yaw_p + omega * dtq
    inv_om = 1.0 / (omega + 1e-6)                  # EXACT divide (matches torch)
    sin_p, cos_p = jnp.sin(yaw_p), jnp.cos(yaw_p)
    sin_i, cos_i = jnp.sin(yaw_i), jnp.cos(yaw_i)
    a_i = a_p + v_p * (sin_i - sin_p) * inv_om
    b_i = b_p - v_p * (cos_i - cos_p) * inv_om

    # --- branches 1 & 2 (before / after range): shared extrapolation ----------
    #   before: a[0]  - (t[0]-ts)  * cos(yaw[0])  * v[0]
    #   after : a[-1] + (ts-t[-1]) * cos(yaw[-1]) * v[-1]
    dte = ts - t_c
    a_e = a_c + dte * jnp.cos(yaw_c) * v_c
    b_e = b_c + dte * jnp.sin(yaw_c) * v_c

    # --- branch select ---------------------------------------------------------
    def sel(x_edge, x_exact, x_interp):
        return jnp.where(edge, x_edge, jnp.where(exact, x_exact, x_interp))

    out_ref[0, :, :] = sel(a_e, a_c, a_i)
    out_ref[1, :, :] = sel(b_e, b_c, b_i)
    out_ref[2, :, :] = sel(v_c, v_c, v_i)
    out_ref[3, :, :] = sel(pitch_c, pitch_c, pitch_p)
    out_ref[4, :, :] = sel(roll_c, roll_c, roll_p)
    out_ref[5, :, :] = sel(yaw_c, yaw_c, yaw_i)
    out_ref[6, :, :] = sel(h_c, h_c, h_p)


@jax.jit
def _unicycle_pallas(ts_2d, slab):
    r_pad = ts_2d.shape[0]
    return pl.pallas_call(
        _unicycle_kernel,
        out_shape=jax.ShapeDtypeStruct((7, r_pad, _LANES), jnp.float32),
        grid=(r_pad // _SUBLANES,),
        in_specs=[
            pl.BlockSpec((_SUBLANES, _LANES), lambda i: (i, 0)),       # queries
            pl.BlockSpec(memory_space=pltpu.MemorySpace.SMEM),         # slab
        ],
        out_specs=pl.BlockSpec((7, _SUBLANES, _LANES), lambda i: (0, i, 0)),
        compiler_params=pltpu.CompilerParams(
            dimension_semantics=("parallel",)),
    )(ts_2d, slab)


def make_unicycle_params(train_timestamp, centers, eulers, heights=None):
    """Mirrors unicycle.__init__ parameter construction (plain-JAX glue)."""
    t = train_timestamp.astype(jnp.float32)
    delta = jnp.diff(t)
    a = centers[:, 0].astype(jnp.float32)
    b = centers[:, 1].astype(jnp.float32)
    diff_a = jnp.diff(a) / delta
    diff_b = jnp.diff(b) / delta
    v = jnp.sqrt(diff_a ** 2 + diff_b ** 2)
    v = jnp.concatenate([v, v[-1:]])                     # F.pad(..., v[-1])
    pitch = eulers[:, 0].astype(jnp.float32)
    roll = eulers[:, 1].astype(jnp.float32)
    yaw = eulers[:, -1].astype(jnp.float32)
    h = jnp.zeros_like(t) if heights is None else heights.astype(jnp.float32)
    slab = jnp.stack([t, a, b, v, yaw, pitch, roll, h], axis=0)   # (8, N)
    return dict(slab=slab, t=t, a=a, b=b, v=v, yaw=yaw,
                pitch=pitch, roll=roll, h=h)


def unicycle_forward_batch(timestamps, params):
    """Batched unicycle.forward: M query timestamps in one Pallas call."""
    slab = params["slab"]                                # (8, N) f32
    ts = jnp.atleast_1d(jnp.asarray(timestamps, jnp.float32))
    m = ts.shape[0]
    m_pad = ((m + _Q_BLOCK - 1) // _Q_BLOCK) * _Q_BLOCK
    ts_pad = jnp.pad(ts, (0, m_pad - m), mode="edge")
    ts_2d = ts_pad.reshape(m_pad // _LANES, _LANES)
    out = _unicycle_pallas(ts_2d, slab)                  # (7, R, 128)
    out = out.reshape(7, m_pad)[:, :m]
    a, b, v = out[0], out[1], out[2]
    pitchroll = jnp.stack([out[3], out[4]], axis=-1)     # (M, 2)
    yaw, h = out[5], out[6]
    return a, b, v, pitchroll, yaw, h


@jax.jit
def _forward_scalar_jax(ts, slab):
    """Plain-JAX single-timestamp path (a Pallas launch for M=1 is pure overhead)."""
    t, a, b, v = slab[0], slab[1], slab[2], slab[3]
    yaw, pitch, roll, h = slab[4], slab[5], slab[6], slab[7]
    n = t.shape[0]
    idx = jnp.searchsorted(t, ts, side="left").astype(jnp.int32)
    idx_c = jnp.minimum(idx, n - 1)
    idx_p = jnp.clip(idx - 1, 0, n - 1)
    t_c, t_p = t[idx_c], t[idx_p]
    a_c, a_p = a[idx_c], a[idx_p]
    b_c, b_p = b[idx_c], b[idx_p]
    v_c, v_p = v[idx_c], v[idx_p]
    yaw_c, yaw_p = yaw[idx_c], yaw[idx_p]
    pitch_c, pitch_p = pitch[idx_c], pitch[idx_p]
    roll_c, roll_p = roll[idx_c], roll[idx_p]
    h_c, h_p = h[idx_c], h[idx_p]
    before, after = ts < t[0], ts > t[n - 1]
    edge = jnp.logical_or(before, after)
    exact = t_c == ts
    delta = jnp.where(t_c - t_p == 0.0, 1.0, t_c - t_p)
    acc = (v_c - v_p) / delta
    omega = (yaw_c - yaw_p) / delta
    dtq = ts - t_p
    v_i = v_p + acc * dtq
    yaw_i = yaw_p + omega * dtq
    inv_om = 1.0 / (omega + 1e-6)
    a_i = a_p + v_p * (jnp.sin(yaw_i) - jnp.sin(yaw_p)) * inv_om
    b_i = b_p - v_p * (jnp.cos(yaw_i) - jnp.cos(yaw_p)) * inv_om
    dte = ts - t_c
    a_e = a_c + dte * jnp.cos(yaw_c) * v_c
    b_e = b_c + dte * jnp.sin(yaw_c) * v_c

    def sel(x_edge, x_exact, x_interp):
        return jnp.where(edge, x_edge, jnp.where(exact, x_exact, x_interp))

    return (sel(a_e, a_c, a_i), sel(b_e, b_c, b_i), sel(v_c, v_c, v_i),
            jnp.stack([sel(pitch_c, pitch_c, pitch_p),
                       sel(roll_c, roll_c, roll_p)]),
            sel(yaw_c, yaw_c, yaw_i), sel(h_c, h_c, h_p))


def unicycle_forward(timestamp, params):
    """Single-timestamp API mirroring unicycle.forward(timestamp)."""
    ts = jnp.asarray(timestamp, jnp.float32).reshape(())
    return _forward_scalar_jax(ts, params["slab"])


def ref_forward(timestamp, params):
    """Pure-numpy reference reproducing the PyTorch forward semantics."""
    t = np.asarray(params["t"], np.float32)
    a = np.asarray(params["a"], np.float32)
    b = np.asarray(params["b"], np.float32)
    v = np.asarray(params["v"], np.float32)
    yaw = np.asarray(params["yaw"], np.float32)
    pitch = np.asarray(params["pitch"], np.float32)
    roll = np.asarray(params["roll"], np.float32)
    h = np.asarray(params["h"], np.float32)
    ts = np.float32(timestamp)

    if ts < t[0]:
        dt = t[0] - ts
        return (a[0] - dt * np.cos(yaw[0]) * v[0],
                b[0] - dt * np.sin(yaw[0]) * v[0],
                v[0], np.array([pitch[0], roll[0]]), yaw[0], h[0])
    if ts > t[-1]:
        dt = ts - t[-1]
        return (a[-1] + dt * np.cos(yaw[-1]) * v[-1],
                b[-1] + dt * np.sin(yaw[-1]) * v[-1],
                v[-1], np.array([pitch[-1], roll[-1]]), yaw[-1], h[-1])
    idx = int(np.searchsorted(t, ts, side="left"))
    if t[idx] == ts:
        return (a[idx], b[idx], v[idx],
                np.array([pitch[idx], roll[idx]]), yaw[idx], h[idx])
    delta = t[idx] - t[idx - 1]
    acc = (v[idx] - v[idx - 1]) / delta
    omega = (yaw[idx] - yaw[idx - 1]) / delta
    dt = ts - t[idx - 1]
    v_i = v[idx - 1] + acc * dt
    yaw_i = yaw[idx - 1] + omega * dt
    a_i = a[idx - 1] + v[idx - 1] * ((np.sin(yaw_i) - np.sin(yaw[idx - 1])) / (omega + 1e-6))
    b_i = b[idx - 1] - v[idx - 1] * ((np.cos(yaw_i) - np.cos(yaw[idx - 1])) / (omega + 1e-6))
    return (a_i, b_i, v_i,
            np.array([pitch[idx - 1], roll[idx - 1]]), yaw_i, h[idx - 1])


if __name__ == "__main__":
    key = jax.random.PRNGKey(0)
    k1, k2 = jax.random.split(key)

    N = 8
    train_timestamp = jnp.arange(N, dtype=jnp.float32) * 0.5     # [0.0 .. 3.5]
    centers = jax.random.normal(k1, (N, 2), dtype=jnp.float32) * 2.0
    eulers = jax.random.normal(k2, (N, 3), dtype=jnp.float32) * 0.3

    params = make_unicycle_params(train_timestamp, centers, eulers, heights=None)

    # All four branches in ONE batched kernel call:
    # before-range, exact hit at t[0], interpolation, exact interior hit,
    # interpolation, exact hit at t[-1], after-range.
    test_ts = np.array([-0.7, 0.0, 1.23, 1.5, 2.75, 3.5, 5.0], dtype=np.float32)

    outs = unicycle_forward_batch(jnp.asarray(test_ts), params)
    outs = jax.block_until_ready(outs)
    a, b, v, pr, yaw, h = [np.asarray(x, np.float32) for x in outs]

    ok = True
    for i, ts in enumerate(test_ts):
        exp = ref_forward(ts, params)
        exp = np.concatenate([np.atleast_1d(np.asarray(x, np.float32)) for x in exp])
        got = np.array([a[i], b[i], v[i], pr[i, 0], pr[i, 1], yaw[i], h[i]],
                       dtype=np.float32)
        if not np.allclose(got, exp, rtol=1e-3, atol=1e-3):
            ok = False
            print("mismatch at ts=", ts, got, exp)

    # Single-timestamp API parity check (plain-JAX fast path).
    one = unicycle_forward(jnp.float32(1.23), params)
    one = jax.block_until_ready(one)
    exp = ref_forward(1.23, params)
    got = np.concatenate([np.atleast_1d(np.asarray(x, np.float32)) for x in one])
    expc = np.concatenate([np.atleast_1d(np.asarray(x, np.float32)) for x in exp])
    if not np.allclose(got, expc, rtol=1e-3, atol=1e-3):
        ok = False
        print("mismatch single-ts API", got, expc)

    if ok:
        print("KERNEL_OK")
</pallas_src>

<mosaic_0001>
module attributes {stable_mosaic.version = 11 : i64} {
  func.func @_unicycle_kernel(%arg0: i32, %arg1: memref<32x128xf32, #tpu.memory_space<vmem>>, %arg2: memref<8x8xf32, #tpu.memory_space<smem>>, %arg3: memref<7x32x128xf32, #tpu.memory_space<vmem>>) attributes {dimension_semantics = [#tpu.dimension_semantics<parallel>], iteration_bounds = array<i64: 1>, scalar_prefetch = 0 : i64, scratch_operands = 0 : i64, tpu.core_type = #tpu.core_type<tc>, window_params = [{transform_indices = @transform_0, window_bounds = array<i64: 32, 128>}, {transform_indices = @transform_1, window_bounds = array<i64: 8, 8>}, {transform_indices = @transform_2, window_bounds = array<i64: 7, 32, 128>}]} {
    %c0 = arith.constant 0 : index
    %c0_0 = arith.constant 0 : index
    %0 = vector.load %arg1[%c0, %c0_0] : memref<32x128xf32, #tpu.memory_space<vmem>>, vector<32x128xf32>
    %c0_i32 = arith.constant 0 : i32
    %1 = vector.broadcast %c0_i32 : i32 to vector<32x128xi32>
    %c0_1 = arith.constant 0 : index
    %c0_2 = arith.constant 0 : index
    %2 = memref.load %arg2[%c0_1, %c0_2] : memref<8x8xf32, #tpu.memory_space<smem>>
    %3 = vector.broadcast %2 : f32 to vector<32x128xf32>
    %4 = arith.cmpf olt, %3, %0 : vector<32x128xf32>
    %5 = arith.extui %4 : vector<32x128xi1> to vector<32x128xi32>
    %6 = arith.addi %1, %5 : vector<32x128xi32>
    %c0_3 = arith.constant 0 : index
    %c1 = arith.constant 1 : index
    %7 = memref.load %arg2[%c0_3, %c1] : memref<8x8xf32, #tpu.memory_space<smem>>
    %8 = vector.broadcast %7 : f32 to vector<32x128xf32>
    %9 = arith.cmpf olt, %8, %0 : vector<32x128xf32>
    %10 = arith.extui %9 : vector<32x128xi1> to vector<32x128xi32>
    %11 = arith.addi %6, %10 : vector<32x128xi32>
    %c0_4 = arith.constant 0 : index
    %c2 = arith.constant 2 : index
    %12 = memref.load %arg2[%c0_4, %c2] : memref<8x8xf32, #tpu.memory_space<smem>>
    %13 = vector.broadcast %12 : f32 to vector<32x128xf32>
    %14 = arith.cmpf olt, %13, %0 : vector<32x128xf32>
    %15 = arith.extui %14 : vector<32x128xi1> to vector<32x128xi32>
    %16 = arith.addi %11, %15 : vector<32x128xi32>
    %c0_5 = arith.constant 0 : index
    %c3 = arith.constant 3 : index
    %17 = memref.load %arg2[%c0_5, %c3] : memref<8x8xf32, #tpu.memory_space<smem>>
    %18 = vector.broadcast %17 : f32 to vector<32x128xf32>
    %19 = arith.cmpf olt, %18, %0 : vector<32x128xf32>
    %20 = arith.extui %19 : vector<32x128xi1> to vector<32x128xi32>
    %21 = arith.addi %16, %20 : vector<32x128xi32>
    %c0_6 = arith.constant 0 : index
    %c4 = arith.constant 4 : index
    %22 = memref.load %arg2[%c0_6, %c4] : memref<8x8xf32, #tpu.memory_space<smem>>
    %23 = vector.broadcast %22 : f32 to vector<32x128xf32>
    %24 = arith.cmpf olt, %23, %0 : vector<32x128xf32>
    %25 = arith.extui %24 : vector<32x128xi1> to vector<32x128xi32>
    %26 = arith.addi %21, %25 : vector<32x128xi32>
    %c0_7 = arith.constant 0 : index
    %c5 = arith.constant 5 : index
    %27 = memref.load %arg2[%c0_7, %c5] : memref<8x8xf32, #tpu.memory_space<smem>>
    %28 = vector.broadcast %27 : f32 to vector<32x128xf32>
    %29 = arith.cmpf olt, %28, %0 : vector<32x128xf32>
    %30 = arith.extui %29 : vector<32x128xi1> to vector<32x128xi32>
    %31 = arith.addi %26, %30 : vector<32x128xi32>
    %c0_8 = arith.constant 0 : index
    %c6 = arith.constant 6 : index
    %32 = memref.load %arg2[%c0_8, %c6] : memref<8x8xf32, #tpu.memory_space<smem>>
    %33 = vector.broadcast %32 : f32 to vector<32x128xf32>
    %34 = arith.cmpf olt, %33, %0 : vector<32x128xf32>
    %35 = arith.extui %34 : vector<32x128xi1> to vector<32x128xi32>
    %36 = arith.addi %31, %35 : vector<32x128xi32>
    %c0_9 = arith.constant 0 : index
    %c7 = arith.constant 7 : index
    %37 = memref.load %arg2[%c0_9, %c7] : memref<8x8xf32, #tpu.memory_space<smem>>
    %38 = vector.broadcast %37 : f32 to vector<32x128xf32>
    %39 = arith.cmpf olt, %38, %0 : vector<32x128xf32>
    %40 = arith.extui %39 : vector<32x128xi1> to vector<32x128xi32>
    %41 = arith.addi %36, %40 : vector<32x128xi32>
    %c7_i32 = arith.constant 7 : i32
    %42 = vector.broadcast %c7_i32 : i32 to vector<32x128xi32>
    %43 = arith.minsi %41, %42 : vector<32x128xi32>
    %c1_i32 = arith.constant 1 : i32
    %44 = vector.broadcast %c1_i32 : i32 to vector<32x128xi32>
    %45 = arith.cmpi eq, %43, %44 : vector<32x128xi32>
    %c2_i32 = arith.constant 2 : i32
    %46 = vector.broadcast %c2_i32 : i32 to vector<32x128xi32>
    %47 = arith.cmpi eq, %43, %46 : vector<32x128xi32>
    %c3_i32 = arith.constant 3 : i32
    %48 = vector.broadcast %c3_i32 : i32 to vector<32x128xi32>
    %49 = arith.cmpi eq, %43, %48 : vector<32x128xi32>
    %c4_i32 = arith.constant 4 : i32
    %50 = vector.broadcast %c4_i32 : i32 to vector<32x128xi32>
    %51 = arith.cmpi eq, %43, %50 : vector<32x128xi32>
    %c5_i32 = arith.constant 5 : i32
    %52 = vector.broadcast %c5_i32 : i32 to vector<32x128xi32>
    %53 = arith.cmpi eq, %43, %52 : vector<32x128xi32>
    %c6_i32 = arith.constant 6 : i32
    %54 = vector.broadcast %c6_i32 : i32 to vector<32x128xi32>
    %55 = arith.cmpi eq, %43, %54 : vector<32x128xi32>
    %c7_i32_10 = arith.constant 7 : i32
    %56 = vector.broadcast %c7_i32_10 : i32 to vector<32x128xi32>
    %57 = arith.cmpi eq, %43, %56 : vector<32x128xi32>
    %c0_11 = arith.constant 0 : index
    %c0_12 = arith.constant 0 : index
    %58 = memref.load %arg2[%c0_11, %c0_12] : memref<8x8xf32, #tpu.memory_space<smem>>
    %59 = vector.broadcast %58 : f32 to vector<32x128xf32>
    %c0_13 = arith.constant 0 : index
    %c1_14 = arith.constant 1 : index
    %60 = memref.load %arg2[%c0_13, %c1_14] : memref<8x8xf32, #tpu.memory_space<smem>>
    %61 = vector.broadcast %60 : f32 to vector<32x128xf32>
    %62 = arith.select %45, %61, %59 : vector<32x128xi1>, vector<32x128xf32>
    %c0_15 = arith.constant 0 : index
    %c0_16 = arith.constant 0 : index
    %63 = memref.load %arg2[%c0_15, %c0_16] : memref<8x8xf32, #tpu.memory_space<smem>>
    %64 = vector.broadcast %63 : f32 to vector<32x128xf32>
    %65 = arith.select %45, %64, %59 : vector<32x128xi1>, vector<32x128xf32>
    %c0_17 = arith.constant 0 : index
    %c2_18 = arith.constant 2 : index
    %66 = memref.load %arg2[%c0_17, %c2_18] : memref<8x8xf32, #tpu.memory_space<smem>>
    %67 = vector.broadcast %66 : f32 to vector<32x128xf32>
    %68 = arith.select %47, %67, %62 : vector<32x128xi1>, vector<32x128xf32>
    %c0_19 = arith.constant 0 : index
    %c1_20 = arith.constant 1 : index
    %69 = memref.load %arg2[%c0_19, %c1_20] : memref<8x8xf32, #tpu.memory_space<smem>>
    %70 = vector.broadcast %69 : f32 to vector<32x128xf32>
    %71 = arith.select %47, %70, %65 : vector<32x128xi1>, vector<32x128xf32>
    %c0_21 = arith.constant 0 : index
    %c3_22 = arith.constant 3 : index
    %72 = memref.load %arg2[%c0_21, %c3_22] : memref<8x8xf32, #tpu.memory_space<smem>>
    %73 = vector.broadcast %72 : f32 to vector<32x128xf32>
    %74 = arith.select %49, %73, %68 : vector<32x128xi1>, vector<32x128xf32>
    %c0_23 = arith.constant 0 : index
    %c2_24 = arith.constant 2 : index
    %75 = memref.load %arg2[%c0_23, %c2_24] : memref<8x8xf32, #tpu.memory_space<smem>>
    %76 = vector.broadcast %75 : f32 to vector<32x128xf32>
    %77 = arith.select %49, %76, %71 : vector<32x128xi1>, vector<32x128xf32>
    %c0_25 = arith.constant 0 : index
    %c4_26 = arith.constant 4 : index
    %78 = memref.load %arg2[%c0_25, %c4_26] : memref<8x8xf32, #tpu.memory_space<smem>>
    %79 = vector.broadcast %78 : f32 to vector<32x128xf32>
    %80 = arith.select %51, %79, %74 : vector<32x128xi1>, vector<32x128xf32>
    %c0_27 = arith.constant 0 : index
    %c3_28 = arith.constant 3 : index
    %81 = memref.load %arg2[%c0_27, %c3_28] : memref<8x8xf32, #tpu.memory_space<smem>>
    %82 = vector.broadcast %81 : f32 to vector<32x128xf32>
    %83 = arith.select %51, %82, %77 : vector<32x128xi1>, vector<32x128xf32>
    %c0_29 = arith.constant 0 : index
    %c5_30 = arith.constant 5 : index
    %84 = memref.load %arg2[%c0_29, %c5_30] : memref<8x8xf32, #tpu.memory_space<smem>>
    %85 = vector.broadcast %84 : f32 to vector<32x128xf32>
    %86 = arith.select %53, %85, %80 : vector<32x128xi1>, vector<32x128xf32>
    %c0_31 = arith.constant 0 : index
    %c4_32 = arith.constant 4 : index
    %87 = memref.load %arg2[%c0_31, %c4_32] : memref<8x8xf32, #tpu.memory_space<smem>>
    %88 = vector.broadcast %87 : f32 to vector<32x128xf32>
    %89 = arith.select %53, %88, %83 : vector<32x128xi1>, vector<32x128xf32>
    %c0_33 = arith.constant 0 : index
    %c6_34 = arith.constant 6 : index
    %90 = memref.load %arg2[%c0_33, %c6_34] : memref<8x8xf32, #tpu.memory_space<smem>>
    %91 = vector.broadcast %90 : f32 to vector<32x128xf32>
    %92 = arith.select %55, %91, %86 : vector<32x128xi1>, vector<32x128xf32>
    %c0_35 = arith.constant 0 : index
    %c5_36 = arith.constant 5 : index
    %93 = memref.load %arg2[%c0_35, %c5_36] : memref<8x8xf32, #tpu.memory_space<smem>>
    %94 = vector.broadcast %93 : f32 to vector<32x128xf32>
    %95 = arith.select %55, %94, %89 : vector<32x128xi1>, vector<32x128xf32>
    %c0_37 = arith.constant 0 : index
    %c7_38 = arith.constant 7 : index
    %96 = memref.load %arg2[%c0_37, %c7_38] : memref<8x8xf32, #tpu.memory_space<smem>>
    %97 = vector.broadcast %96 : f32 to vector<32x128xf32>
    %98 = arith.select %57, %97, %92 : vector<32x128xi1>, vector<32x128xf32>
    %c0_39 = arith.constant 0 : index
    %c6_40 = arith.constant 6 : index
    %99 = memref.load %arg2[%c0_39, %c6_40] : memref<8x8xf32, #tpu.memory_space<smem>>
    %100 = vector.broadcast %99 : f32 to vector<32x128xf32>
    %101 = arith.select %57, %100, %95 : vector<32x128xi1>, vector<32x128xf32>
    %c1_41 = arith.constant 1 : index
    %c0_42 = arith.constant 0 : index
    %102 = memref.load %arg2[%c1_41, %c0_42] : memref<8x8xf32, #tpu.memory_space<smem>>
    %103 = vector.broadcast %102 : f32 to vector<32x128xf32>
    %c1_43 = arith.constant 1 : index
    %c1_44 = arith.constant 1 : index
    %104 = memref.load %arg2[%c1_43, %c1_44] : memref<8x8xf32, #tpu.memory_space<smem>>
    %105 = vector.broadcast %104 : f32 to vector<32x128xf32>
    %106 = arith.select %45, %105, %103 : vector<32x128xi1>, vector<32x128xf32>
    %c1_45 = arith.constant 1 : index
    %c0_46 = arith.constant 0 : index
    %107 = memref.load %arg2[%c1_45, %c0_46] : memref<8x8xf32, #tpu.memory_space<smem>>
    %108 = vector.broadcast %107 : f32 to vector<32x128xf32>
    %109 = arith.select %45, %108, %103 : vector<32x128xi1>, vector<32x128xf32>
    %c1_47 = arith.constant 1 : index
    %c2_48 = arith.constant 2 : index
    %110 = memref.load %arg2[%c1_47, %c2_48] : memref<8x8xf32, #tpu.memory_space<smem>>
    %111 = vector.broadcast %110 : f32 to vector<32x128xf32>
    %112 = arith.select %47, %111, %106 : vector<32x128xi1>, vector<32x128xf32>
    %c1_49 = arith.constant 1 : index
    %c1_50 = arith.constant 1 : index
    %113 = memref.load %arg2[%c1_49, %c1_50] : memref<8x8xf32, #tpu.memory_space<smem>>
    %114 = vector.broadcast %113 : f32 to vector<32x128xf32>
    %115 = arith.select %47, %114, %109 : vector<32x128xi1>, vector<32x128xf32>
    %c1_51 = arith.constant 1 : index
    %c3_52 = arith.constant 3 : index
    %116 = memref.load %arg2[%c1_51, %c3_52] : memref<8x8xf32, #tpu.memory_space<smem>>
    %117 = vector.broadcast %116 : f32 to vector<32x128xf32>
    %118 = arith.select %49, %117, %112 : vector<32x128xi1>, vector<32x128xf32>
    %c1_53 = arith.constant 1 : index
    %c2_54 = arith.constant 2 : index
    %119 = memref.load %arg2[%c1_53, %c2_54] : memref<8x8xf32, #tpu.memory_space<smem>>
    %120 = vector.broadcast %119 : f32 to vector<32x128xf32>
    %121 = arith.select %49, %120, %115 : vector<32x128xi1>, vector<32x128xf32>
    %c1_55 = arith.constant 1 : index
    %c4_56 = arith.constant 4 : index
    %122 = memref.load %arg2[%c1_55, %c4_56] : memref<8x8xf32, #tpu.memory_space<smem>>
    %123 = vector.broadcast %122 : f32 to vector<32x128xf32>
    %124 = arith.select %51, %123, %118 : vector<32x128xi1>, vector<32x128xf32>
    %c1_57 = arith.constant 1 : index
    %c3_58 = arith.constant 3 : index
    %125 = memref.load %arg2[%c1_57, %c3_58] : memref<8x8xf32, #tpu.memory_space<smem>>
    %126 = vector.broadcast %125 : f32 to vector<32x128xf32>
    %127 = arith.select %51, %126, %121 : vector<32x128xi1>, vector<32x128xf32>
    %c1_59 = arith.constant 1 : index
    %c5_60 = arith.constant 5 : index
    %128 = memref.load %arg2[%c1_59, %c5_60] : memref<8x8xf32, #tpu.memory_space<smem>>
    %129 = vector.broadcast %128 : f32 to vector<32x128xf32>
    %130 = arith.select %53, %129, %124 : vector<32x128xi1>, vector<32x128xf32>
    %c1_61 = arith.constant 1 : index
    %c4_62 = arith.constant 4 : index
    %131 = memref.load %arg2[%c1_61, %c4_62] : memref<8x8xf32, #tpu.memory_space<smem>>
    %132 = vector.broadcast %131 : f32 to vector<32x128xf32>
    %133 = arith.select %53, %132, %127 : vector<32x128xi1>, vector<32x128xf32>
    %c1_63 = arith.constant 1 : index
    %c6_64 = arith.constant 6 : index
    %134 = memref.load %arg2[%c1_63, %c6_64] : memref<8x8xf32, #tpu.memory_space<smem>>
    %135 = vector.broadcast %134 : f32 to vector<32x128xf32>
    %136 = arith.select %55, %135, %130 : vector<32x128xi1>, vector<32x128xf32>
    %c1_65 = arith.constant 1 : index
    %c5_66 = arith.constant 5 : index
    %137 = memref.load %arg2[%c1_65, %c5_66] : memref<8x8xf32, #tpu.memory_space<smem>>
    %138 = vector.broadcast %137 : f32 to vector<32x128xf32>
    %139 = arith.select %55, %138, %133 : vector<32x128xi1>, vector<32x128xf32>
    %c1_67 = arith.constant 1 : index
    %c7_68 = arith.constant 7 : index
    %140 = memref.load %arg2[%c1_67, %c7_68] : memref<8x8xf32, #tpu.memory_space<smem>>
    %141 = vector.broadcast %140 : f32 to vector<32x128xf32>
    %142 = arith.select %57, %141, %136 : vector<32x128xi1>, vector<32x128xf32>
    %c1_69 = arith.constant 1 : index
    %c6_70 = arith.constant 6 : index
    %143 = memref.load %arg2[%c1_69, %c6_70] : memref<8x8xf32, #tpu.memory_space<smem>>
    %144 = vector.broadcast %143 : f32 to vector<32x128xf32>
    %145 = arith.select %57, %144, %139 : vector<32x128xi1>, vector<32x128xf32>
    %c2_71 = arith.constant 2 : index
    %c0_72 = arith.constant 0 : index
    %146 = memref.load %arg2[%c2_71, %c0_72] : memref<8x8xf32, #tpu.memory_space<smem>>
    %147 = vector.broadcast %146 : f32 to vector<32x128xf32>
    %c2_73 = arith.constant 2 : index
    %c1_74 = arith.constant 1 : index
    %148 = memref.load %arg2[%c2_73, %c1_74] : memref<8x8xf32, #tpu.memory_space<smem>>
    %149 = vector.broadcast %148 : f32 to vector<32x128xf32>
    %150 = arith.select %45, %149, %147 : vector<32x128xi1>, vector<32x128xf32>
    %c2_75 = arith.constant 2 : index
    %c0_76 = arith.constant 0 : index
    %151 = memref.load %arg2[%c2_75, %c0_76] : memref<8x8xf32, #tpu.memory_space<smem>>
    %152 = vector.broadcast %151 : f32 to vector<32x128xf32>
    %153 = arith.select %45, %152, %147 : vector<32x128xi1>, vector<32x128xf32>
    %c2_77 = arith.constant 2 : index
    %c2_78 = arith.constant 2 : index
    %154 = memref.load %arg2[%c2_77, %c2_78] : memref<8x8xf32, #tpu.memory_space<smem>>
    %155 = vector.broadcast %154 : f32 to vector<32x128xf32>
    %156 = arith.select %47, %155, %150 : vector<32x128xi1>, vector<32x128xf32>
    %c2_79 = arith.constant 2 : index
    %c1_80 = arith.constant 1 : index
    %157 = memref.load %arg2[%c2_79, %c1_80] : memref<8x8xf32, #tpu.memory_space<smem>>
    %158 = vector.broadcast %157 : f32 to vector<32x128xf32>
    %159 = arith.select %47, %158, %153 : vector<32x128xi1>, vector<32x128xf32>
    %c2_81 = arith.constant 2 : index
    %c3_82 = arith.constant 3 : index
    %160 = memref.load %arg2[%c2_81, %c3_82] : memref<8x8xf32, #tpu.memory_space<smem>>
    %161 = vector.broadcast %160 : f32 to vector<32x128xf32>
    %162 = arith.select %49, %161, %156 : vector<32x128xi1>, vector<32x128xf32>
    %c2_83 = arith.constant 2 : index
    %c2_84 = arith.constant 2 : index
    %163 = memref.load %arg2[%c2_83, %c2_84] : memref<8x8xf32, #tpu.memory_space<smem>>
    %164 = vector.broadcast %163 : f32 to vector<32x128xf32>
    %165 = arith.select %49, %164, %159 : vector<32x128xi1>, vector<32x128xf32>
    %c2_85 = arith.constant 2 : index
    %c4_86 = arith.constant 4 : index
    %166 = memref.load %arg2[%c2_85, %c4_86] : memref<8x8xf32, #tpu.memory_space<smem>>
    %167 = vector.broadcast %166 : f32 to vector<32x128xf32>
    %168 = arith.select %51, %167, %162 : vector<32x128xi1>, vector<32x128xf32>
    %c2_87 = arith.constant 2 : index
    %c3_88 = arith.constant 3 : index
    %169 = memref.load %arg2[%c2_87, %c3_88] : memref<8x8xf32, #tpu.memory_space<smem>>
    %170 = vector.broadcast %169 : f32 to vector<32x128xf32>
    %171 = arith.select %51, %170, %165 : vector<32x128xi1>, vector<32x128xf32>
    %c2_89 = arith.constant 2 : index
    %c5_90 = arith.constant 5 : index
    %172 = memref.load %arg2[%c2_89, %c5_90] : memref<8x8xf32, #tpu.memory_space<smem>>
    %173 = vector.broadcast %172 : f32 to vector<32x128xf32>
    %174 = arith.select %53, %173, %168 : vector<32x128xi1>, vector<32x128xf32>
    %c2_91 = arith.constant 2 : index
    %c4_92 = arith.constant 4 : index
    %175 = memref.load %arg2[%c2_91, %c4_92] : memref<8x8xf32, #tpu.memory_space<smem>>
    %176 = vector.broadcast %175 : f32 to vector<32x128xf32>
    %177 = arith.select %53, %176, %171 : vector<32x128xi1>, vector<32x128xf32>
    %c2_93 = arith.constant 2 : index
    %c6_94 = arith.constant 6 : index
    %178 = memref.load %arg2[%c2_93, %c6_94] : memref<8x8xf32, #tpu.memory_space<smem>>
    %179 = vector.broadcast %178 : f32 to vector<32x128xf32>
    %180 = arith.select %55, %179, %174 : vector<32x128xi1>, vector<32x128xf32>
    %c2_95 = arith.constant 2 : index
    %c5_96 = arith.constant 5 : index
    %181 = memref.load %arg2[%c2_95, %c5_96] : memref<8x8xf32, #tpu.memory_space<smem>>
    %182 = vector.broadcast %181 : f32 to vector<32x128xf32>
    %183 = arith.select %55, %182, %177 : vector<32x128xi1>, vector<32x128xf32>
    %c2_97 = arith.constant 2 : index
    %c7_98 = arith.constant 7 : index
    %184 = memref.load %arg2[%c2_97, %c7_98] : memref<8x8xf32, #tpu.memory_space<smem>>
    %185 = vector.broadcast %184 : f32 to vector<32x128xf32>
    %186 = arith.select %57, %185, %180 : vector<32x128xi1>, vector<32x128xf32>
    %c2_99 = arith.constant 2 : index
    %c6_100 = arith.constant 6 : index
    %187 = memref.load %arg2[%c2_99, %c6_100] : memref<8x8xf32, #tpu.memory_space<smem>>
    %188 = vector.broadcast %187 : f32 to vector<32x128xf32>
    %189 = arith.select %57, %188, %183 : vector<32x128xi1>, vector<32x128xf32>
    %c3_101 = arith.constant 3 : index
    %c0_102 = arith.constant 0 : index
    %190 = memref.load %arg2[%c3_101, %c0_102] : memref<8x8xf32, #tpu.memory_space<smem>>
    %191 = vector.broadcast %190 : f32 to vector<32x128xf32>
    %c3_103 = arith.constant 3 : index
    %c1_104 = arith.constant 1 : index
    %192 = memref.load %arg2[%c3_103, %c1_104] : memref<8x8xf32, #tpu.memory_space<smem>>
    %193 = vector.broadcast %192 : f32 to vector<32x128xf32>
    %194 = arith.select %45, %193, %191 : vector<32x128xi1>, vector<32x128xf32>
    %c3_105 = arith.constant 3 : index
    %c0_106 = arith.constant 0 : index
    %195 = memref.load %arg2[%c3_105, %c0_106] : memref<8x8xf32, #tpu.memory_space<smem>>
    %196 = vector.broadcast %195 : f32 to vector<32x128xf32>
    %197 = arith.select %45, %196, %191 : vector<32x128xi1>, vector<32x128xf32>
    %c3_107 = arith.constant 3 : index
    %c2_108 = arith.constant 2 : index
    %198 = memref.load %arg2[%c3_107, %c2_108] : memref<8x8xf32, #tpu.memory_space<smem>>
    %199 = vector.broadcast %198 : f32 to vector<32x128xf32>
    %200 = arith.select %47, %199, %194 : vector<32x128xi1>, vector<32x128xf32>
    %c3_109 = arith.constant 3 : index
    %c1_110 = arith.constant 1 : index
    %201 = memref.load %arg2[%c3_109, %c1_110] : memref<8x8xf32, #tpu.memory_space<smem>>
    %202 = vector.broadcast %201 : f32 to vector<32x128xf32>
    %203 = arith.select %47, %202, %197 : vector<32x128xi1>, vector<32x128xf32>
    %c3_111 = arith.constant 3 : index
    %c3_112 = arith.constant 3 : index
    %204 = memref.load %arg2[%c3_111, %c3_112] : memref<8x8xf32, #tpu.memory_space<smem>>
    %205 = vector.broadcast %204 : f32 to vector<32x128xf32>
    %206 = arith.select %49, %205, %200 : vector<32x128xi1>, vector<32x128xf32>
    %c3_113 = arith.constant 3 : index
    %c2_114 = arith.constant 2 : index
    %207 = memref.load %arg2[%c3_113, %c2_114] : memref<8x8xf32, #tpu.memory_space<smem>>
    %208 = vector.broadcast %207 : f32 to vector<32x128xf32>
    %209 = arith.select %49, %208, %203 : vector<32x128xi1>, vector<32x128xf32>
    %c3_115 = arith.constant 3 : index
    %c4_116 = arith.constant 4 : index
    %210 = memref.load %arg2[%c3_115, %c4_116] : memref<8x8xf32, #tpu.memory_space<smem>>
    %211 = vector.broadcast %210 : f32 to vector<32x128xf32>
    %212 = arith.select %51, %211, %206 : vector<32x128xi1>, vector<32x128xf32>
    %c3_117 = arith.constant 3 : index
    %c3_118 = arith.constant 3 : index
    %213 = memref.load %arg2[%c3_117, %c3_118] : memref<8x8xf32, #tpu.memory_space<smem>>
    %214 = vector.broadcast %213 : f32 to vector<32x128xf32>
    %215 = arith.select %51, %214, %209 : vector<32x128xi1>, vector<32x128xf32>
    %c3_119 = arith.constant 3 : index
    %c5_120 = arith.constant 5 : index
    %216 = memref.load %arg2[%c3_119, %c5_120] : memref<8x8xf32, #tpu.memory_space<smem>>
    %217 = vector.broadcast %216 : f32 to vector<32x128xf32>
    %218 = arith.select %53, %217, %212 : vector<32x128xi1>, vector<32x128xf32>
    %c3_121 = arith.constant 3 : index
    %c4_122 = arith.constant 4 : index
    %219 = memref.load %arg2[%c3_121, %c4_122] : memref<8x8xf32, #tpu.memory_space<smem>>
    %220 = vector.broadcast %219 : f32 to vector<32x128xf32>
    %221 = arith.select %53, %220, %215 : vector<32x128xi1>, vector<32x128xf32>
    %c3_123 = arith.constant 3 : index
    %c6_124 = arith.constant 6 : index
    %222 = memref.load %arg2[%c3_123, %c6_124] : memref<8x8xf32, #tpu.memory_space<smem>>
    %223 = vector.broadcast %222 : f32 to vector<32x128xf32>
    %224 = arith.select %55, %223, %218 : vector<32x128xi1>, vector<32x128xf32>
    %c3_125 = arith.constant 3 : index
    %c5_126 = arith.constant 5 : index
    %225 = memref.load %arg2[%c3_125, %c5_126] : memref<8x8xf32, #tpu.memory_space<smem>>
    %226 = vector.broadcast %225 : f32 to vector<32x128xf32>
    %227 = arith.select %55, %226, %221 : vector<32x128xi1>, vector<32x128xf32>
    %c3_127 = arith.constant 3 : index
    %c7_128 = arith.constant 7 : index
    %228 = memref.load %arg2[%c3_127, %c7_128] : memref<8x8xf32, #tpu.memory_space<smem>>
    %229 = vector.broadcast %228 : f32 to vector<32x128xf32>
    %230 = arith.select %57, %229, %224 : vector<32x128xi1>, vector<32x128xf32>
    %c3_129 = arith.constant 3 : index
    %c6_130 = arith.constant 6 : index
    %231 = memref.load %arg2[%c3_129, %c6_130] : memref<8x8xf32, #tpu.memory_space<smem>>
    %232 = vector.broadcast %231 : f32 to vector<32x128xf32>
    %233 = arith.select %57, %232, %227 : vector<32x128xi1>, vector<32x128xf32>
    %c4_131 = arith.constant 4 : index
    %c0_132 = arith.constant 0 : index
    %234 = memref.load %arg2[%c4_131, %c0_132] : memref<8x8xf32, #tpu.memory_space<smem>>
    %235 = vector.broadcast %234 : f32 to vector<32x128xf32>
    %c4_133 = arith.constant 4 : index
    %c1_134 = arith.constant 1 : index
    %236 = memref.load %arg2[%c4_133, %c1_134] : memref<8x8xf32, #tpu.memory_space<smem>>
    %237 = vector.broadcast %236 : f32 to vector<32x128xf32>
    %238 = arith.select %45, %237, %235 : vector<32x128xi1>, vector<32x128xf32>
    %c4_135 = arith.constant 4 : index
    %c0_136 = arith.constant 0 : index
    %239 = memref.load %arg2[%c4_135, %c0_136] : memref<8x8xf32, #tpu.memory_space<smem>>
    %240 = vector.broadcast %239 : f32 to vector<32x128xf32>
    %241 = arith.select %45, %240, %235 : vector<32x128xi1>, vector<32x128xf32>
    %c4_137 = arith.constant 4 : index
    %c2_138 = arith.constant 2 : index
    %242 = memref.load %arg2[%c4_137, %c2_138] : memref<8x8xf32, #tpu.memory_space<smem>>
    %243 = vector.broadcast %242 : f32 to vector<32x128xf32>
    %244 = arith.select %47, %243, %238 : vector<32x128xi1>, vector<32x128xf32>
    %c4_139 = arith.constant 4 : index
    %c1_140 = arith.constant 1 : index
    %245 = memref.load %arg2[%c4_139, %c1_140] : memref<8x8xf32, #tpu.memory_space<smem>>
    %246 = vector.broadcast %245 : f32 to vector<32x128xf32>
    %247 = arith.select %47, %246, %241 : vector<32x128xi1>, vector<32x128xf32>
    %c4_141 = arith.constant 4 : index
    %c3_142 = arith.constant 3 : index
    %248 = memref.load %arg2[%c4_141, %c3_142] : memref<8x8xf32, #tpu.memory_space<smem>>
    %249 = vector.broadcast %248 : f32 to vector<32x128xf32>
    %250 = arith.select %49, %249, %244 : vector<32x128xi1>, vector<32x128xf32>
    %c4_143 = arith.constant 4 : index
    %c2_144 = arith.constant 2 : index
    %251 = memref.load %arg2[%c4_143, %c2_144] : memref<8x8xf32, #tpu.memory_space<smem>>
    %252 = vector.broadcast %251 : f32 to vector<32x128xf32>
    %253 = arith.select %49, %252, %247 : vector<32x128xi1>, vector<32x128xf32>
    %c4_145 = arith.constant 4 : index
    %c4_146 = arith.constant 4 : index
    %254 = memref.load %arg2[%c4_145, %c4_146] : memref<8x8xf32, #tpu.memory_space<smem>>
    %255 = vector.broadcast %254 : f32 to vector<32x128xf32>
    %256 = arith.select %51, %255, %250 : vector<32x128xi1>, vector<32x128xf32>
    %c4_147 = arith.constant 4 : index
    %c3_148 = arith.constant 3 : index
    %257 = memref.load %arg2[%c4_147, %c3_148] : memref<8x8xf32, #tpu.memory_space<smem>>
    %258 = vector.broadcast %257 : f32 to vector<32x128xf32>
    %259 = arith.select %51, %258, %253 : vector<32x128xi1>, vector<32x128xf32>
    %c4_149 = arith.constant 4 : index
    %c5_150 = arith.constant 5 : index
    %260 = memref.load %arg2[%c4_149, %c5_150] : memref<8x8xf32, #tpu.memory_space<smem>>
    %261 = vector.broadcast %260 : f32 to vector<32x128xf32>
    %262 = arith.select %53, %261, %256 : vector<32x128xi1>, vector<32x128xf32>
    %c4_151 = arith.constant 4 : index
    %c4_152 = arith.constant 4 : index
    %263 = memref.load %arg2[%c4_151, %c4_152] : memref<8x8xf32, #tpu.memory_space<smem>>
    %264 = vector.broadcast %263 : f32 to vector<32x128xf32>
    %265 = arith.select %53, %264, %259 : vector<32x128xi1>, vector<32x128xf32>
    %c4_153 = arith.constant 4 : index
    %c6_154 = arith.constant 6 : index
    %266 = memref.load %arg2[%c4_153, %c6_154] : memref<8x8xf32, #tpu.memory_space<smem>>
    %267 = vector.broadcast %266 : f32 to vector<32x128xf32>
    %268 = arith.select %55, %267, %262 : vector<32x128xi1>, vector<32x128xf32>
    %c4_155 = arith.constant 4 : index
    %c5_156 = arith.constant 5 : index
    %269 = memref.load %arg2[%c4_155, %c5_156] : memref<8x8xf32, #tpu.memory_space<smem>>
    %270 = vector.broadcast %269 : f32 to vector<32x128xf32>
    %271 = arith.select %55, %270, %265 : vector<32x128xi1>, vector<32x128xf32>
    %c4_157 = arith.constant 4 : index
    %c7_158 = arith.constant 7 : index
    %272 = memref.load %arg2[%c4_157, %c7_158] : memref<8x8xf32, #tpu.memory_space<smem>>
    %273 = vector.broadcast %272 : f32 to vector<32x128xf32>
    %274 = arith.select %57, %273, %268 : vector<32x128xi1>, vector<32x128xf32>
    %c4_159 = arith.constant 4 : index
    %c6_160 = arith.constant 6 : index
    %275 = memref.load %arg2[%c4_159, %c6_160] : memref<8x8xf32, #tpu.memory_space<smem>>
    %276 = vector.broadcast %275 : f32 to vector<32x128xf32>
    %277 = arith.select %57, %276, %271 : vector<32x128xi1>, vector<32x128xf32>
    %c5_161 = arith.constant 5 : index
    %c0_162 = arith.constant 0 : index
    %278 = memref.load %arg2[%c5_161, %c0_162] : memref<8x8xf32, #tpu.memory_space<smem>>
    %279 = vector.broadcast %278 : f32 to vector<32x128xf32>
    %c5_163 = arith.constant 5 : index
    %c1_164 = arith.constant 1 : index
    %280 = memref.load %arg2[%c5_163, %c1_164] : memref<8x8xf32, #tpu.memory_space<smem>>
    %281 = vector.broadcast %280 : f32 to vector<32x128xf32>
    %282 = arith.select %45, %281, %279 : vector<32x128xi1>, vector<32x128xf32>
    %c5_165 = arith.constant 5 : index
    %c0_166 = arith.constant 0 : index
    %283 = memref.load %arg2[%c5_165, %c0_166] : memref<8x8xf32, #tpu.memory_space<smem>>
    %284 = vector.broadcast %283 : f32 to vector<32x128xf32>
    %285 = arith.select %45, %284, %279 : vector<32x128xi1>, vector<32x128xf32>
    %c5_167 = arith.constant 5 : index
    %c2_168 = arith.constant 2 : index
    %286 = memref.load %arg2[%c5_167, %c2_168] : memref<8x8xf32, #tpu.memory_space<smem>>
    %287 = vector.broadcast %286 : f32 to vector<32x128xf32>
    %288 = arith.select %47, %287, %282 : vector<32x128xi1>, vector<32x128xf32>
    %c5_169 = arith.constant 5 : index
    %c1_170 = arith.constant 1 : index
    %289 = memref.load %arg2[%c5_169, %c1_170] : memref<8x8xf32, #tpu.memory_space<smem>>
    %290 = vector.broadcast %289 : f32 to vector<32x128xf32>
    %291 = arith.select %47, %290, %285 : vector<32x128xi1>, vector<32x128xf32>
    %c5_171 = arith.constant 5 : index
    %c3_172 = arith.constant 3 : index
    %292 = memref.load %arg2[%c5_171, %c3_172] : memref<8x8xf32, #tpu.memory_space<smem>>
    %293 = vector.broadcast %292 : f32 to vector<32x128xf32>
    %294 = arith.select %49, %293, %288 : vector<32x128xi1>, vector<32x128xf32>
    %c5_173 = arith.constant 5 : index
    %c2_174 = arith.constant 2 : index
    %295 = memref.load %arg2[%c5_173, %c2_174] : memref<8x8xf32, #tpu.memory_space<smem>>
    %296 = vector.broadcast %295 : f32 to vector<32x128xf32>
    %297 = arith.select %49, %296, %291 : vector<32x128xi1>, vector<32x128xf32>
    %c5_175 = arith.constant 5 : index
    %c4_176 = arith.constant 4 : index
    %298 = memref.load %arg2[%c5_175, %c4_176] : memref<8x8xf32, #tpu.memory_space<smem>>
    %299 = vector.broadcast %298 : f32 to vector<32x128xf32>
    %300 = arith.select %51, %299, %294 : vector<32x128xi1>, vector<32x128xf32>
    %c5_177 = arith.constant 5 : index
    %c3_178 = arith.constant 3 : index
    %301 = memref.load %arg2[%c5_177, %c3_178] : memref<8x8xf32, #tpu.memory_space<smem>>
    %302 = vector.broadcast %301 : f32 to vector<32x128xf32>
    %303 = arith.select %51, %302, %297 : vector<32x128xi1>, vector<32x128xf32>
    %c5_179 = arith.constant 5 : index
    %c5_180 = arith.constant 5 : index
    %304 = memref.load %arg2[%c5_179, %c5_180] : memref<8x8xf32, #tpu.memory_space<smem>>
    %305 = vector.broadcast %304 : f32 to vector<32x128xf32>
    %306 = arith.select %53, %305, %300 : vector<32x128xi1>, vector<32x128xf32>
    %c5_181 = arith.constant 5 : index
    %c4_182 = arith.constant 4 : index
    %307 = memref.load %arg2[%c5_181, %c4_182] : memref<8x8xf32, #tpu.memory_space<smem>>
    %308 = vector.broadcast %307 : f32 to vector<32x128xf32>
    %309 = arith.select %53, %308, %303 : vector<32x128xi1>, vector<32x128xf32>
    %c5_183 = arith.constant 5 : index
    %c6_184 = arith.constant 6 : index
    %310 = memref.load %arg2[%c5_183, %c6_184] : memref<8x8xf32, #tpu.memory_space<smem>>
    %311 = vector.broadcast %310 : f32 to vector<32x128xf32>
    %312 = arith.select %55, %311, %306 : vector<32x128xi1>, vector<32x128xf32>
    %c5_185 = arith.constant 5 : index
    %c5_186 = arith.constant 5 : index
    %313 = memref.load %arg2[%c5_185, %c5_186] : memref<8x8xf32, #tpu.memory_space<smem>>
    %314 = vector.broadcast %313 : f32 to vector<32x128xf32>
    %315 = arith.select %55, %314, %309 : vector<32x128xi1>, vector<32x128xf32>
    %c5_187 = arith.constant 5 : index
    %c7_188 = arith.constant 7 : index
    %316 = memref.load %arg2[%c5_187, %c7_188] : memref<8x8xf32, #tpu.memory_space<smem>>
    %317 = vector.broadcast %316 : f32 to vector<32x128xf32>
    %318 = arith.select %57, %317, %312 : vector<32x128xi1>, vector<32x128xf32>
    %c5_189 = arith.constant 5 : index
    %c6_190 = arith.constant 6 : index
    %319 = memref.load %arg2[%c5_189, %c6_190] : memref<8x8xf32, #tpu.memory_space<smem>>
    %320 = vector.broadcast %319 : f32 to vector<32x128xf32>
    %321 = arith.select %57, %320, %315 : vector<32x128xi1>, vector<32x128xf32>
    %c6_191 = arith.constant 6 : index
    %c0_192 = arith.constant 0 : index
    %322 = memref.load %arg2[%c6_191, %c0_192] : memref<8x8xf32, #tpu.memory_space<smem>>
    %323 = vector.broadcast %322 : f32 to vector<32x128xf32>
    %c6_193 = arith.constant 6 : index
    %c1_194 = arith.constant 1 : index
    %324 = memref.load %arg2[%c6_193, %c1_194] : memref<8x8xf32, #tpu.memory_space<smem>>
    %325 = vector.broadcast %324 : f32 to vector<32x128xf32>
    %326 = arith.select %45, %325, %323 : vector<32x128xi1>, vector<32x128xf32>
    %c6_195 = arith.constant 6 : index
    %c0_196 = arith.constant 0 : index
    %327 = memref.load %arg2[%c6_195, %c0_196] : memref<8x8xf32, #tpu.memory_space<smem>>
    %328 = vector.broadcast %327 : f32 to vector<32x128xf32>
    %329 = arith.select %45, %328, %323 : vector<32x128xi1>, vector<32x128xf32>
    %c6_197 = arith.constant 6 : index
    %c2_198 = arith.constant 2 : index
    %330 = memref.load %arg2[%c6_197, %c2_198] : memref<8x8xf32, #tpu.memory_space<smem>>
    %331 = vector.broadcast %330 : f32 to vector<32x128xf32>
    %332 = arith.select %47, %331, %326 : vector<32x128xi1>, vector<32x128xf32>
    %c6_199 = arith.constant 6 : index
    %c1_200 = arith.constant 1 : index
    %333 = memref.load %arg2[%c6_199, %c1_200] : memref<8x8xf32, #tpu.memory_space<smem>>
    %334 = vector.broadcast %333 : f32 to vector<32x128xf32>
    %335 = arith.select %47, %334, %329 : vector<32x128xi1>, vector<32x128xf32>
    %c6_201 = arith.constant 6 : index
    %c3_202 = arith.constant 3 : index
    %336 = memref.load %arg2[%c6_201, %c3_202] : memref<8x8xf32, #tpu.memory_space<smem>>
    %337 = vector.broadcast %336 : f32 to vector<32x128xf32>
    %338 = arith.select %49, %337, %332 : vector<32x128xi1>, vector<32x128xf32>
    %c6_203 = arith.constant 6 : index
    %c2_204 = arith.constant 2 : index
    %339 = memref.load %arg2[%c6_203, %c2_204] : memref<8x8xf32, #tpu.memory_space<smem>>
    %340 = vector.broadcast %339 : f32 to vector<32x128xf32>
    %341 = arith.select %49, %340, %335 : vector<32x128xi1>, vector<32x128xf32>
    %c6_205 = arith.constant 6 : index
    %c4_206 = arith.constant 4 : index
    %342 = memref.load %arg2[%c6_205, %c4_206] : memref<8x8xf32, #tpu.memory_space<smem>>
    %343 = vector.broadcast %342 : f32 to vector<32x128xf32>
    %344 = arith.select %51, %343, %338 : vector<32x128xi1>, vector<32x128xf32>
    %c6_207 = arith.constant 6 : index
    %c3_208 = arith.constant 3 : index
    %345 = memref.load %arg2[%c6_207, %c3_208] : memref<8x8xf32, #tpu.memory_space<smem>>
    %346 = vector.broadcast %345 : f32 to vector<32x128xf32>
    %347 = arith.select %51, %346, %341 : vector<32x128xi1>, vector<32x128xf32>
    %c6_209 = arith.constant 6 : index
    %c5_210 = arith.constant 5 : index
    %348 = memref.load %arg2[%c6_209, %c5_210] : memref<8x8xf32, #tpu.memory_space<smem>>
    %349 = vector.broadcast %348 : f32 to vector<32x128xf32>
    %350 = arith.select %53, %349, %344 : vector<32x128xi1>, vector<32x128xf32>
    %c6_211 = arith.constant 6 : index
    %c4_212 = arith.constant 4 : index
    %351 = memref.load %arg2[%c6_211, %c4_212] : memref<8x8xf32, #tpu.memory_space<smem>>
    %352 = vector.broadcast %351 : f32 to vector<32x128xf32>
    %353 = arith.select %53, %352, %347 : vector<32x128xi1>, vector<32x128xf32>
    %c6_213 = arith.constant 6 : index
    %c6_214 = arith.constant 6 : index
    %354 = memref.load %arg2[%c6_213, %c6_214] : memref<8x8xf32, #tpu.memory_space<smem>>
    %355 = vector.broadcast %354 : f32 to vector<32x128xf32>
    %356 = arith.select %55, %355, %350 : vector<32x128xi1>, vector<32x128xf32>
    %c6_215 = arith.constant 6 : index
    %c5_216 = arith.constant 5 : index
    %357 = memref.load %arg2[%c6_215, %c5_216] : memref<8x8xf32, #tpu.memory_space<smem>>
    %358 = vector.broadcast %357 : f32 to vector<32x128xf32>
    %359 = arith.select %55, %358, %353 : vector<32x128xi1>, vector<32x128xf32>
    %c6_217 = arith.constant 6 : index
    %c7_218 = arith.constant 7 : index
    %360 = memref.load %arg2[%c6_217, %c7_218] : memref<8x8xf32, #tpu.memory_space<smem>>
    %361 = vector.broadcast %360 : f32 to vector<32x128xf32>
    %362 = arith.select %57, %361, %356 : vector<32x128xi1>, vector<32x128xf32>
    %c6_219 = arith.constant 6 : index
    %c6_220 = arith.constant 6 : index
    %363 = memref.load %arg2[%c6_219, %c6_220] : memref<8x8xf32, #tpu.memory_space<smem>>
    %364 = vector.broadcast %363 : f32 to vector<32x128xf32>
    %365 = arith.select %57, %364, %359 : vector<32x128xi1>, vector<32x128xf32>
    %c7_221 = arith.constant 7 : index
    %c0_222 = arith.constant 0 : index
    %366 = memref.load %arg2[%c7_221, %c0_222] : memref<8x8xf32, #tpu.memory_space<smem>>
    %367 = vector.broadcast %366 : f32 to vector<32x128xf32>
    %c7_223 = arith.constant 7 : index
    %c1_224 = arith.constant 1 : index
    %368 = memref.load %arg2[%c7_223, %c1_224] : memref<8x8xf32, #tpu.memory_space<smem>>
    %369 = vector.broadcast %368 : f32 to vector<32x128xf32>
    %370 = arith.select %45, %369, %367 : vector<32x128xi1>, vector<32x128xf32>
    %c7_225 = arith.constant 7 : index
    %c0_226 = arith.constant 0 : index
    %371 = memref.load %arg2[%c7_225, %c0_226] : memref<8x8xf32, #tpu.memory_space<smem>>
    %372 = vector.broadcast %371 : f32 to vector<32x128xf32>
    %373 = arith.select %45, %372, %367 : vector<32x128xi1>, vector<32x128xf32>
    %c7_227 = arith.constant 7 : index
    %c2_228 = arith.constant 2 : index
    %374 = memref.load %arg2[%c7_227, %c2_228] : memref<8x8xf32, #tpu.memory_space<smem>>
    %375 = vector.broadcast %374 : f32 to vector<32x128xf32>
    %376 = arith.select %47, %375, %370 : vector<32x128xi1>, vector<32x128xf32>
    %c7_229 = arith.constant 7 : index
    %c1_230 = arith.constant 1 : index
    %377 = memref.load %arg2[%c7_229, %c1_230] : memref<8x8xf32, #tpu.memory_space<smem>>
    %378 = vector.broadcast %377 : f32 to vector<32x128xf32>
    %379 = arith.select %47, %378, %373 : vector<32x128xi1>, vector<32x128xf32>
    %c7_231 = arith.constant 7 : index
    %c3_232 = arith.constant 3 : index
    %380 = memref.load %arg2[%c7_231, %c3_232] : memref<8x8xf32, #tpu.memory_space<smem>>
    %381 = vector.broadcast %380 : f32 to vector<32x128xf32>
    %382 = arith.select %49, %381, %376 : vector<32x128xi1>, vector<32x128xf32>
    %c7_233 = arith.constant 7 : index
    %c2_234 = arith.constant 2 : index
    %383 = memref.load %arg2[%c7_233, %c2_234] : memref<8x8xf32, #tpu.memory_space<smem>>
    %384 = vector.broadcast %383 : f32 to vector<32x128xf32>
    %385 = arith.select %49, %384, %379 : vector<32x128xi1>, vector<32x128xf32>
    %c7_235 = arith.constant 7 : index
    %c4_236 = arith.constant 4 : index
    %386 = memref.load %arg2[%c7_235, %c4_236] : memref<8x8xf32, #tpu.memory_space<smem>>
    %387 = vector.broadcast %386 : f32 to vector<32x128xf32>
    %388 = arith.select %51, %387, %382 : vector<32x128xi1>, vector<32x128xf32>
    %c7_237 = arith.constant 7 : index
    %c3_238 = arith.constant 3 : index
    %389 = memref.load %arg2[%c7_237, %c3_238] : memref<8x8xf32, #tpu.memory_space<smem>>
    %390 = vector.broadcast %389 : f32 to vector<32x128xf32>
    %391 = arith.select %51, %390, %385 : vector<32x128xi1>, vector<32x128xf32>
    %c7_239 = arith.constant 7 : index
    %c5_240 = arith.constant 5 : index
    %392 = memref.load %arg2[%c7_239, %c5_240] : memref<8x8xf32, #tpu.memory_space<smem>>
    %393 = vector.broadcast %392 : f32 to vector<32x128xf32>
    %394 = arith.select %53, %393, %388 : vector<32x128xi1>, vector<32x128xf32>
    %c7_241 = arith.constant 7 : index
    %c4_242 = arith.constant 4 : index
    %395 = memref.load %arg2[%c7_241, %c4_242] : memref<8x8xf32, #tpu.memory_space<smem>>
    %396 = vector.broadcast %395 : f32 to vector<32x128xf32>
    %397 = arith.select %53, %396, %391 : vector<32x128xi1>, vector<32x128xf32>
    %c7_243 = arith.constant 7 : index
    %c6_244 = arith.constant 6 : index
    %398 = memref.load %arg2[%c7_243, %c6_244] : memref<8x8xf32, #tpu.memory_space<smem>>
    %399 = vector.broadcast %398 : f32 to vector<32x128xf32>
    %400 = arith.select %55, %399, %394 : vector<32x128xi1>, vector<32x128xf32>
    %c7_245 = arith.constant 7 : index
    %c5_246 = arith.constant 5 : index
    %401 = memref.load %arg2[%c7_245, %c5_246] : memref<8x8xf32, #tpu.memory_space<smem>>
    %402 = vector.broadcast %401 : f32 to vector<32x128xf32>
    %403 = arith.select %55, %402, %397 : vector<32x128xi1>, vector<32x128xf32>
    %c7_247 = arith.constant 7 : index
    %c7_248 = arith.constant 7 : index
    %404 = memref.load %arg2[%c7_247, %c7_248] : memref<8x8xf32, #tpu.memory_space<smem>>
    %405 = vector.broadcast %404 : f32 to vector<32x128xf32>
    %406 = arith.select %57, %405, %400 : vector<32x128xi1>, vector<32x128xf32>
    %c7_249 = arith.constant 7 : index
    %c6_250 = arith.constant 6 : index
    %407 = memref.load %arg2[%c7_249, %c6_250] : memref<8x8xf32, #tpu.memory_space<smem>>
    %408 = vector.broadcast %407 : f32 to vector<32x128xf32>
    %409 = arith.select %57, %408, %403 : vector<32x128xi1>, vector<32x128xf32>
    %c0_251 = arith.constant 0 : index
    %c0_252 = arith.constant 0 : index
    %410 = memref.load %arg2[%c0_251, %c0_252] : memref<8x8xf32, #tpu.memory_space<smem>>
    %411 = vector.broadcast %410 : f32 to vector<32x128xf32>
    %412 = arith.cmpf olt, %0, %411 : vector<32x128xf32>
    %c0_253 = arith.constant 0 : index
    %c7_254 = arith.constant 7 : index
    %413 = memref.load %arg2[%c0_253, %c7_254] : memref<8x8xf32, #tpu.memory_space<smem>>
    %414 = vector.broadcast %413 : f32 to vector<32x128xf32>
    %415 = arith.cmpf ogt, %0, %414 : vector<32x128xf32>
    %416 = arith.ori %412, %415 : vector<32x128xi1>
    %417 = arith.cmpf oeq, %98, %0 : vector<32x128xf32>
    %418 = arith.subf %98, %101 : vector<32x128xf32>
    %cst = arith.constant 0.000000e+00 : f32
    %419 = vector.broadcast %cst : f32 to vector<32x128xf32>
    %420 = arith.cmpf oeq, %418, %419 : vector<32x128xf32>
    %cst_255 = arith.constant 1.000000e+00 : f32
    %421 = vector.broadcast %cst_255 : f32 to vector<32x128xf32>
    %422 = arith.select %420, %421, %418 : vector<32x128xi1>, vector<32x128xf32>
    %cst_256 = arith.constant 1.000000e+00 : f32
    %423 = vector.broadcast %cst_256 : f32 to vector<32x128xf32>
    %424 = arith.divf %423, %422 : vector<32x128xf32>
    %425 = arith.subf %230, %233 : vector<32x128xf32>
    %426 = arith.mulf %425, %424 : vector<32x128xf32>
    %427 = arith.subf %274, %277 : vector<32x128xf32>
    %428 = arith.mulf %427, %424 : vector<32x128xf32>
    %429 = arith.subf %0, %101 : vector<32x128xf32>
    %430 = arith.mulf %426, %429 : vector<32x128xf32>
    %431 = arith.addf %233, %430 : vector<32x128xf32>
    %432 = arith.mulf %428, %429 : vector<32x128xf32>
    %433 = arith.addf %277, %432 : vector<32x128xf32>
    %cst_257 = arith.constant 9.99999997E-7 : f32
    %434 = vector.broadcast %cst_257 : f32 to vector<32x128xf32>
    %435 = arith.addf %428, %434 : vector<32x128xf32>
    %cst_258 = arith.constant 1.000000e+00 : f32
    %436 = vector.broadcast %cst_258 : f32 to vector<32x128xf32>
    %437 = arith.divf %436, %435 : vector<32x128xf32>
    %438 = math.sin %277 : vector<32x128xf32>
    %439 = math.cos %277 : vector<32x128xf32>
    %440 = math.sin %433 : vector<32x128xf32>
    %441 = math.cos %433 : vector<32x128xf32>
    %442 = arith.subf %440, %438 : vector<32x128xf32>
    %443 = arith.mulf %233, %442 : vector<32x128xf32>
    %444 = arith.mulf %443, %437 : vector<32x128xf32>
    %445 = arith.addf %145, %444 : vector<32x128xf32>
    %446 = arith.subf %441, %439 : vector<32x128xf32>
    %447 = arith.mulf %233, %446 : vector<32x128xf32>
    %448 = arith.mulf %447, %437 : vector<32x128xf32>
    %449 = arith.subf %189, %448 : vector<32x128xf32>
    %450 = arith.subf %0, %98 : vector<32x128xf32>
    %451 = math.cos %274 : vector<32x128xf32>
    %452 = arith.mulf %450, %451 : vector<32x128xf32>
    %453 = arith.mulf %452, %230 : vector<32x128xf32>
    %454 = arith.addf %142, %453 : vector<32x128xf32>
    %455 = math.sin %274 : vector<32x128xf32>
    %456 = arith.mulf %450, %455 : vector<32x128xf32>
    %457 = arith.mulf %456, %230 : vector<32x128xf32>
    %458 = arith.addf %186, %457 : vector<32x128xf32>
    %459 = arith.select %417, %142, %445 : vector<32x128xi1>, vector<32x128xf32>
    %460 = arith.select %416, %454, %459 : vector<32x128xi1>, vector<32x128xf32>
    %c0_259 = arith.constant 0 : index
    %c0_260 = arith.constant 0 : index
    %c0_261 = arith.constant 0 : index
    %461 = vector.load %arg3[%c0_259, %c0_260, %c0_261] : memref<7x32x128xf32, #tpu.memory_space<vmem>>, vector<1x32x128xf32>
    %462 = vector.shape_cast %461 : vector<1x32x128xf32> to vector<32x128xf32>
    %463 = vector.shape_cast %460 : vector<32x128xf32> to vector<1x32x128xf32>
    tpu.vector_store %arg3[%c0_259, %c0_260, %c0_261], %463 {strides = array<i32>} : memref<7x32x128xf32, #tpu.memory_space<vmem>>, vector<1x32x128xf32>,
    %464 = arith.select %417, %186, %449 : vector<32x128xi1>, vector<32x128xf32>
    %465 = arith.select %416, %458, %464 : vector<32x128xi1>, vector<32x128xf32>
    %c1_262 = arith.constant 1 : index
    %c0_263 = arith.constant 0 : index
    %c0_264 = arith.constant 0 : index
    %466 = vector.load %arg3[%c1_262, %c0_263, %c0_264] : memref<7x32x128xf32, #tpu.memory_space<vmem>>, vector<1x32x128xf32>
    %467 = vector.shape_cast %466 : vector<1x32x128xf32> to vector<32x128xf32>
    %468 = vector.shape_cast %465 : vector<32x128xf32> to vector<1x32x128xf32>
    tpu.vector_store %arg3[%c1_262, %c0_263, %c0_264], %468 {strides = array<i32>} : memref<7x32x128xf32, #tpu.memory_space<vmem>>, vector<1x32x128xf32>,
    %469 = arith.select %417, %230, %431 : vector<32x128xi1>, vector<32x128xf32>
    %470 = arith.select %416, %230, %469 : vector<32x128xi1>, vector<32x128xf32>
    %c2_265 = arith.constant 2 : index
    %c0_266 = arith.constant 0 : index
    %c0_267 = arith.constant 0 : index
    %471 = vector.load %arg3[%c2_265, %c0_266, %c0_267] : memref<7x32x128xf32, #tpu.memory_space<vmem>>, vector<1x32x128xf32>
    %472 = vector.shape_cast %471 : vector<1x32x128xf32> to vector<32x128xf32>
    %473 = vector.shape_cast %470 : vector<32x128xf32> to vector<1x32x128xf32>
    tpu.vector_store %arg3[%c2_265, %c0_266, %c0_267], %473 {strides = array<i32>} : memref<7x32x128xf32, #tpu.memory_space<vmem>>, vector<1x32x128xf32>,
    %474 = arith.select %417, %318, %321 : vector<32x128xi1>, vector<32x128xf32>
    %475 = arith.select %416, %318, %474 : vector<32x128xi1>, vector<32x128xf32>
    %c3_268 = arith.constant 3 : index
    %c0_269 = arith.constant 0 : index
    %c0_270 = arith.constant 0 : index
    %476 = vector.load %arg3[%c3_268, %c0_269, %c0_270] : memref<7x32x128xf32, #tpu.memory_space<vmem>>, vector<1x32x128xf32>
    %477 = vector.shape_cast %476 : vector<1x32x128xf32> to vector<32x128xf32>
    %478 = vector.shape_cast %475 : vector<32x128xf32> to vector<1x32x128xf32>
    tpu.vector_store %arg3[%c3_268, %c0_269, %c0_270], %478 {strides = array<i32>} : memref<7x32x128xf32, #tpu.memory_space<vmem>>, vector<1x32x128xf32>,
    %479 = arith.select %417, %362, %365 : vector<32x128xi1>, vector<32x128xf32>
    %480 = arith.select %416, %362, %479 : vector<32x128xi1>, vector<32x128xf32>
    %c4_271 = arith.constant 4 : index
    %c0_272 = arith.constant 0 : index
    %c0_273 = arith.constant 0 : index
    %481 = vector.load %arg3[%c4_271, %c0_272, %c0_273] : memref<7x32x128xf32, #tpu.memory_space<vmem>>, vector<1x32x128xf32>
    %482 = vector.shape_cast %481 : vector<1x32x128xf32> to vector<32x128xf32>
    %483 = vector.shape_cast %480 : vector<32x128xf32> to vector<1x32x128xf32>
    tpu.vector_store %arg3[%c4_271, %c0_272, %c0_273], %483 {strides = array<i32>} : memref<7x32x128xf32, #tpu.memory_space<vmem>>, vector<1x32x128xf32>,
    %484 = arith.select %417, %274, %433 : vector<32x128xi1>, vector<32x128xf32>
    %485 = arith.select %416, %274, %484 : vector<32x128xi1>, vector<32x128xf32>
    %c5_274 = arith.constant 5 : index
    %c0_275 = arith.constant 0 : index
    %c0_276 = arith.constant 0 : index
    %486 = vector.load %arg3[%c5_274, %c0_275, %c0_276] : memref<7x32x128xf32, #tpu.memory_space<vmem>>, vector<1x32x128xf32>
    %487 = vector.shape_cast %486 : vector<1x32x128xf32> to vector<32x128xf32>
    %488 = vector.shape_cast %485 : vector<32x128xf32> to vector<1x32x128xf32>
    tpu.vector_store %arg3[%c5_274, %c0_275, %c0_276], %488 {strides = array<i32>} : memref<7x32x128xf32, #tpu.memory_space<vmem>>, vector<1x32x128xf32>,
    %489 = arith.select %417, %406, %409 : vector<32x128xi1>, vector<32x128xf32>
    %490 = arith.select %416, %406, %489 : vector<32x128xi1>, vector<32x128xf32>
    %c6_277 = arith.constant 6 : index
    %c0_278 = arith.constant 0 : index
    %c0_279 = arith.constant 0 : index
    %491 = vector.load %arg3[%c6_277, %c0_278, %c0_279] : memref<7x32x128xf32, #tpu.memory_space<vmem>>, vector<1x32x128xf32>
    %492 = vector.shape_cast %491 : vector<1x32x128xf32> to vector<32x128xf32>
    %493 = vector.shape_cast %490 : vector<32x128xf32> to vector<1x32x128xf32>
    tpu.vector_store %arg3[%c6_277, %c0_278, %c0_279], %493 {strides = array<i32>} : memref<7x32x128xf32, #tpu.memory_space<vmem>>, vector<1x32x128xf32>,
    return
  }
  func.func @transform_0(%arg0: i32) -> (i32, i32) {
    %c0_i32 = arith.constant 0 : i32
    %c0_i32_0 = arith.constant 0 : i32
    return %arg0, %c0_i32 : i32, i32
  }
  func.func @transform_1(%arg0: i32) -> (i32, i32) {
    %c0_i32 = arith.constant 0 : i32
    %c0_i32_0 = arith.constant 0 : i32
    %c0_i32_1 = arith.constant 0 : i32
    return %c0_i32, %c0_i32_0 : i32, i32
  }
  func.func @transform_2(%arg0: i32) -> (i32, i32, i32) {
    %c0_i32 = arith.constant 0 : i32
    %c0_i32_0 = arith.constant 0 : i32
    %c0_i32_1 = arith.constant 0 : i32
    return %c0_i32, %arg0, %c0_i32_0 : i32, i32, i32
  }
}

</mosaic_0001>

<llo_original>
// kernel: _unicycle_pallas.1
$region0: #{_unicycle_pallas.1}
  #allocation0 [shape = 'u32[]', space=smem, size = 0x4, offset = 0x4, fixed_abs, tag = 'smem constant byte address 0x4 - core index']
  #allocation1 [shape = 'u32[144,128]{1,0:T(1,128)}', space=vmem, size = 0x12000, scoped, tag = 'internal scratch']
  %s0 = inlined_call_operand.hbm [shape: f32[32,128], index: 0, kind: input, shape index: {}]
  %s1 = inlined_call_operand.hbm [shape: f32[8,8], index: 1, kind: input, shape index: {}]
  %s2 = inlined_call_operand.hbm [shape: f32[7,32,128], index: 2, kind: output, shape index: {}]
  %s3 = sld [smem:[#allocation0]]
  $region26: #{_unicycle_pallas.1} parent=0
    _
  %s5 = ssub.s32 1, %s3
  %s6 = scalar_select 0, %s5, %s3
  $region1: #{_unicycle_pallas.1} parent=0
    #allocation2 [shape = 'u8[16384]{0}', space=vmem, size = 0x4000, scoped, tag = 'input window, operand 0, single buffered']
    #allocation3 [shape = 's32[1]{0}', space=sflag, size = 0x4, scoped, tag = 'scoped memory for _unicycle_pallas.1']
    #allocation4 [shape = 's32[1]{0}', space=sflag, size = 0x4, scoped, tag = 'scoped memory for _unicycle_pallas.1']
    #allocation5 [shape = 's32[1]{0}', space=sflag, size = 0x4, scoped, tag = 'scoped memory for _unicycle_pallas.1']
    #allocation6 [shape = 'u8[4096]{0}', space=smem, size = 0x1000, scoped, tag = 'input window, operand 1, single buffered']
    #allocation7 [shape = 'u8[114688]{0}', space=vmem, size = 0x1c000, scoped, tag = 'output window, operand 0, single buffered']
    %7 = vsyncpa [#allocation3], 0
    %8 = vsyncpa [#allocation5], 0
    %9 = vsyncpa [#allocation4], 0
    // Predicated region
    $region2: #{_unicycle_pallas.1} parent=1 // pred_check
      _
    $region3: #{_unicycle_pallas.1} parent=1 // pred_check_branch
      %11 = sbr.rel (0) target = $region5
    $region4: #{_unicycle_pallas.1} parent=1 // pred_region
      %s13 = ssub.s32 512, 512
      %14 = vsyncadd [#allocation3], %s13
      %s15 = sshll.u32 [#allocation2], 4
      %s16 = int_to_ptr.vmem [resolvable:$true] %s15
      %21 = dma.hbm_to_vmem [thread:$0]  %s0, 512, %s16, [#allocation3], 128, 128, 8
    $region5: #{_unicycle_pallas.1} parent=1 // pred_fallthru
      _
    // Predicated region
    $region6: #{_unicycle_pallas.1} parent=1 // pred_check
      _
    $region7: #{_unicycle_pallas.1} parent=1 // pred_check_branch
      %23 = sbr.rel (0) target = $region9
    $region8: #{_unicycle_pallas.1} parent=1 // pred_region
      %s25 = ssub.s32 128, 128
      %26 = vsyncadd [#allocation5], %s25
      %29 = dma.hbm_to_smem %s1, 128, [#allocation6], [#allocation5]
    $region9: #{_unicycle_pallas.1} parent=1 // pred_fallthru
      _
    // Predicated region
    $region10: #{_unicycle_pallas.1} parent=1 // pred_check
      _
    $region11: #{_unicycle_pallas.1} parent=1 // pred_check_branch
      %31 = sbr.rel (0) target = $region13
    $region12: #{_unicycle_pallas.1} parent=1 // pred_region
      %32 = dma.done [#allocation3], 512
    $region13: #{_unicycle_pallas.1} parent=1 // pred_fallthru
      _
    // Predicated region
    $region14: #{_unicycle_pallas.1} parent=1 // pred_check
      _
    $region15: #{_unicycle_pallas.1} parent=1 // pred_check_branch
      %34 = sbr.rel (0) target = $region17
    $region16: #{_unicycle_pallas.1} parent=1 // pred_region
      %35 = dma.done [#allocation5], 128
    $region17: #{_unicycle_pallas.1} parent=1 // pred_fallthru
      _
    %36 = sfence
    %v37 = vld [vmem:[#allocation2] sm:$0xff]
    %v38 = vld [vmem:[#allocation2 + $0x8] sm:$0xff]
    %v39 = vld [vmem:[#allocation2 + $0x10] sm:$0xff]
    %v40 = vld [vmem:[#allocation2 + $0x18] sm:$0xff]
    %s41 = sld [smem:[#allocation6]]
    %v42 = vstv %s41
    %vm43 = vcmp.lt.f32.partialorder %v42, %v37
    %vm44 = vcmp.lt.f32.partialorder %v42, %v38
    %vm45 = vcmp.lt.f32.partialorder %v42, %v39
    %vm46 = vcmp.lt.f32.partialorder %v42, %v40
    %v47 = vsel %vm43, 1, 0
    %v48 = vsel %vm44, 1, 0
    %v49 = vsel %vm45, 1, 0
    %v50 = vsel %vm46, 1, 0
    %s51 = sld [smem:[#allocation6 + $0x1]]
    %v52 = vstv %s51
    %vm53 = vcmp.lt.f32.partialorder %v52, %v37
    %vm54 = vcmp.lt.f32.partialorder %v52, %v38
    %vm55 = vcmp.lt.f32.partialorder %v52, %v39
    %vm56 = vcmp.lt.f32.partialorder %v52, %v40
    %v57 = vsel %vm53, 1, 0
    %v58 = vsel %vm54, 1, 0
    %v59 = vsel %vm55, 1, 0
    %v60 = vsel %vm56, 1, 0
    %v61 = vadd.s32 %v47, %v57
    %v62 = vadd.s32 %v48, %v58
    %v63 = vadd.s32 %v49, %v59
    %v64 = vadd.s32 %v50, %v60
    %s65 = sld [smem:[#allocation6 + $0x2]]
    %v66 = vstv %s65
    %vm67 = vcmp.lt.f32.partialorder %v66, %v37
    %vm68 = vcmp.lt.f32.partialorder %v66, %v38
    %vm69 = vcmp.lt.f32.partialorder %v66, %v39
    %vm70 = vcmp.lt.f32.partialorder %v66, %v40
    %v71 = vsel %vm67, 1, 0
    %v72 = vsel %vm68, 1, 0
    %v73 = vsel %vm69, 1, 0
    %v74 = vsel %vm70, 1, 0
    %v75 = vadd.s32 %v61, %v71
    %v76 = vadd.s32 %v62, %v72
    %v77 = vadd.s32 %v63, %v73
    %v78 = vadd.s32 %v64, %v74
    %s79 = sld [smem:[#allocation6 + $0x3]]
    %v80 = vstv %s79
    %vm81 = vcmp.lt.f32.partialorder %v80, %v37
    %vm82 = vcmp.lt.f32.partialorder %v80, %v38
    %vm83 = vcmp.lt.f32.partialorder %v80, %v39
    %vm84 = vcmp.lt.f32.partialorder %v80, %v40
    %v85 = vsel %vm81, 1, 0
    %v86 = vsel %vm82, 1, 0
    %v87 = vsel %vm83, 1, 0
    %v88 = vsel %vm84, 1, 0
    %v89 = vadd.s32 %v75, %v85
    %v90 = vadd.s32 %v76, %v86
    %v91 = vadd.s32 %v77, %v87
    %v92 = vadd.s32 %v78, %v88
    %s93 = sld [smem:[#allocation6 + $0x4]]
    %v94 = vstv %s93
    %vm95 = vcmp.lt.f32.partialorder %v94, %v37
    %vm96 = vcmp.lt.f32.partialorder %v94, %v38
    %vm97 = vcmp.lt.f32.partialorder %v94, %v39
    %vm98 = vcmp.lt.f32.partialorder %v94, %v40
    %v99 = vsel %vm95, 1, 0
    %v100 = vsel %vm96, 1, 0
    %v101 = vsel %vm97, 1, 0
    %v102 = vsel %vm98, 1, 0
    %v103 = vadd.s32 %v89, %v99
    %v104 = vadd.s32 %v90, %v100
    %v105 = vadd.s32 %v91, %v101
    %v106 = vadd.s32 %v92, %v102
    %s107 = sld [smem:[#allocation6 + $0x5]]
    %v108 = vstv %s107
    %vm109 = vcmp.lt.f32.partialorder %v108, %v37
    %vm110 = vcmp.lt.f32.partialorder %v108, %v38
    %vm111 = vcmp.lt.f32.partialorder %v108, %v39
    %vm112 = vcmp.lt.f32.partialorder %v108, %v40
    %v113 = vsel %vm109, 1, 0
    %v114 = vsel %vm110, 1, 0
    %v115 = vsel %vm111, 1, 0
    %v116 = vsel %vm112, 1, 0
    %v117 = vadd.s32 %v103, %v113
    %v118 = vadd.s32 %v104, %v114
    %v119 = vadd.s32 %v105, %v115
    %v120 = vadd.s32 %v106, %v116
    %s121 = sld [smem:[#allocation6 + $0x6]]
    %v122 = vstv %s121
    %vm123 = vcmp.lt.f32.partialorder %v122, %v37
    %vm124 = vcmp.lt.f32.partialorder %v122, %v38
    %vm125 = vcmp.lt.f32.partialorder %v122, %v39
    %vm126 = vcmp.lt.f32.partialorder %v122, %v40
    %v127 = vsel %vm123, 1, 0
    %v128 = vsel %vm124, 1, 0
    %v129 = vsel %vm125, 1, 0
    %v130 = vsel %vm126, 1, 0
    %v131 = vadd.s32 %v117, %v127
    %v132 = vadd.s32 %v118, %v128
    %v133 = vadd.s32 %v119, %v129
    %v134 = vadd.s32 %v120, %v130
    %s135 = sld [smem:[#allocation6 + $0x7]]
    %v136 = vstv %s135
    %vm137 = vcmp.lt.f32.partialorder %v136, %v37
    %vm138 = vcmp.lt.f32.partialorder %v136, %v38
    %vm139 = vcmp.lt.f32.partialorder %v136, %v39
    %vm140 = vcmp.lt.f32.partialorder %v136, %v40
    %v141 = vsel %vm137, 1, 0
    %v142 = vsel %vm138, 1, 0
    %v143 = vsel %vm139, 1, 0
    %v144 = vsel %vm140, 1, 0
    %v145 = vadd.s32 %v131, %v141
    %v146 = vadd.s32 %v132, %v142
    %v147 = vadd.s32 %v133, %v143
    %v148 = vadd.s32 %v134, %v144
    %vm149 = vcmp.lt.s32.totalorder %v145, 7
    %v150 = vsel %vm149, %v145, 7
    %vm151 = vcmp.lt.s32.totalorder %v146, 7
    %v152 = vsel %vm151, %v146, 7
    %vm153 = vcmp.lt.s32.totalorder %v147, 7
    %v154 = vsel %vm153, %v147, 7
    %vm155 = vcmp.lt.s32.totalorder %v148, 7
    %v156 = vsel %vm155, %v148, 7
    %vm157 = vcmp.eq.s32.totalorder %v150, 1
    %vm158 = vcmp.eq.s32.totalorder %v152, 1
    %vm159 = vcmp.eq.s32.totalorder %v154, 1
    %vm160 = vcmp.eq.s32.totalorder %v156, 1
    %vm161 = vcmp.eq.s32.totalorder %v150, 2
    %vm162 = vcmp.eq.s32.totalorder %v152, 2
    %vm163 = vcmp.eq.s32.totalorder %v154, 2
    %vm164 = vcmp.eq.s32.totalorder %v156, 2
    %vm165 = vcmp.eq.s32.totalorder %v150, 3
    %vm166 = vcmp.eq.s32.totalorder %v152, 3
    %vm167 = vcmp.eq.s32.totalorder %v154, 3
    %vm168 = vcmp.eq.s32.totalorder %v156, 3
    %vm169 = vcmp.eq.s32.totalorder %v150, 4
    %vm170 = vcmp.eq.s32.totalorder %v152, 4
    %vm171 = vcmp.eq.s32.totalorder %v154, 4
    %vm172 = vcmp.eq.s32.totalorder %v156, 4
    %vm173 = vcmp.eq.s32.totalorder %v150, 5
    %vm174 = vcmp.eq.s32.totalorder %v152, 5
    %vm175 = vcmp.eq.s32.totalorder %v154, 5
    %vm176 = vcmp.eq.s32.totalorder %v156, 5
    %vm177 = vcmp.eq.s32.totalorder %v150, 6
    %vm178 = vcmp.eq.s32.totalorder %v152, 6
    %vm179 = vcmp.eq.s32.totalorder %v154, 6
    %vm180 = vcmp.eq.s32.totalorder %v156, 6
    %vm181 = vcmp.eq.s32.totalorder %v150, 7
    %vm182 = vcmp.eq.s32.totalorder %v152, 7
    %vm183 = vcmp.eq.s32.totalorder %v154, 7
    %vm184 = vcmp.eq.s32.totalorder %v156, 7
    %v185 = vsel %vm157, %v52, %v42
    %v186 = vsel %vm158, %v52, %v42
    %v187 = vsel %vm159, %v52, %v42
    %v188 = vsel %vm160, %v52, %v42
    %v189 = vsel %vm161, %v66, %v185
    %v190 = vsel %vm162, %v66, %v186
    %v191 = vsel %vm163, %v66, %v187
    %v192 = vsel %vm164, %v66, %v188
    %v193 = vsel %vm161, %v52, %v42
    %v194 = vsel %vm162, %v52, %v42
    %v195 = vsel %vm163, %v52, %v42
    %v196 = vsel %vm164, %v52, %v42
    %v197 = vsel %vm165, %v80, %v189
    %v198 = vsel %vm166, %v80, %v190
    %v199 = vsel %vm167, %v80, %v191
    %v200 = vsel %vm168, %v80, %v192
    %v201 = vsel %vm165, %v66, %v193
    %v202 = vsel %vm166, %v66, %v194
    %v203 = vsel %vm167, %v66, %v195
    %v204 = vsel %vm168, %v66, %v196
    %v205 = vsel %vm169, %v94, %v197
    %v206 = vsel %vm170, %v94, %v198
    %v207 = vsel %vm171, %v94, %v199
    %v208 = vsel %vm172, %v94, %v200
    %v209 = vsel %vm169, %v80, %v201
    %v210 = vsel %vm170, %v80, %v202
    %v211 = vsel %vm171, %v80, %v203
    %v212 = vsel %vm172, %v80, %v204
    %v213 = vsel %vm173, %v108, %v205
    %v214 = vsel %vm174, %v108, %v206
    %v215 = vsel %vm175, %v108, %v207
    %v216 = vsel %vm176, %v108, %v208
    %v217 = vsel %vm173, %v94, %v209
    %v218 = vsel %vm174, %v94, %v210
    %v219 = vsel %vm175, %v94, %v211
    %v220 = vsel %vm176, %v94, %v212
    %v221 = vsel %vm177, %v122, %v213
    %v222 = vsel %vm178, %v122, %v214
    %v223 = vsel %vm179, %v122, %v215
    %v224 = vsel %vm180, %v122, %v216
    %v225 = vsel %vm177, %v108, %v217
    %v226 = vsel %vm178, %v108, %v218
    %v227 = vsel %vm179, %v108, %v219
    %v228 = vsel %vm180, %v108, %v220
    %v229 = vsel %vm181, %v136, %v221
    %v230 = vsel %vm182, %v136, %v222
    %v231 = vsel %vm183, %v136, %v223
    %v232 = vsel %vm184, %v136, %v224
    %v233 = vsel %vm181, %v122, %v225
    %v234 = vsel %vm182, %v122, %v226
    %v235 = vsel %vm183, %v122, %v227
    %v236 = vsel %vm184, %v122, %v228
    %s237 = sld [smem:[#allocation6 + $0x80]]
    %v238 = vstv %s237
    %s239 = sld [smem:[#allocation6 + $0x81]]
    %v240 = vstv %s239
    %v241 = vsel %vm157, %v240, %v238
    %v242 = vsel %vm158, %v240, %v238
    %v243 = vsel %vm159, %v240, %v238
    %v244 = vsel %vm160, %v240, %v238
    %s245 = sld [smem:[#allocation6 + $0x82]]
    %v246 = vstv %s245
    %v247 = vsel %vm161, %v246, %v241
    %v248 = vsel %vm162, %v246, %v242
    %v249 = vsel %vm163, %v246, %v243
    %v250 = vsel %vm164, %v246, %v244
    %v251 = vsel %vm161, %v240, %v238
    %v252 = vsel %vm162, %v240, %v238
    %v253 = vsel %vm163, %v240, %v238
    %v254 = vsel %vm164, %v240, %v238
    %s255 = sld [smem:[#allocation6 + $0x83]]
    %v256 = vstv %s255
    %v257 = vsel %vm165, %v256, %v247
    %v258 = vsel %vm166, %v256, %v248
    %v259 = vsel %vm167, %v256, %v249
    %v260 = vsel %vm168, %v256, %v250
    %v261 = vsel %vm165, %v246, %v251
    %v262 = vsel %vm166, %v246, %v252
    %v263 = vsel %vm167, %v246, %v253
    %v264 = vsel %vm168, %v246, %v254
    %s265 = sld [smem:[#allocation6 + $0x84]]
    %v266 = vstv %s265
    %v267 = vsel %vm169, %v266, %v257
    %v268 = vsel %vm170, %v266, %v258
    %v269 = vsel %vm171, %v266, %v259
    %v270 = vsel %vm172, %v266, %v260
    %v271 = vsel %vm169, %v256, %v261
    %v272 = vsel %vm170, %v256, %v262
    %v273 = vsel %vm171, %v256, %v263
    %v274 = vsel %vm172, %v256, %v264
    %s275 = sld [smem:[#allocation6 + $0x85]]
    %v276 = vstv %s275
    %v277 = vsel %vm173, %v276, %v267
    %v278 = vsel %vm174, %v276, %v268
    %v279 = vsel %vm175, %v276, %v269
    %v280 = vsel %vm176, %v276, %v270
    %v281 = vsel %vm173, %v266, %v271
    %v282 = vsel %vm174, %v266, %v272
    %v283 = vsel %vm175, %v266, %v273
    %v284 = vsel %vm176, %v266, %v274
    %s285 = sld [smem:[#allocation6 + $0x86]]
    %v286 = vstv %s285
    %v287 = vsel %vm177, %v286, %v277
    %v288 = vsel %vm178, %v286, %v278
    %v289 = vsel %vm179, %v286, %v279
    %v290 = vsel %vm180, %v286, %v280
    %v291 = vsel %vm177, %v276, %v281
    %v292 = vsel %vm178, %v276, %v282
    %v293 = vsel %vm179, %v276, %v283
    %v294 = vsel %vm180, %v276, %v284
    %s295 = sld [smem:[#allocation6 + $0x87]]
    %v296 = vstv %s295
    %v297 = vsel %vm181, %v296, %v287
    %v298 = vsel %vm182, %v296, %v288
    %v299 = vsel %vm183, %v296, %v289
    %v300 = vsel %vm184, %v296, %v290
    %v301 = vsel %vm181, %v286, %v291
    %v302 = vsel %vm182, %v286, %v292
    %v303 = vsel %vm183, %v286, %v293
    %v304 = vsel %vm184, %v286, %v294
    %s305 = sld [smem:[#allocation6 + $0x100]]
    %v306 = vstv %s305
    %s307 = sld [smem:[#allocation6 + $0x101]]
    %v308 = vstv %s307
    %v309 = vsel %vm157, %v308, %v306
    %v310 = vsel %vm158, %v308, %v306
    %v311 = vsel %vm159, %v308, %v306
    %v312 = vsel %vm160, %v308, %v306
    %s313 = sld [smem:[#allocation6 + $0x102]]
    %v314 = vstv %s313
    %v315 = vsel %vm161, %v314, %v309
    %v316 = vsel %vm162, %v314, %v310
    %v317 = vsel %vm163, %v314, %v311
    %v318 = vsel %vm164, %v314, %v312
    %v319 = vsel %vm161, %v308, %v306
    %v320 = vsel %vm162, %v308, %v306
    %v321 = vsel %vm163, %v308, %v306
    %v322 = vsel %vm164, %v308, %v306
    %s323 = sld [smem:[#allocation6 + $0x103]]
    %v324 = vstv %s323
    %v325 = vsel %vm165, %v324, %v315
    %v326 = vsel %vm166, %v324, %v316
    %v327 = vsel %vm167, %v324, %v317
    %v328 = vsel %vm168, %v324, %v318
    %v329 = vsel %vm165, %v314, %v319
    %v330 = vsel %vm166, %v314, %v320
    %v331 = vsel %vm167, %v314, %v321
    %v332 = vsel %vm168, %v314, %v322
    %s333 = sld [smem:[#allocation6 + $0x104]]
    %v334 = vstv %s333
    %v335 = vsel %vm169, %v334, %v325
    %v336 = vsel %vm170, %v334, %v326
    %v337 = vsel %vm171, %v334, %v327
    %v338 = vsel %vm172, %v334, %v328
    %v339 = vsel %vm169, %v324, %v329
    %v340 = vsel %vm170, %v324, %v330
    %v341 = vsel %vm171, %v324, %v331
    %v342 = vsel %vm172, %v324, %v332
    %s343 = sld [smem:[#allocation6 + $0x105]]
    %v344 = vstv %s343
    %v345 = vsel %vm173, %v344, %v335
    %v346 = vsel %vm174, %v344, %v336
    %v347 = vsel %vm175, %v344, %v337
    %v348 = vsel %vm176, %v344, %v338
    %v349 = vsel %vm173, %v334, %v339
    %v350 = vsel %vm174, %v334, %v340
    %v351 = vsel %vm175, %v334, %v341
    %v352 = vsel %vm176, %v334, %v342
    %s353 = sld [smem:[#allocation6 + $0x106]]
    %v354 = vstv %s353
    %v355 = vsel %vm177, %v354, %v345
    %v356 = vsel %vm178, %v354, %v346
    %v357 = vsel %vm179, %v354, %v347
    %v358 = vsel %vm180, %v354, %v348
    %v359 = vsel %vm177, %v344, %v349
    %v360 = vsel %vm178, %v344, %v350
    %v361 = vsel %vm179, %v344, %v351
    %v362 = vsel %vm180, %v344, %v352
    %s363 = sld [smem:[#allocation6 + $0x107]]
    %v364 = vstv %s363
    %v365 = vsel %vm181, %v364, %v355
    %v366 = vsel %vm182, %v364, %v356
    %v367 = vsel %vm183, %v364, %v357
    %v368 = vsel %vm184, %v364, %v358
    %v369 = vsel %vm181, %v354, %v359
    %v370 = vsel %vm182, %v354, %v360
    %v371 = vsel %vm183, %v354, %v361
    %v372 = vsel %vm184, %v354, %v362
    %s373 = sld [smem:[#allocation6 + $0x180]]
    %v374 = vstv %s373
    %s375 = sld [smem:[#allocation6 + $0x181]]
    %v376 = vstv %s375
    %v377 = vsel %vm157, %v376, %v374
    %v378 = vsel %vm158, %v376, %v374
    %v379 = vsel %vm159, %v376, %v374
    %v380 = vsel %vm160, %v376, %v374
    %s381 = sld [smem:[#allocation6 + $0x182]]
    %v382 = vstv %s381
    %v383 = vsel %vm161, %v382, %v377
    %v384 = vsel %vm162, %v382, %v378
    %v385 = vsel %vm163, %v382, %v379
    %v386 = vsel %vm164, %v382, %v380
    %v387 = vsel %vm161, %v376, %v374
    %v388 = vsel %vm162, %v376, %v374
    %v389 = vsel %vm163, %v376, %v374
    %v390 = vsel %vm164, %v376, %v374
    %s391 = sld [smem:[#allocation6 + $0x183]]
    %v392 = vstv %s391
    %v393 = vsel %vm165, %v392, %v383
    %v394 = vsel %vm166, %v392, %v384
    %v395 = vsel %vm167, %v392, %v385
    %v396 = vsel %vm168, %v392, %v386
    %v397 = vsel %vm165, %v382, %v387
    %v398 = vsel %vm166, %v382, %v388
    %v399 = vsel %vm167, %v382, %v389
    %v400 = vsel %vm168, %v382, %v390
    %s401 = sld [smem:[#allocation6 + $0x184]]
    %v402 = vstv %s401
    %v403 = vsel %vm169, %v402, %v393
    %v404 = vsel %vm170, %v402, %v394
    %v405 = vsel %vm171, %v402, %v395
    %v406 = vsel %vm172, %v402, %v396
    %v407 = vsel %vm169, %v392, %v397
    %v408 = vsel %vm170, %v392, %v398
    %v409 = vsel %vm171, %v392, %v399
    %v410 = vsel %vm172, %v392, %v400
    %s411 = sld [smem:[#allocation6 + $0x185]]
    %v412 = vstv %s411
    %v413 = vsel %vm173, %v412, %v403
    %v414 = vsel %vm174, %v412, %v404
    %v415 = vsel %vm175, %v412, %v405
    %v416 = vsel %vm176, %v412, %v406
    %v417 = vsel %vm173, %v402, %v407
    %v418 = vsel %vm174, %v402, %v408
    %v419 = vsel %vm175, %v402, %v409
    %v420 = vsel %vm176, %v402, %v410
    %s421 = sld [smem:[#allocation6 + $0x186]]
    %v422 = vstv %s421
    %v423 = vsel %vm177, %v422, %v413
    %v424 = vsel %vm178, %v422, %v414
    %v425 = vsel %vm179, %v422, %v415
    %v426 = vsel %vm180, %v422, %v416
    %v427 = vsel %vm177, %v412, %v417
    %v428 = vsel %vm178, %v412, %v418
    %v429 = vsel %vm179, %v412, %v419
    %v430 = vsel %vm180, %v412, %v420
    %s431 = sld [smem:[#allocation6 + $0x187]]
    %v432 = vstv %s431
    %v433 = vsel %vm181, %v432, %v423
    %v434 = vsel %vm182, %v432, %v424
    %v435 = vsel %vm183, %v432, %v425
    %v436 = vsel %vm184, %v432, %v426
    %v437 = vsel %vm181, %v422, %v427
    %v438 = vsel %vm182, %v422, %v428
    %v439 = vsel %vm183, %v422, %v429
    %v440 = vsel %vm184, %v422, %v430
    %s441 = sld [smem:[#allocation6 + $0x200]]
    %v442 = vstv %s441
    %s443 = sld [smem:[#allocation6 + $0x201]]
    %v444 = vstv %s443
    %v445 = vsel %vm157, %v444, %v442
    %v446 = vsel %vm158, %v444, %v442
    %v447 = vsel %vm159, %v444, %v442
    %v448 = vsel %vm160, %v444, %v442
    %s449 = sld [smem:[#allocation6 + $0x202]]
    %v450 = vstv %s449
    %v451 = vsel %vm161, %v450, %v445
    %v452 = vsel %vm162, %v450, %v446
    %v453 = vsel %vm163, %v450, %v447
    %v454 = vsel %vm164, %v450, %v448
    %v455 = vsel %vm161, %v444, %v442
    %v456 = vsel %vm162, %v444, %v442
    %v457 = vsel %vm163, %v444, %v442
    %v458 = vsel %vm164, %v444, %v442
    %s459 = sld [smem:[#allocation6 + $0x203]]
    %v460 = vstv %s459
    %v461 = vsel %vm165, %v460, %v451
    %v462 = vsel %vm166, %v460, %v452
    %v463 = vsel %vm167, %v460, %v453
    %v464 = vsel %vm168, %v460, %v454
    %v465 = vsel %vm165, %v450, %v455
    %v466 = vsel %vm166, %v450, %v456
    %v467 = vsel %vm167, %v450, %v457
    %v468 = vsel %vm168, %v450, %v458
    %s469 = sld [smem:[#allocation6 + $0x204]]
    %v470 = vstv %s469
    %v471 = vsel %vm169, %v470, %v461
    %v472 = vsel %vm170, %v470, %v462
    %v473 = vsel %vm171, %v470, %v463
    %v474 = vsel %vm172, %v470, %v464
    %v475 = vsel %vm169, %v460, %v465
    %v476 = vsel %vm170, %v460, %v466
    %v477 = vsel %vm171, %v460, %v467
    %v478 = vsel %vm172, %v460, %v468
    %s479 = sld [smem:[#allocation6 + $0x205]]
    %v480 = vstv %s479
    %v481 = vsel %vm173, %v480, %v471
    %v482 = vsel %vm174, %v480, %v472
    %v483 = vsel %vm175, %v480, %v473
    %v484 = vsel %vm176, %v480, %v474
    %v485 = vsel %vm173, %v470, %v475
    %v486 = vsel %vm174, %v470, %v476
    %v487 = vsel %vm175, %v470, %v477
    %v488 = vsel %vm176, %v470, %v478
    %s489 = sld [smem:[#allocation6 + $0x206]]
    %v490 = vstv %s489
    %v491 = vsel %vm177, %v490, %v481
    %v492 = vsel %vm178, %v490, %v482
    %v493 = vsel %vm179, %v490, %v483
    %v494 = vsel %vm180, %v490, %v484
    %v495 = vsel %vm177, %v480, %v485
    %v496 = vsel %vm178, %v480, %v486
    %v497 = vsel %vm179, %v480, %v487
    %v498 = vsel %vm180, %v480, %v488
    %s499 = sld [smem:[#allocation6 + $0x207]]
    %v500 = vstv %s499
    %v501 = vsel %vm181, %v500, %v491
    %v502 = vsel %vm182, %v500, %v492
    %v503 = vsel %vm183, %v500, %v493
    %v504 = vsel %vm184, %v500, %v494
    %v505 = vsel %vm181, %v490, %v495
    %v506 = vsel %vm182, %v490, %v496
    %v507 = vsel %vm183, %v490, %v497
    %v508 = vsel %vm184, %v490, %v498
    %s509 = sld [smem:[#allocation6 + $0x280]]
    %v510 = vstv %s509
    %s511 = sld [smem:[#allocation6 + $0x281]]
    %v512 = vstv %s511
    %v513 = vsel %vm157, %v512, %v510
    %v514 = vsel %vm158, %v512, %v510
    %v515 = vsel %vm159, %v512, %v510
    %v516 = vsel %vm160, %v512, %v510
    %s517 = sld [smem:[#allocation6 + $0x282]]
    %v518 = vstv %s517
    %v519 = vsel %vm161, %v518, %v513
    %v520 = vsel %vm162, %v518, %v514
    %v521 = vsel %vm163, %v518, %v515
    %v522 = vsel %vm164, %v518, %v516
    %v523 = vsel %vm161, %v512, %v510
    %v524 = vsel %vm162, %v512, %v510
    %v525 = vsel %vm163, %v512, %v510
    %v526 = vsel %vm164, %v512, %v510
    %s527 = sld [smem:[#allocation6 + $0x283]]
    %v528 = vstv %s527
    %v529 = vsel %vm165, %v528, %v519
    %v530 = vsel %vm166, %v528, %v520
    %v531 = vsel %vm167, %v528, %v521
    %v532 = vsel %vm168, %v528, %v522
    %v533 = vsel %vm165, %v518, %v523
    %v534 = vsel %vm166, %v518, %v524
    %v535 = vsel %vm167, %v518, %v525
    %v536 = vsel %vm168, %v518, %v526
    %s537 = sld [smem:[#allocation6 + $0x284]]
    %v538 = vstv %s537
    %v539 = vsel %vm169, %v538, %v529
    %v540 = vsel %vm170, %v538, %v530
    %v541 = vsel %vm171, %v538, %v531
    %v542 = vsel %vm172, %v538, %v532
    %v543 = vsel %vm169, %v528, %v533
    %v544 = vsel %vm170, %v528, %v534
    %v545 = vsel %vm171, %v528, %v535
    %v546 = vsel %vm172, %v528, %v536
    %s547 = sld [smem:[#allocation6 + $0x285]]
    %v548 = vstv %s547
    %v549 = vsel %vm173, %v548, %v539
    %v550 = vsel %vm174, %v548, %v540
    %v551 = vsel %vm175, %v548, %v541
    %v552 = vsel %vm176, %v548, %v542
    %v553 = vsel %vm173, %v538, %v543
    %v554 = vsel %vm174, %v538, %v544
    %v555 = vsel %vm175, %v538, %v545
    %v556 = vsel %vm176, %v538, %v546
    %s557 = sld [smem:[#allocation6 + $0x286]]
    %v558 = vstv %s557
    %v559 = vsel %vm177, %v558, %v549
    %v560 = vsel %vm178, %v558, %v550
    %v561 = vsel %vm179, %v558, %v551
    %v562 = vsel %vm180, %v558, %v552
    %v563 = vsel %vm177, %v548, %v553
    %v564 = vsel %vm178, %v548, %v554
    %v565 = vsel %vm179, %v548, %v555
    %v566 = vsel %vm180, %v548, %v556
    %s567 = sld [smem:[#allocation6 + $0x287]]
    %v568 = vstv %s567
    %v569 = vsel %vm181, %v568, %v559
    %v570 = vsel %vm182, %v568, %v560
    %v571 = vsel %vm183, %v568, %v561
    %v572 = vsel %vm184, %v568, %v562
    %v573 = vsel %vm181, %v558, %v563
    %v574 = vsel %vm182, %v558, %v564
    %v575 = vsel %vm183, %v558, %v565
    %v576 = vsel %vm184, %v558, %v566
    %s577 = sld [smem:[#allocation6 + $0x300]]
    %v578 = vstv %s577
    %s579 = sld [smem:[#allocation6 + $0x301]]
    %v580 = vstv %s579
    %v581 = vsel %vm157, %v580, %v578
    %v582 = vsel %vm158, %v580, %v578
    %v583 = vsel %vm159, %v580, %v578
    %v584 = vsel %vm160, %v580, %v578
    %s585 = sld [smem:[#allocation6 + $0x302]]
    %v586 = vstv %s585
    %v587 = vsel %vm161, %v586, %v581
    %v588 = vsel %vm162, %v586, %v582
    %v589 = vsel %vm163, %v586, %v583
    %v590 = vsel %vm164, %v586, %v584
    %v591 = vsel %vm161, %v580, %v578
    %v592 = vsel %vm162, %v580, %v578
    %v593 = vsel %vm163, %v580, %v578
    %v594 = vsel %vm164, %v580, %v578
    %s595 = sld [smem:[#allocation6 + $0x303]]
    %v596 = vstv %s595
    %v597 = vsel %vm165, %v596, %v587
    %v598 = vsel %vm166, %v596, %v588
    %v599 = vsel %vm167, %v596, %v589
    %v600 = vsel %vm168, %v596, %v590
    %v601 = vsel %vm165, %v586, %v591
    %v602 = vsel %vm166, %v586, %v592
    %v603 = vsel %vm167, %v586, %v593
    %v604 = vsel %vm168, %v586, %v594
    %s605 = sld [smem:[#allocation6 + $0x304]]
    %v606 = vstv %s605
    %v607 = vsel %vm169, %v606, %v597
    %v608 = vsel %vm170, %v606, %v598
    %v609 = vsel %vm171, %v606, %v599
    %v610 = vsel %vm172, %v606, %v600
    %v611 = vsel %vm169, %v596, %v601
    %v612 = vsel %vm170, %v596, %v602
    %v613 = vsel %vm171, %v596, %v603
    %v614 = vsel %vm172, %v596, %v604
    %s615 = sld [smem:[#allocation6 + $0x305]]
    %v616 = vstv %s615
    %v617 = vsel %vm173, %v616, %v607
    %v618 = vsel %vm174, %v616, %v608
    %v619 = vsel %vm175, %v616, %v609
    %v620 = vsel %vm176, %v616, %v610
    %v621 = vsel %vm173, %v606, %v611
    %v622 = vsel %vm174, %v606, %v612
    %v623 = vsel %vm175, %v606, %v613
    %v624 = vsel %vm176, %v606, %v614
    %s625 = sld [smem:[#allocation6 + $0x306]]
    %v626 = vstv %s625
    %v627 = vsel %vm177, %v626, %v617
    %v628 = vsel %vm178, %v626, %v618
    %v629 = vsel %vm179, %v626, %v619
    %v630 = vsel %vm180, %v626, %v620
    %v631 = vsel %vm177, %v616, %v621
    %v632 = vsel %vm178, %v616, %v622
    %v633 = vsel %vm179, %v616, %v623
    %v634 = vsel %vm180, %v616, %v624
    %s635 = sld [smem:[#allocation6 + $0x307]]
    %v636 = vstv %s635
    %v637 = vsel %vm181, %v636, %v627
    %v638 = vsel %vm182, %v636, %v628
    %v639 = vsel %vm183, %v636, %v629
    %v640 = vsel %vm184, %v636, %v630
    %v641 = vsel %vm181, %v626, %v631
    %v642 = vsel %vm182, %v626, %v632
    %v643 = vsel %vm183, %v626, %v633
    %v644 = vsel %vm184, %v626, %v634
    %s645 = sld [smem:[#allocation6 + $0x380]]
    %v646 = vstv %s645
    %s647 = sld [smem:[#allocation6 + $0x381]]
    %v648 = vstv %s647
    %v649 = vsel %vm157, %v648, %v646
    %v650 = vsel %vm158, %v648, %v646
    %v651 = vsel %vm159, %v648, %v646
    %v652 = vsel %vm160, %v648, %v646
    %s653 = sld [smem:[#allocation6 + $0x382]]
    %v654 = vstv %s653
    %v655 = vsel %vm161, %v654, %v649
    %v656 = vsel %vm162, %v654, %v650
    %v657 = vsel %vm163, %v654, %v651
    %v658 = vsel %vm164, %v654, %v652
    %v659 = vsel %vm161, %v648, %v646
    %v660 = vsel %vm162, %v648, %v646
    %v661 = vsel %vm163, %v648, %v646
    %v662 = vsel %vm164, %v648, %v646
    %s663 = sld [smem:[#allocation6 + $0x383]]
    %v664 = vstv %s663
    %v665 = vsel %vm165, %v664, %v655
    %v666 = vsel %vm166, %v664, %v656
    %v667 = vsel %vm167, %v664, %v657
    %v668 = vsel %vm168, %v664, %v658
    %v669 = vsel %vm165, %v654, %v659
    %v670 = vsel %vm166, %v654, %v660
    %v671 = vsel %vm167, %v654, %v661
    %v672 = vsel %vm168, %v654, %v662
    %s673 = sld [smem:[#allocation6 + $0x384]]
    %v674 = vstv %s673
    %v675 = vsel %vm169, %v674, %v665
    %v676 = vsel %vm170, %v674, %v666
    %v677 = vsel %vm171, %v674, %v667
    %v678 = vsel %vm172, %v674, %v668
    %v679 = vsel %vm169, %v664, %v669
    %v680 = vsel %vm170, %v664, %v670
    %v681 = vsel %vm171, %v664, %v671
    %v682 = vsel %vm172, %v664, %v672
    %s683 = sld [smem:[#allocation6 + $0x385]]
    %v684 = vstv %s683
    %v685 = vsel %vm173, %v684, %v675
    %v686 = vsel %vm174, %v684, %v676
    %v687 = vsel %vm175, %v684, %v677
    %v688 = vsel %vm176, %v684, %v678
    %v689 = vsel %vm173, %v674, %v679
    %v690 = vsel %vm174, %v674, %v680
    %v691 = vsel %vm175, %v674, %v681
    %v692 = vsel %vm176, %v674, %v682
    %s693 = sld [smem:[#allocation6 + $0x386]]
    %v694 = vstv %s693
    %v695 = vsel %vm177, %v694, %v685
    %v696 = vsel %vm178, %v694, %v686
    %v697 = vsel %vm179, %v694, %v687
    %v698 = vsel %vm180, %v694, %v688
    %v699 = vsel %vm177, %v684, %v689
    %v700 = vsel %vm178, %v684, %v690
    %v701 = vsel %vm179, %v684, %v691
    %v702 = vsel %vm180, %v684, %v692
    %s703 = sld [smem:[#allocation6 + $0x387]]
    %v704 = vstv %s703
    %v705 = vsel %vm181, %v704, %v695
    %v706 = vsel %vm182, %v704, %v696
    %v707 = vsel %vm183, %v704, %v697
    %v708 = vsel %vm184, %v704, %v698
    %v709 = vsel %vm181, %v694, %v699
    %v710 = vsel %vm182, %v694, %v700
    %v711 = vsel %vm183, %v694, %v701
    %v712 = vsel %vm184, %v694, %v702
    %vm713 = vcmp.lt.f32.partialorder %v37, %v42
    %vm714 = vcmp.lt.f32.partialorder %v38, %v42
    %vm715 = vcmp.lt.f32.partialorder %v39, %v42
    %vm716 = vcmp.lt.f32.partialorder %v40, %v42
    %vm717 = vcmp.gt.f32.partialorder %v37, %v136
    %vm718 = vcmp.gt.f32.partialorder %v38, %v136
    %vm719 = vcmp.gt.f32.partialorder %v39, %v136
    %vm720 = vcmp.gt.f32.partialorder %v40, %v136
    %vm721 = vmor %vm713, %vm717
    %vm722 = vmor %vm714, %vm718
    %vm723 = vmor %vm715, %vm719
    %vm724 = vmor %vm716, %vm720
    %vm725 = vcmp.eq.f32.partialorder %v229, %v37
    %vm726 = vcmp.eq.f32.partialorder %v230, %v38
    %vm727 = vcmp.eq.f32.partialorder %v231, %v39
    %vm728 = vcmp.eq.f32.partialorder %v232, %v40
    %v729 = vsub.f32 %v229, %v233
    %v730 = vsub.f32 %v230, %v234
    %v731 = vsub.f32 %v231, %v235
    %v732 = vsub.f32 %v232, %v236
    %vm733 = vcmp.eq.f32.partialorder %v729, 0.0
    %vm734 = vcmp.eq.f32.partialorder %v730, 0.0
    %vm735 = vcmp.eq.f32.partialorder %v731, 0.0
    %vm736 = vcmp.eq.f32.partialorder %v732, 0.0
    %v737 = vsel %vm733, 1.0, %v729
    %v738 = vsel %vm734, 1.0, %v730
    %v739 = vsel %vm735, 1.0, %v731
    %v740 = vsel %vm736, 1.0, %v732
    %v741 = vrcp.pop %v737
    %v742 = vmul.f32 1.0, %v741
    %v743 = vrcp.pop %v738
    %v744 = vmul.f32 1.0, %v743
    %v745 = vrcp.pop %v739
    %v746 = vmul.f32 1.0, %v745
    %v747 = vrcp.pop %v740
    %v748 = vmul.f32 1.0, %v747
    %v749 = vsub.f32 %v433, %v437
    %v750 = vsub.f32 %v434, %v438
    %v751 = vsub.f32 %v435, %v439
    %v752 = vsub.f32 %v436, %v440
    %v753 = vmul.f32 %v749, %v742
    %v754 = vmul.f32 %v750, %v744
    %v755 = vmul.f32 %v751, %v746
    %v756 = vmul.f32 %v752, %v748
    %v757 = vsub.f32 %v501, %v505
    %v758 = vsub.f32 %v502, %v506
    %v759 = vsub.f32 %v503, %v507
    %v760 = vsub.f32 %v504, %v508
    %v761 = vmul.f32 %v757, %v742
    %v762 = vmul.f32 %v758, %v744
    %v763 = vmul.f32 %v759, %v746
    %v764 = vmul.f32 %v760, %v748
    %v765 = vsub.f32 %v37, %v233
    %v766 = vsub.f32 %v38, %v234
    %v767 = vsub.f32 %v39, %v235
    %v768 = vsub.f32 %v40, %v236
    %v769 = vmul.f32 %v753, %v765
    %v770 = vmul.f32 %v754, %v766
    %v771 = vmul.f32 %v755, %v767
    %v772 = vmul.f32 %v756, %v768
    %v773 = vadd.f32 %v437, %v769
    %v774 = vadd.f32 %v438, %v770
    %v775 = vadd.f32 %v439, %v771
    %v776 = vadd.f32 %v440, %v772
    %v777 = vmul.f32 %v761, %v765
    %v778 = vmul.f32 %v762, %v766
    %v779 = vmul.f32 %v763, %v767
    %v780 = vmul.f32 %v764, %v768
    %v781 = vadd.f32 %v505, %v777
    %v782 = vadd.f32 %v506, %v778
    %v783 = vadd.f32 %v507, %v779
    %v784 = vadd.f32 %v508, %v780
    %v785 = vadd.f32 %v761, 1e-06
    %v786 = vadd.f32 %v762, 1e-06
    %v787 = vadd.f32 %v763, 1e-06
    %v788 = vadd.f32 %v764, 1e-06
    %v789 = vrcp.pop %v785
    %v790 = vmul.f32 1.0, %v789
    %v791 = vrcp.pop %v786
    %v792 = vmul.f32 1.0, %v791
    %v793 = vrcp.pop %v787
    %v794 = vmul.f32 1.0, %v793
    %v795 = vrcp.pop %v788
    %v796 = vmul.f32 1.0, %v795
    %v797 = vand.u32 2147483647, %v505
    %vm798 = vcmp.le.f32.partialorder %v797, 0.7853982
    %vm799 = vcmp.lt.s32.totalorder %v505, 0
    %v800 = vand.u32 %v505, 2139095040
    %v801 = vshrl.u32 %v800, 23
    %v802 = vsub.s32 %v801, 127
    %v803 = vand.u32 2147483647, %v505
    %v804 = vand.u32 %v803, 8388607
    %v805 = vor.u32 %v804, 8388608
    %v806 = vsub.s32 0, %v805
    %v807 = vadd.s32 %v802, 1
    %vm808 = vcmp.gt.s32.totalorder %v807, 0
    %v809 = vsel %vm808, %v807, 0
    %v810 = vshrl.u32 %v809, 5
    %v811 = vand.u32 %v809, 31
    %v812 = vsub.s32 32, %v811
    %v813 = vshrl.u32 683565275, %v812
    %v814 = vshll.u32 683565275, %v811
    %v815 = vshrl.u32 2475754826, %v812
    %v816 = vor.u32 %v814, %v815
    %v817 = vshll.u32 2475754826, %v811
    %v818 = vshrl.u32 2131351028, %v812
    %v819 = vor.u32 %v817, %v818
    %v820 = vshll.u32 2131351028, %v811
    %v821 = vshrl.u32 2102212464, %v812
    %v822 = vor.u32 %v820, %v821
    %v823 = vshll.u32 2102212464, %v811
    %v824 = vshrl.u32 920167782, %v812
    %v825 = vor.u32 %v823, %v824
    %v826 = vshll.u32 920167782, %v811
    %v827 = vshrl.u32 1326507024, %v812
    %v828 = vor.u32 %v826, %v827
    %vm829 = vcmp.lt.s32.totalorder %v810, 1
    %vm830 = vcmp.lt.s32.totalorder %v810, 2
    %vm831 = vcmp.lt.s32.totalorder %v810, 3
    %vm832 = vcmp.lt.s32.totalorder %v810, 4
    %v833 = vsel %vm829, %v813, %v816
    %v834 = vsel %vm832, %v822, 2102212464
    %v835 = vsel %vm831, %v819, %v834
    %v836 = vsel %vm830, %v833, %v835
    %v837 = vsel %vm829, %v816, %v819
    %v838 = vsel %vm832, %v825, 920167782
    %v839 = vsel %vm831, %v822, %v838
    %v840 = vsel %vm830, %v837, %v839
    %v841 = vsel %vm829, %v819, %v822
    %v842 = vsel %vm832, %v828, 1326507024
    %v843 = vsel %vm831, %v825, %v842
    %v844 = vsel %vm830, %v841, %v843
    %v845 = vshll.u32 %v805, 8
    %v846 = vmul.u32.u64.compose %v845, %v844
    %v847 = vextract.low.u32 %v846
    %v848 = vextract.high.u32 %v846
    %v849 = vmul.u32.u64.compose %v845, %v840
    %v850 = vextract.low.u32 %v849
    %v851 = vextract.high.u32 %v849
    %v852 = vmul.u32 %v845, %v836
    %v853 = vadd.s32 %v848, %v850
    %vm854 = vc.u32 %v848, %v850
    %v855 = vadd.s32 %v851, 1
    %v856 = vsel %vm854, %v855, %v851
    %v857 = vadd.s32 %v852, %v856
    %v858 = vadd.s32 %v857, 536870912
    %v859 = vshrl.u32 %v858, 30
    %v860 = vshll.u32 %v859, 30
    %v861 = vsub.s32 %v857, %v860
    %vm862 = vcmp.lt.s32.totalorder %v861, 0
    %v863 = vsub.s32 0, %v861
    %v864 = vsel %vm862, %v863, %v861
    %v865 = vclz %v864
    %v866 = vsub.s32 %v865, 2
    %vm867 = vcmp.gt.s32.totalorder 0, %v866
    %v868 = vsel %vm867, 0, %v866
    %v869 = vsub.s32 32, %v868
    %v870 = vshll.u32 %v861, %v868
    %v871 = vshrl.u32 %v853, %v869
    %v872 = vor.u32 %v870, %v871
    %v873 = vsub.s32 4294967266, %v868
    %v874 = vadd.s32 %v873, 127
    %v875 = vshll.u32 %v874, 23
    %v876 = vor.u32 4788187, %v875
    %v877 = vand.u32 2147483647, %v876
    %v879 = vcvt.s32.f32 %v872
    %v880 = vmul.f32 %v879, %v877
    %v881 = vxor.u32 %v880, 2147483648
    %v882 = vsel %vm799, %v881, %v880
    %v883 = vsub.s32 4, %v859
    %v884 = vsel %vm799, %v883, %v859
    %v885 = vsel %vm798, %v505, %v882
    %v886 = vsel %vm798, 0, %v884
    %v887 = vcosq.f32.pop %v885
    %v888 = vsinq.f32.pop %v885
    %vm889 = vweird.f32 %v505
    %v890 = vadd.s32 %v886, 3
    %v891 = vand.u32 %v890, 3
    %vm892 = vcmp.lt.s32.totalorder %v891, 2
    %vm893 = vcmp.eq.s32.totalorder %v891, 0
    %v894 = vxor.u32 %v888, 2147483648
    %v895 = vsel %vm893, %v887, %v894
    %vm896 = vcmp.eq.s32.totalorder %v891, 2
    %v897 = vxor.u32 %v887, 2147483648
    %v898 = vsel %vm896, %v897, %v888
    %v899 = vsel %vm892, %v895, %v898
    %v900 = vsel %vm889, nan, %v899
    %v901 = vand.u32 2147483647, %v506
    %vm902 = vcmp.le.f32.partialorder %v901, 0.7853982
    %vm903 = vcmp.lt.s32.totalorder %v506, 0
    %v904 = vand.u32 %v506, 2139095040
    %v905 = vshrl.u32 %v904, 23
    %v906 = vsub.s32 %v905, 127
    %v907 = vand.u32 2147483647, %v506
    %v908 = vand.u32 %v907, 8388607
    %v909 = vor.u32 %v908, 8388608
    %v910 = vsub.s32 0, %v909
    %v911 = vadd.s32 %v906, 1
    %vm912 = vcmp.gt.s32.totalorder %v911, 0
    %v913 = vsel %vm912, %v911, 0
    %v914 = vshrl.u32 %v913, 5
    %v915 = vand.u32 %v913, 31
    %v916 = vsub.s32 32, %v915
    %v917 = vshrl.u32 683565275, %v916
    %v918 = vshll.u32 683565275, %v915
    %v919 = vshrl.u32 2475754826, %v916
    %v920 = vor.u32 %v918, %v919
    %v921 = vshll.u32 2475754826, %v915
    %v922 = vshrl.u32 2131351028, %v916
    %v923 = vor.u32 %v921, %v922
    %v924 = vshll.u32 2131351028, %v915
    %v925 = vshrl.u32 2102212464, %v916
    %v926 = vor.u32 %v924, %v925
    %v927 = vshll.u32 2102212464, %v915
    %v928 = vshrl.u32 920167782, %v916
    %v929 = vor.u32 %v927, %v928
    %v930 = vshll.u32 920167782, %v915
    %v931 = vshrl.u32 1326507024, %v916
    %v932 = vor.u32 %v930, %v931
    %vm933 = vcmp.lt.s32.totalorder %v914, 1
    %vm934 = vcmp.lt.s32.totalorder %v914, 2
    %vm935 = vcmp.lt.s32.totalorder %v914, 3
    %vm936 = vcmp.lt.s32.totalorder %v914, 4
    %v937 = vsel %vm933, %v917, %v920
    %v938 = vsel %vm936, %v926, 2102212464
    %v939 = vsel %vm935, %v923, %v938
    %v940 = vsel %vm934, %v937, %v939
    %v941 = vsel %vm933, %v920, %v923
    %v942 = vsel %vm936, %v929, 920167782
    %v943 = vsel %vm935, %v926, %v942
    %v944 = vsel %vm934, %v941, %v943
    %v945 = vsel %vm933, %v923, %v926
    %v946 = vsel %vm936, %v932, 1326507024
    %v947 = vsel %vm935, %v929, %v946
    %v948 = vsel %vm934, %v945, %v947
    %v949 = vshll.u32 %v909, 8
    %v950 = vmul.u32.u64.compose %v949, %v948
    %v951 = vextract.low.u32 %v950
    %v952 = vextract.high.u32 %v950
    %v953 = vmul.u32.u64.compose %v949, %v944
    %v954 = vextract.low.u32 %v953
    %v955 = vextract.high.u32 %v953
    %v956 = vmul.u32 %v949, %v940
    %v957 = vadd.s32 %v952, %v954
    %vm958 = vc.u32 %v952, %v954
    %v959 = vadd.s32 %v955, 1
    %v960 = vsel %vm958, %v959, %v955
    %v961 = vadd.s32 %v956, %v960
    %v962 = vadd.s32 %v961, 536870912
    %v963 = vshrl.u32 %v962, 30
    %v964 = vshll.u32 %v963, 30
    %v965 = vsub.s32 %v961, %v964
    %vm966 = vcmp.lt.s32.totalorder %v965, 0
    %v967 = vsub.s32 0, %v965
    %v968 = vsel %vm966, %v967, %v965
    %v969 = vclz %v968
    %v970 = vsub.s32 %v969, 2
    %vm971 = vcmp.gt.s32.totalorder 0, %v970
    %v972 = vsel %vm971, 0, %v970
    %v973 = vsub.s32 32, %v972
    %v974 = vshll.u32 %v965, %v972
    %v975 = vshrl.u32 %v957, %v973
    %v976 = vor.u32 %v974, %v975
    %v977 = vsub.s32 4294967266, %v972
    %v978 = vadd.s32 %v977, 127
    %v979 = vshll.u32 %v978, 23
    %v980 = vor.u32 4788187, %v979
    %v981 = vand.u32 2147483647, %v980
    %v983 = vcvt.s32.f32 %v976
    %v984 = vmul.f32 %v983, %v981
    %v985 = vxor.u32 %v984, 2147483648
    %v986 = vsel %vm903, %v985, %v984
    %v987 = vsub.s32 4, %v963
    %v988 = vsel %vm903, %v987, %v963
    %v989 = vsel %vm902, %v506, %v986
    %v990 = vsel %vm902, 0, %v988
    %v991 = vcosq.f32.pop %v989
    %v992 = vsinq.f32.pop %v989
    %vm993 = vweird.f32 %v506
    %v994 = vadd.s32 %v990, 3
    %v995 = vand.u32 %v994, 3
    %vm996 = vcmp.lt.s32.totalorder %v995, 2
    %vm997 = vcmp.eq.s32.totalorder %v995, 0
    %v998 = vxor.u32 %v992, 2147483648
    %v999 = vsel %vm997, %v991, %v998
    %vm1000 = vcmp.eq.s32.totalorder %v995, 2
    %v1001 = vxor.u32 %v991, 2147483648
    %v1002 = vsel %vm1000, %v1001, %v992
    %v1003 = vsel %vm996, %v999, %v1002
    %v1004 = vsel %vm993, nan, %v1003
    %v1005 = vand.u32 2147483647, %v507
    %vm1006 = vcmp.le.f32.partialorder %v1005, 0.7853982
    %vm1007 = vcmp.lt.s32.totalorder %v507, 0
    %v1008 = vand.u32 %v507, 2139095040
    %v1009 = vshrl.u32 %v1008, 23
    %v1010 = vsub.s32 %v1009, 127
    %v1011 = vand.u32 2147483647, %v507
    %v1012 = vand.u32 %v1011, 8388607
    %v1013 = vor.u32 %v1012, 8388608
    %v1014 = vsub.s32 0, %v1013
    %v1015 = vadd.s32 %v1010, 1
    %vm1016 = vcmp.gt.s32.totalorder %v1015, 0
    %v1017 = vsel %vm1016, %v1015, 0
    %v1018 = vshrl.u32 %v1017, 5
    %v1019 = vand.u32 %v1017, 31
    %v1020 = vsub.s32 32, %v1019
    %v1021 = vshrl.u32 683565275, %v1020
    %v1022 = vshll.u32 683565275, %v1019
    %v1023 = vshrl.u32 2475754826, %v1020
    %v1024 = vor.u32 %v1022, %v1023
    %v1025 = vshll.u32 2475754826, %v1019
    %v1026 = vshrl.u32 2131351028, %v1020
    %v1027 = vor.u32 %v1025, %v1026
    %v1028 = vshll.u32 2131351028, %v1019
    %v1029 = vshrl.u32 2102212464, %v1020
    %v1030 = vor.u32 %v1028, %v1029
    %v1031 = vshll.u32 2102212464, %v1019
    %v1032 = vshrl.u32 920167782, %v1020
    %v1033 = vor.u32 %v1031, %v1032
    %v1034 = vshll.u32 920167782, %v1019
    %v1035 = vshrl.u32 1326507024, %v1020
    %v1036 = vor.u32 %v1034, %v1035
    %vm1037 = vcmp.lt.s32.totalorder %v1018, 1
    %vm1038 = vcmp.lt.s32.totalorder %v1018, 2
    %vm1039 = vcmp.lt.s32.totalorder %v1018, 3
    %vm1040 = vcmp.lt.s32.totalorder %v1018, 4
    %v1041 = vsel %vm1037, %v1021, %v1024
    %v1042 = vsel %vm1040, %v1030, 2102212464
    %v1043 = vsel %vm1039, %v1027, %v1042
    %v1044 = vsel %vm1038, %v1041, %v1043
    %v1045 = vsel %vm1037, %v1024, %v1027
    %v1046 = vsel %vm1040, %v1033, 920167782
    %v1047 = vsel %vm1039, %v1030, %v1046
    %v1048 = vsel %vm1038, %v1045, %v1047
    %v1049 = vsel %vm1037, %v1027, %v1030
    %v1050 = vsel %vm1040, %v1036, 1326507024
    %v1051 = vsel %vm1039, %v1033, %v1050
    %v1052 = vsel %vm1038, %v1049, %v1051
    %v1053 = vshll.u32 %v1013, 8
    %v1054 = vmul.u32.u64.compose %v1053, %v1052
    %v1055 = vextract.low.u32 %v1054
    %v1056 = vextract.high.u32 %v1054
    %v1057 = vmul.u32.u64.compose %v1053, %v1048
    %v1058 = vextract.low.u32 %v1057
    %v1059 = vextract.high.u32 %v1057
    %v1060 = vmul.u32 %v1053, %v1044
    %v1061 = vadd.s32 %v1056, %v1058
    %vm1062 = vc.u32 %v1056, %v1058
    %v1063 = vadd.s32 %v1059, 1
    %v1064 = vsel %vm1062, %v1063, %v1059
    %v1065 = vadd.s32 %v1060, %v1064
    %v1066 = vadd.s32 %v1065, 536870912
    %v1067 = vshrl.u32 %v1066, 30
    %v1068 = vshll.u32 %v1067, 30
    %v1069 = vsub.s32 %v1065, %v1068
    %vm1070 = vcmp.lt.s32.totalorder %v1069, 0
    %v1071 = vsub.s32 0, %v1069
    %v1072 = vsel %vm1070, %v1071, %v1069
    %v1073 = vclz %v1072
    %v1074 = vsub.s32 %v1073, 2
    %vm1075 = vcmp.gt.s32.totalorder 0, %v1074
    %v1076 = vsel %vm1075, 0, %v1074
    %v1077 = vsub.s32 32, %v1076
    %v1078 = vshll.u32 %v1069, %v1076
    %v1079 = vshrl.u32 %v1061, %v1077
    %v1080 = vor.u32 %v1078, %v1079
    %v1081 = vsub.s32 4294967266, %v1076
    %v1082 = vadd.s32 %v1081, 127
    %v1083 = vshll.u32 %v1082, 23
    %v1084 = vor.u32 4788187, %v1083
    %v1085 = vand.u32 2147483647, %v1084
    %v1087 = vcvt.s32.f32 %v1080
    %v1088 = vmul.f32 %v1087, %v1085
    %v1089 = vxor.u32 %v1088, 2147483648
    %v1090 = vsel %vm1007, %v1089, %v1088
    %v1091 = vsub.s32 4, %v1067
    %v1092 = vsel %vm1007, %v1091, %v1067
    %v1093 = vsel %vm1006, %v507, %v1090
    %v1094 = vsel %vm1006, 0, %v1092
    %v1095 = vcosq.f32.pop %v1093
    %v1096 = vsinq.f32.pop %v1093
    %vm1097 = vweird.f32 %v507
    %v1098 = vadd.s32 %v1094, 3
    %v1099 = vand.u32 %v1098, 3
    %vm1100 = vcmp.lt.s32.totalorder %v1099, 2
    %vm1101 = vcmp.eq.s32.totalorder %v1099, 0
    %v1102 = vxor.u32 %v1096, 2147483648
    %v1103 = vsel %vm1101, %v1095, %v1102
    %vm1104 = vcmp.eq.s32.totalorder %v1099, 2
    %v1105 = vxor.u32 %v1095, 2147483648
    %v1106 = vsel %vm1104, %v1105, %v1096
    %v1107 = vsel %vm1100, %v1103, %v1106
    %v1108 = vsel %vm1097, nan, %v1107
    %v1109 = vand.u32 2147483647, %v508
    %vm1110 = vcmp.le.f32.partialorder %v1109, 0.7853982
    %vm1111 = vcmp.lt.s32.totalorder %v508, 0
    %v1112 = vand.u32 %v508, 2139095040
    %v1113 = vshrl.u32 %v1112, 23
    %v1114 = vsub.s32 %v1113, 127
    %v1115 = vand.u32 2147483647, %v508
    %v1116 = vand.u32 %v1115, 8388607
    %v1117 = vor.u32 %v1116, 8388608
    %v1118 = vsub.s32 0, %v1117
    %v1119 = vadd.s32 %v1114, 1
    %vm1120 = vcmp.gt.s32.totalorder %v1119, 0
    %v1121 = vsel %vm1120, %v1119, 0
    %v1122 = vshrl.u32 %v1121, 5
    %v1123 = vand.u32 %v1121, 31
    %v1124 = vsub.s32 32, %v1123
    %v1125 = vshrl.u32 683565275, %v1124
    %v1126 = vshll.u32 683565275, %v1123
    %v1127 = vshrl.u32 2475754826, %v1124
    %v1128 = vor.u32 %v1126, %v1127
    %v1129 = vshll.u32 2475754826, %v1123
    %v1130 = vshrl.u32 2131351028, %v1124
    %v1131 = vor.u32 %v1129, %v1130
    %v1132 = vshll.u32 2131351028, %v1123
    %v1133 = vshrl.u32 2102212464, %v1124
    %v1134 = vor.u32 %v1132, %v1133
    %v1135 = vshll.u32 2102212464, %v1123
    %v1136 = vshrl.u32 920167782, %v1124
    %v1137 = vor.u32 %v1135, %v1136
    %v1138 = vshll.u32 920167782, %v1123
    %v1139 = vshrl.u32 1326507024, %v1124
    %v1140 = vor.u32 %v1138, %v1139
    %vm1141 = vcmp.lt.s32.totalorder %v1122, 1
    %vm1142 = vcmp.lt.s32.totalorder %v1122, 2
    %vm1143 = vcmp.lt.s32.totalorder %v1122, 3
    %vm1144 = vcmp.lt.s32.totalorder %v1122, 4
    %v1145 = vsel %vm1141, %v1125, %v1128
    %v1146 = vsel %vm1144, %v1134, 2102212464
    %v1147 = vsel %vm1143, %v1131, %v1146
    %v1148 = vsel %vm1142, %v1145, %v1147
    %v1149 = vsel %vm1141, %v1128, %v1131
    %v1150 = vsel %vm1144, %v1137, 920167782
    %v1151 = vsel %vm1143, %v1134, %v1150
    %v1152 = vsel %vm1142, %v1149, %v1151
    %v1153 = vsel %vm1141, %v1131, %v1134
    %v1154 = vsel %vm1144, %v1140, 1326507024
    %v1155 = vsel %vm1143, %v1137, %v1154
    %v1156 = vsel %vm1142, %v1153, %v1155
    %v1157 = vshll.u32 %v1117, 8
    %v1158 = vmul.u32.u64.compose %v1157, %v1156
    %v1159 = vextract.low.u32 %v1158
    %v1160 = vextract.high.u32 %v1158
    %v1161 = vmul.u32.u64.compose %v1157, %v1152
    %v1162 = vextract.low.u32 %v1161
    %v1163 = vextract.high.u32 %v1161
    %v1164 = vmul.u32 %v1157, %v1148
    %v1165 = vadd.s32 %v1160, %v1162
    %vm1166 = vc.u32 %v1160, %v1162
    %v1167 = vadd.s32 %v1163, 1
    %v1168 = vsel %vm1166, %v1167, %v1163
    %v1169 = vadd.s32 %v1164, %v1168
    %v1170 = vadd.s32 %v1169, 536870912
    %v1171 = vshrl.u32 %v1170, 30
    %v1172 = vshll.u32 %v1171, 30
    %v1173 = vsub.s32 %v1169, %v1172
    %vm1174 = vcmp.lt.s32.totalorder %v1173, 0
    %v1175 = vsub.s32 0, %v1173
    %v1176 = vsel %vm1174, %v1175, %v1173
    %v1177 = vclz %v1176
    %v1178 = vsub.s32 %v1177, 2
    %vm1179 = vcmp.gt.s32.totalorder 0, %v1178
    %v1180 = vsel %vm1179, 0, %v1178
    %v1181 = vsub.s32 32, %v1180
    %v1182 = vshll.u32 %v1173, %v1180
    %v1183 = vshrl.u32 %v1165, %v1181
    %v1184 = vor.u32 %v1182, %v1183
    %v1185 = vsub.s32 4294967266, %v1180
    %v1186 = vadd.s32 %v1185, 127
    %v1187 = vshll.u32 %v1186, 23
    %v1188 = vor.u32 4788187, %v1187
    %v1189 = vand.u32 2147483647, %v1188
    %v1191 = vcvt.s32.f32 %v1184
    %v1192 = vmul.f32 %v1191, %v1189
    %v1193 = vxor.u32 %v1192, 2147483648
    %v1194 = vsel %vm1111, %v1193, %v1192
    %v1195 = vsub.s32 4, %v1171
    %v1196 = vsel %vm1111, %v1195, %v1171
    %v1197 = vsel %vm1110, %v508, %v1194
    %v1198 = vsel %vm1110, 0, %v1196
    %v1199 = vcosq.f32.pop %v1197
    %v1200 = vsinq.f32.pop %v1197
    %vm1201 = vweird.f32 %v508
    %v1202 = vadd.s32 %v1198, 3
    %v1203 = vand.u32 %v1202, 3
    %vm1204 = vcmp.lt.s32.totalorder %v1203, 2
    %vm1205 = vcmp.eq.s32.totalorder %v1203, 0
    %v1206 = vxor.u32 %v1200, 2147483648
    %v1207 = vsel %vm1205, %v1199, %v1206
    %vm1208 = vcmp.eq.s32.totalorder %v1203, 2
    %v1209 = vxor.u32 %v1199, 2147483648
    %v1210 = vsel %vm1208, %v1209, %v1200
    %v1211 = vsel %vm1204, %v1207, %v1210
    %v1212 = vsel %vm1201, nan, %v1211
    %v1213 = vand.u32 2147483647, %v505
    %vm1214 = vcmp.le.f32.partialorder %v1213, 0.7853982
    %vm1215 = vcmp.lt.s32.totalorder %v505, 0
    %v1216 = vand.u32 %v505, 2139095040
    %v1217 = vshrl.u32 %v1216, 23
    %v1218 = vsub.s32 %v1217, 127
    %v1219 = vand.u32 2147483647, %v505
    %v1220 = vand.u32 %v1219, 8388607
    %v1221 = vor.u32 %v1220, 8388608
    %v1222 = vsub.s32 0, %v1221
    %v1223 = vadd.s32 %v1218, 1
    %vm1224 = vcmp.gt.s32.totalorder %v1223, 0
    %v1225 = vsel %vm1224, %v1223, 0
    %v1226 = vshrl.u32 %v1225, 5
    %v1227 = vand.u32 %v1225, 31
    %v1228 = vsub.s32 32, %v1227
    %v1229 = vshrl.u32 683565275, %v1228
    %v1230 = vshll.u32 683565275, %v1227
    %v1231 = vshrl.u32 2475754826, %v1228
    %v1232 = vor.u32 %v1230, %v1231
    %v1233 = vshll.u32 2475754826, %v1227
    %v1234 = vshrl.u32 2131351028, %v1228
    %v1235 = vor.u32 %v1233, %v1234
    %v1236 = vshll.u32 2131351028, %v1227
    %v1237 = vshrl.u32 2102212464, %v1228
    %v1238 = vor.u32 %v1236, %v1237
    %v1239 = vshll.u32 2102212464, %v1227
    %v1240 = vshrl.u32 920167782, %v1228
    %v1241 = vor.u32 %v1239, %v1240
    %v1242 = vshll.u32 920167782, %v1227
    %v1243 = vshrl.u32 1326507024, %v1228
    %v1244 = vor.u32 %v1242, %v1243
    %vm1245 = vcmp.lt.s32.totalorder %v1226, 1
    %vm1246 = vcmp.lt.s32.totalorder %v1226, 2
    %vm1247 = vcmp.lt.s32.totalorder %v1226, 3
    %vm1248 = vcmp.lt.s32.totalorder %v1226, 4
    %v1249 = vsel %vm1245, %v1229, %v1232
    %v1250 = vsel %vm1248, %v1238, 2102212464
    %v1251 = vsel %vm1247, %v1235, %v1250
    %v1252 = vsel %vm1246, %v1249, %v1251
    %v1253 = vsel %vm1245, %v1232, %v1235
    %v1254 = vsel %vm1248, %v1241, 920167782
    %v1255 = vsel %vm1247, %v1238, %v1254
    %v1256 = vsel %vm1246, %v1253, %v1255
    %v1257 = vsel %vm1245, %v1235, %v1238
    %v1258 = vsel %vm1248, %v1244, 1326507024
    %v1259 = vsel %vm1247, %v1241, %v1258
    %v1260 = vsel %vm1246, %v1257, %v1259
    %v1261 = vshll.u32 %v1221, 8
    %v1262 = vmul.u32.u64.compose %v1261, %v1260
    %v1263 = vextract.low.u32 %v1262
    %v1264 = vextract.high.u32 %v1262
    %v1265 = vmul.u32.u64.compose %v1261, %v1256
    %v1266 = vextract.low.u32 %v1265
    %v1267 = vextract.high.u32 %v1265
    %v1268 = vmul.u32 %v1261, %v1252
    %v1269 = vadd.s32 %v1264, %v1266
    %vm1270 = vc.u32 %v1264, %v1266
    %v1271 = vadd.s32 %v1267, 1
    %v1272 = vsel %vm1270, %v1271, %v1267
    %v1273 = vadd.s32 %v1268, %v1272
    %v1274 = vadd.s32 %v1273, 536870912
    %v1275 = vshrl.u32 %v1274, 30
    %v1276 = vshll.u32 %v1275, 30
    %v1277 = vsub.s32 %v1273, %v1276
    %vm1278 = vcmp.lt.s32.totalorder %v1277, 0
    %v1279 = vsub.s32 0, %v1277
    %v1280 = vsel %vm1278, %v1279, %v1277
    %v1281 = vclz %v1280
    %v1282 = vsub.s32 %v1281, 2
    %vm1283 = vcmp.gt.s32.totalorder 0, %v1282
    %v1284 = vsel %vm1283, 0, %v1282
    %v1285 = vsub.s32 32, %v1284
    %v1286 = vshll.u32 %v1277, %v1284
    %v1287 = vshrl.u32 %v1269, %v1285
    %v1288 = vor.u32 %v1286, %v1287
    %v1289 = vsub.s32 4294967266, %v1284
    %v1290 = vadd.s32 %v1289, 127
    %v1291 = vshll.u32 %v1290, 23
    %v1292 = vor.u32 4788187, %v1291
    %v1293 = vand.u32 2147483647, %v1292
    %v1295 = vcvt.s32.f32 %v1288
    %v1296 = vmul.f32 %v1295, %v1293
    %v1297 = vxor.u32 %v1296, 2147483648
    %v1298 = vsel %vm1215, %v1297, %v1296
    %v1299 = vsub.s32 4, %v1275
    %v1300 = vsel %vm1215, %v1299, %v1275
    %v1301 = vsel %vm1214, %v505, %v1298
    %v1302 = vsel %vm1214, 0, %v1300
    %v1303 = vcosq.f32.pop %v1301
    %v1304 = vsinq.f32.pop %v1301
    %vm1305 = vweird.f32 %v505
    %v1306 = vand.u32 %v1302, 3
    %vm1307 = vcmp.lt.s32.totalorder %v1306, 2
    %vm1308 = vcmp.eq.s32.totalorder %v1306, 0
    %v1309 = vxor.u32 %v1304, 2147483648
    %v1310 = vsel %vm1308, %v1303, %v1309
    %vm1311 = vcmp.eq.s32.totalorder %v1306, 2
    %v1312 = vxor.u32 %v1303, 2147483648
    %v1313 = vsel %vm1311, %v1312, %v1304
    %v1314 = vsel %vm1307, %v1310, %v1313
    %v1315 = vsel %vm1305, nan, %v1314
    %v1316 = vand.u32 2147483647, %v506
    %vm1317 = vcmp.le.f32.partialorder %v1316, 0.7853982
    %vm1318 = vcmp.lt.s32.totalorder %v506, 0
    %v1319 = vand.u32 %v506, 2139095040
    %v1320 = vshrl.u32 %v1319, 23
    %v1321 = vsub.s32 %v1320, 127
    %v1322 = vand.u32 2147483647, %v506
    %v1323 = vand.u32 %v1322, 8388607
    %v1324 = vor.u32 %v1323, 8388608
    %v1325 = vsub.s32 0, %v1324
    %v1326 = vadd.s32 %v1321, 1
    %vm1327 = vcmp.gt.s32.totalorder %v1326, 0
    %v1328 = vsel %vm1327, %v1326, 0
    %v1329 = vshrl.u32 %v1328, 5
    %v1330 = vand.u32 %v1328, 31
    %v1331 = vsub.s32 32, %v1330
    %v1332 = vshrl.u32 683565275, %v1331
    %v1333 = vshll.u32 683565275, %v1330
    %v1334 = vshrl.u32 2475754826, %v1331
    %v1335 = vor.u32 %v1333, %v1334
    %v1336 = vshll.u32 2475754826, %v1330
    %v1337 = vshrl.u32 2131351028, %v1331
    %v1338 = vor.u32 %v1336, %v1337
    %v1339 = vshll.u32 2131351028, %v1330
    %v1340 = vshrl.u32 2102212464, %v1331
    %v1341 = vor.u32 %v1339, %v1340
    %v1342 = vshll.u32 2102212464, %v1330
    %v1343 = vshrl.u32 920167782, %v1331
    %v1344 = vor.u32 %v1342, %v1343
    %v1345 = vshll.u32 920167782, %v1330
    %v1346 = vshrl.u32 1326507024, %v1331
    %v1347 = vor.u32 %v1345, %v1346
    %vm1348 = vcmp.lt.s32.totalorder %v1329, 1
    %vm1349 = vcmp.lt.s32.totalorder %v1329, 2
    %vm1350 = vcmp.lt.s32.totalorder %v1329, 3
    %vm1351 = vcmp.lt.s32.totalorder %v1329, 4
    %v1352 = vsel %vm1348, %v1332, %v1335
    %v1353 = vsel %vm1351, %v1341, 2102212464
    %v1354 = vsel %vm1350, %v1338, %v1353
    %v1355 = vsel %vm1349, %v1352, %v1354
    %v1356 = vsel %vm1348, %v1335, %v1338
    %v1357 = vsel %vm1351, %v1344, 920167782
    %v1358 = vsel %vm1350, %v1341, %v1357
    %v1359 = vsel %vm1349, %v1356, %v1358
    %v1360 = vsel %vm1348, %v1338, %v1341
    %v1361 = vsel %vm1351, %v1347, 1326507024
    %v1362 = vsel %vm1350, %v1344, %v1361
    %v1363 = vsel %vm1349, %v1360, %v1362
    %v1364 = vshll.u32 %v1324, 8
    %v1365 = vmul.u32.u64.compose %v1364, %v1363
    %v1366 = vextract.low.u32 %v1365
    %v1367 = vextract.high.u32 %v1365
    %v1368 = vmul.u32.u64.compose %v1364, %v1359
    %v1369 = vextract.low.u32 %v1368
    %v1370 = vextract.high.u32 %v1368
    %v1371 = vmul.u32 %v1364, %v1355
    %v1372 = vadd.s32 %v1367, %v1369
    %vm1373 = vc.u32 %v1367, %v1369
    %v1374 = vadd.s32 %v1370, 1
    %v1375 = vsel %vm1373, %v1374, %v1370
    %v1376 = vadd.s32 %v1371, %v1375
    %v1377 = vadd.s32 %v1376, 536870912
    %v1378 = vshrl.u32 %v1377, 30
    %v1379 = vshll.u32 %v1378, 30
    %v1380 = vsub.s32 %v1376, %v1379
    %vm1381 = vcmp.lt.s32.totalorder %v1380, 0
    %v1382 = vsub.s32 0, %v1380
    %v1383 = vsel %vm1381, %v1382, %v1380
    %v1384 = vclz %v1383
    %v1385 = vsub.s32 %v1384, 2
    %vm1386 = vcmp.gt.s32.totalorder 0, %v1385
    %v1387 = vsel %vm1386, 0, %v1385
    %v1388 = vsub.s32 32, %v1387
    %v1389 = vshll.u32 %v1380, %v1387
    %v1390 = vshrl.u32 %v1372, %v1388
    %v1391 = vor.u32 %v1389, %v1390
    %v1392 = vsub.s32 4294967266, %v1387
    %v1393 = vadd.s32 %v1392, 127
    %v1394 = vshll.u32 %v1393, 23
    %v1395 = vor.u32 4788187, %v1394
    %v1396 = vand.u32 2147483647, %v1395
    %v1398 = vcvt.s32.f32 %v1391
    %v1399 = vmul.f32 %v1398, %v1396
    %v1400 = vxor.u32 %v1399, 2147483648
    %v1401 = vsel %vm1318, %v1400, %v1399
    %v1402 = vsub.s32 4, %v1378
    %v1403 = vsel %vm1318, %v1402, %v1378
    %v1404 = vsel %vm1317, %v506, %v1401
    %v1405 = vsel %vm1317, 0, %v1403
    %v1406 = vcosq.f32.pop %v1404
    %v1407 = vsinq.f32.pop %v1404
    %vm1408 = vweird.f32 %v506
    %v1409 = vand.u32 %v1405, 3
    %vm1410 = vcmp.lt.s32.totalorder %v1409, 2
    %vm1411 = vcmp.eq.s32.totalorder %v1409, 0
    %v1412 = vxor.u32 %v1407, 2147483648
    %v1413 = vsel %vm1411, %v1406, %v1412
    %vm1414 = vcmp.eq.s32.totalorder %v1409, 2
    %v1415 = vxor.u32 %v1406, 2147483648
    %v1416 = vsel %vm1414, %v1415, %v1407
    %v1417 = vsel %vm1410, %v1413, %v1416
    %v1418 = vsel %vm1408, nan, %v1417
    %v1419 = vand.u32 2147483647, %v507
    %vm1420 = vcmp.le.f32.partialorder %v1419, 0.7853982
    %vm1421 = vcmp.lt.s32.totalorder %v507, 0
    %v1422 = vand.u32 %v507, 2139095040
    %v1423 = vshrl.u32 %v1422, 23
    %v1424 = vsub.s32 %v1423, 127
    %v1425 = vand.u32 2147483647, %v507
    %v1426 = vand.u32 %v1425, 8388607
    %v1427 = vor.u32 %v1426, 8388608
    %v1428 = vsub.s32 0, %v1427
    %v1429 = vadd.s32 %v1424, 1
    %vm1430 = vcmp.gt.s32.totalorder %v1429, 0
    %v1431 = vsel %vm1430, %v1429, 0
    %v1432 = vshrl.u32 %v1431, 5
    %v1433 = vand.u32 %v1431, 31
    %v1434 = vsub.s32 32, %v1433
    %v1435 = vshrl.u32 683565275, %v1434
    %v1436 = vshll.u32 683565275, %v1433
    %v1437 = vshrl.u32 2475754826, %v1434
    %v1438 = vor.u32 %v1436, %v1437
    %v1439 = vshll.u32 2475754826, %v1433
    %v1440 = vshrl.u32 2131351028, %v1434
    %v1441 = vor.u32 %v1439, %v1440
    %v1442 = vshll.u32 2131351028, %v1433
    %v1443 = vshrl.u32 2102212464, %v1434
    %v1444 = vor.u32 %v1442, %v1443
    %v1445 = vshll.u32 2102212464, %v1433
    %v1446 = vshrl.u32 920167782, %v1434
    %v1447 = vor.u32 %v1445, %v1446
    %v1448 = vshll.u32 920167782, %v1433
    %v1449 = vshrl.u32 1326507024, %v1434
    %v1450 = vor.u32 %v1448, %v1449
    %vm1451 = vcmp.lt.s32.totalorder %v1432, 1
    %vm1452 = vcmp.lt.s32.totalorder %v1432, 2
    %vm1453 = vcmp.lt.s32.totalorder %v1432, 3
    %vm1454 = vcmp.lt.s32.totalorder %v1432, 4
    %v1455 = vsel %vm1451, %v1435, %v1438
    %v1456 = vsel %vm1454, %v1444, 2102212464
    %v1457 = vsel %vm1453, %v1441, %v1456
    %v1458 = vsel %vm1452, %v1455, %v1457
    %v1459 = vsel %vm1451, %v1438, %v1441
    %v1460 = vsel %vm1454, %v1447, 920167782
    %v1461 = vsel %vm1453, %v1444, %v1460
    %v1462 = vsel %vm1452, %v1459, %v1461
    %v1463 = vsel %vm1451, %v1441, %v1444
    %v1464 = vsel %vm1454, %v1450, 1326507024
    %v1465 = vsel %vm1453, %v1447, %v1464
    %v1466 = vsel %vm1452, %v1463, %v1465
    %v1467 = vshll.u32 %v1427, 8
    %v1468 = vmul.u32.u64.compose %v1467, %v1466
    %v1469 = vextract.low.u32 %v1468
    %v1470 = vextract.high.u32 %v1468
    %v1471 = vmul.u32.u64.compose %v1467, %v1462
    %v1472 = vextract.low.u32 %v1471
    %v1473 = vextract.high.u32 %v1471
    %v1474 = vmul.u32 %v1467, %v1458
    %v1475 = vadd.s32 %v1470, %v1472
    %vm1476 = vc.u32 %v1470, %v1472
    %v1477 = vadd.s32 %v1473, 1
    %v1478 = vsel %vm1476, %v1477, %v1473
    %v1479 = vadd.s32 %v1474, %v1478
    %v1480 = vadd.s32 %v1479, 536870912
    %v1481 = vshrl.u32 %v1480, 30
    %v1482 = vshll.u32 %v1481, 30
    %v1483 = vsub.s32 %v1479, %v1482
    %vm1484 = vcmp.lt.s32.totalorder %v1483, 0
    %v1485 = vsub.s32 0, %v1483
    %v1486 = vsel %vm1484, %v1485, %v1483
    %v1487 = vclz %v1486
    %v1488 = vsub.s32 %v1487, 2
    %vm1489 = vcmp.gt.s32.totalorder 0, %v1488
    %v1490 = vsel %vm1489, 0, %v1488
    %v1491 = vsub.s32 32, %v1490
    %v1492 = vshll.u32 %v1483, %v1490
    %v1493 = vshrl.u32 %v1475, %v1491
    %v1494 = vor.u32 %v1492, %v1493
    %v1495 = vsub.s32 4294967266, %v1490
    %v1496 = vadd.s32 %v1495, 127
    %v1497 = vshll.u32 %v1496, 23
    %v1498 = vor.u32 4788187, %v1497
    %v1499 = vand.u32 2147483647, %v1498
    %v1501 = vcvt.s32.f32 %v1494
    %v1502 = vmul.f32 %v1501, %v1499
    %v1503 = vxor.u32 %v1502, 2147483648
    %v1504 = vsel %vm1421, %v1503, %v1502
    %v1505 = vsub.s32 4, %v1481
    %v1506 = vsel %vm1421, %v1505, %v1481
    %v1507 = vsel %vm1420, %v507, %v1504
    %v1508 = vsel %vm1420, 0, %v1506
    %v1509 = vcosq.f32.pop %v1507
    %v1510 = vsinq.f32.pop %v1507
    %vm1511 = vweird.f32 %v507
    %v1512 = vand.u32 %v1508, 3
    %vm1513 = vcmp.lt.s32.totalorder %v1512, 2
    %vm1514 = vcmp.eq.s32.totalorder %v1512, 0
    %v1515 = vxor.u32 %v1510, 2147483648
    %v1516 = vsel %vm1514, %v1509, %v1515
    %vm1517 = vcmp.eq.s32.totalorder %v1512, 2
    %v1518 = vxor.u32 %v1509, 2147483648
    %v1519 = vsel %vm1517, %v1518, %v1510
    %v1520 = vsel %vm1513, %v1516, %v1519
    %v1521 = vsel %vm1511, nan, %v1520
    %v1522 = vand.u32 2147483647, %v508
    %vm1523 = vcmp.le.f32.partialorder %v1522, 0.7853982
    %vm1524 = vcmp.lt.s32.totalorder %v508, 0
    %v1525 = vand.u32 %v508, 2139095040
    %v1526 = vshrl.u32 %v1525, 23
    %v1527 = vsub.s32 %v1526, 127
    %v1528 = vand.u32 2147483647, %v508
    %v1529 = vand.u32 %v1528, 8388607
    %v1530 = vor.u32 %v1529, 8388608
    %v1531 = vsub.s32 0, %v1530
    %v1532 = vadd.s32 %v1527, 1
    %vm1533 = vcmp.gt.s32.totalorder %v1532, 0
    %v1534 = vsel %vm1533, %v1532, 0
    %v1535 = vshrl.u32 %v1534, 5
    %v1536 = vand.u32 %v1534, 31
    %v1537 = vsub.s32 32, %v1536
    %v1538 = vshrl.u32 683565275, %v1537
    %v1539 = vshll.u32 683565275, %v1536
    %v1540 = vshrl.u32 2475754826, %v1537
    %v1541 = vor.u32 %v1539, %v1540
    %v1542 = vshll.u32 2475754826, %v1536
    %v1543 = vshrl.u32 2131351028, %v1537
    %v1544 = vor.u32 %v1542, %v1543
    %v1545 = vshll.u32 2131351028, %v1536
    %v1546 = vshrl.u32 2102212464, %v1537
    %v1547 = vor.u32 %v1545, %v1546
    %v1548 = vshll.u32 2102212464, %v1536
    %v1549 = vshrl.u32 920167782, %v1537
    %v1550 = vor.u32 %v1548, %v1549
    %v1551 = vshll.u32 920167782, %v1536
    %v1552 = vshrl.u32 1326507024, %v1537
    %v1553 = vor.u32 %v1551, %v1552
    %vm1554 = vcmp.lt.s32.totalorder %v1535, 1
    %vm1555 = vcmp.lt.s32.totalorder %v1535, 2
    %vm1556 = vcmp.lt.s32.totalorder %v1535, 3
    %vm1557 = vcmp.lt.s32.totalorder %v1535, 4
    %v1558 = vsel %vm1554, %v1538, %v1541
    %v1559 = vsel %vm1557, %v1547, 2102212464
    %v1560 = vsel %vm1556, %v1544, %v1559
    %v1561 = vsel %vm1555, %v1558, %v1560
    %v1562 = vsel %vm1554, %v1541, %v1544
    %v1563 = vsel %vm1557, %v1550, 920167782
    %v1564 = vsel %vm1556, %v1547, %v1563
    %v1565 = vsel %vm1555, %v1562, %v1564
    %v1566 = vsel %vm1554, %v1544, %v1547
    %v1567 = vsel %vm1557, %v1553, 1326507024
    %v1568 = vsel %vm1556, %v1550, %v1567
    %v1569 = vsel %vm1555, %v1566, %v1568
    %v1570 = vshll.u32 %v1530, 8
    %v1571 = vmul.u32.u64.compose %v1570, %v1569
    %v1572 = vextract.low.u32 %v1571
    %v1573 = vextract.high.u32 %v1571
    %v1574 = vmul.u32.u64.compose %v1570, %v1565
    %v1575 = vextract.low.u32 %v1574
    %v1576 = vextract.high.u32 %v1574
    %v1577 = vmul.u32 %v1570, %v1561
    %v1578 = vadd.s32 %v1573, %v1575
    %vm1579 = vc.u32 %v1573, %v1575
    %v1580 = vadd.s32 %v1576, 1
    %v1581 = vsel %vm1579, %v1580, %v1576
    %v1582 = vadd.s32 %v1577, %v1581
    %v1583 = vadd.s32 %v1582, 536870912
    %v1584 = vshrl.u32 %v1583, 30
    %v1585 = vshll.u32 %v1584, 30
    %v1586 = vsub.s32 %v1582, %v1585
    %vm1587 = vcmp.lt.s32.totalorder %v1586, 0
    %v1588 = vsub.s32 0, %v1586
    %v1589 = vsel %vm1587, %v1588, %v1586
    %v1590 = vclz %v1589
    %v1591 = vsub.s32 %v1590, 2
    %vm1592 = vcmp.gt.s32.totalorder 0, %v1591
    %v1593 = vsel %vm1592, 0, %v1591
    %v1594 = vsub.s32 32, %v1593
    %v1595 = vshll.u32 %v1586, %v1593
    %v1596 = vshrl.u32 %v1578, %v1594
    %v1597 = vor.u32 %v1595, %v1596
    %v1598 = vsub.s32 4294967266, %v1593
    %v1599 = vadd.s32 %v1598, 127
    %v1600 = vshll.u32 %v1599, 23
    %v1601 = vor.u32 4788187, %v1600
    %v1602 = vand.u32 2147483647, %v1601
    %v1604 = vcvt.s32.f32 %v1597
    %v1605 = vmul.f32 %v1604, %v1602
    %v1606 = vxor.u32 %v1605, 2147483648
    %v1607 = vsel %vm1524, %v1606, %v1605
    %v1608 = vsub.s32 4, %v1584
    %v1609 = vsel %vm1524, %v1608, %v1584
    %v1610 = vsel %vm1523, %v508, %v1607
    %v1611 = vsel %vm1523, 0, %v1609
    %v1612 = vcosq.f32.pop %v1610
    %v1613 = vsinq.f32.pop %v1610
    %vm1614 = vweird.f32 %v508
    %v1615 = vand.u32 %v1611, 3
    %vm1616 = vcmp.lt.s32.totalorder %v1615, 2
    %vm1617 = vcmp.eq.s32.totalorder %v1615, 0
    %v1618 = vxor.u32 %v1613, 2147483648
    %v1619 = vsel %vm1617, %v1612, %v1618
    %vm1620 = vcmp.eq.s32.totalorder %v1615, 2
    %v1621 = vxor.u32 %v1612, 2147483648
    %v1622 = vsel %vm1620, %v1621, %v1613
    %v1623 = vsel %vm1616, %v1619, %v1622
    %v1624 = vsel %vm1614, nan, %v1623
    %v1625 = vand.u32 2147483647, %v781
    %vm1626 = vcmp.le.f32.partialorder %v1625, 0.7853982
    %vm1627 = vcmp.lt.s32.totalorder %v781, 0
    %v1628 = vand.u32 %v781, 2139095040
    %v1629 = vshrl.u32 %v1628, 23
    %v1630 = vsub.s32 %v1629, 127
    %v1631 = vand.u32 2147483647, %v781
    %v1632 = vand.u32 %v1631, 8388607
    %v1633 = vor.u32 %v1632, 8388608
    %v1634 = vsub.s32 0, %v1633
    %v1635 = vadd.s32 %v1630, 1
    %vm1636 = vcmp.gt.s32.totalorder %v1635, 0
    %v1637 = vsel %vm1636, %v1635, 0
    %v1638 = vshrl.u32 %v1637, 5
    %v1639 = vand.u32 %v1637, 31
    %v1640 = vsub.s32 32, %v1639
    %v1641 = vshrl.u32 683565275, %v1640
    %v1642 = vshll.u32 683565275, %v1639
    %v1643 = vshrl.u32 2475754826, %v1640
    %v1644 = vor.u32 %v1642, %v1643
    %v1645 = vshll.u32 2475754826, %v1639
    %v1646 = vshrl.u32 2131351028, %v1640
    %v1647 = vor.u32 %v1645, %v1646
    %v1648 = vshll.u32 2131351028, %v1639
    %v1649 = vshrl.u32 2102212464, %v1640
    %v1650 = vor.u32 %v1648, %v1649
    %v1651 = vshll.u32 2102212464, %v1639
    %v1652 = vshrl.u32 920167782, %v1640
    %v1653 = vor.u32 %v1651, %v1652
    %v1654 = vshll.u32 920167782, %v1639
    %v1655 = vshrl.u32 1326507024, %v1640
    %v1656 = vor.u32 %v1654, %v1655
    %vm1657 = vcmp.lt.s32.totalorder %v1638, 1
    %vm1658 = vcmp.lt.s32.totalorder %v1638, 2
    %vm1659 = vcmp.lt.s32.totalorder %v1638, 3
    %vm1660 = vcmp.lt.s32.totalorder %v1638, 4
    %v1661 = vsel %vm1657, %v1641, %v1644
    %v1662 = vsel %vm1660, %v1650, 2102212464
    %v1663 = vsel %vm1659, %v1647, %v1662
    %v1664 = vsel %vm1658, %v1661, %v1663
    %v1665 = vsel %vm1657, %v1644, %v1647
    %v1666 = vsel %vm1660, %v1653, 920167782
    %v1667 = vsel %vm1659, %v1650, %v1666
    %v1668 = vsel %vm1658, %v1665, %v1667
    %v1669 = vsel %vm1657, %v1647, %v1650
    %v1670 = vsel %vm1660, %v1656, 1326507024
    %v1671 = vsel %vm1659, %v1653, %v1670
    %v1672 = vsel %vm1658, %v1669, %v1671
    %v1673 = vshll.u32 %v1633, 8
    %v1674 = vmul.u32.u64.compose %v1673, %v1672
    %v1675 = vextract.low.u32 %v1674
    %v1676 = vextract.high.u32 %v1674
    %v1677 = vmul.u32.u64.compose %v1673, %v1668
    %v1678 = vextract.low.u32 %v1677
    %v1679 = vextract.high.u32 %v1677
    %v1680 = vmul.u32 %v1673, %v1664
    %v1681 = vadd.s32 %v1676, %v1678
    %vm1682 = vc.u32 %v1676, %v1678
    %v1683 = vadd.s32 %v1679, 1
    %v1684 = vsel %vm1682, %v1683, %v1679
    %v1685 = vadd.s32 %v1680, %v1684
    %v1686 = vadd.s32 %v1685, 536870912
    %v1687 = vshrl.u32 %v1686, 30
    %v1688 = vshll.u32 %v1687, 30
    %v1689 = vsub.s32 %v1685, %v1688
    %vm1690 = vcmp.lt.s32.totalorder %v1689, 0
    %v1691 = vsub.s32 0, %v1689
    %v1692 = vsel %vm1690, %v1691, %v1689
    %v1693 = vclz %v1692
    %v1694 = vsub.s32 %v1693, 2
    %vm1695 = vcmp.gt.s32.totalorder 0, %v1694
    %v1696 = vsel %vm1695, 0, %v1694
    %v1697 = vsub.s32 32, %v1696
    %v1698 = vshll.u32 %v1689, %v1696
    %v1699 = vshrl.u32 %v1681, %v1697
    %v1700 = vor.u32 %v1698, %v1699
    %v1701 = vsub.s32 4294967266, %v1696
    %v1702 = vadd.s32 %v1701, 127
    %v1703 = vshll.u32 %v1702, 23
    %v1704 = vor.u32 4788187, %v1703
    %v1705 = vand.u32 2147483647, %v1704
    %v1707 = vcvt.s32.f32 %v1700
    %v1708 = vmul.f32 %v1707, %v1705
    %v1709 = vxor.u32 %v1708, 2147483648
    %v1710 = vsel %vm1627, %v1709, %v1708
    %v1711 = vsub.s32 4, %v1687
    %v1712 = vsel %vm1627, %v1711, %v1687
    %v1713 = vsel %vm1626, %v781, %v1710
    %v1714 = vsel %vm1626, 0, %v1712
    %v1715 = vcosq.f32.pop %v1713
    %v1716 = vsinq.f32.pop %v1713
    %vm1717 = vweird.f32 %v781
    %v1718 = vadd.s32 %v1714, 3
    %v1719 = vand.u32 %v1718, 3
    %vm1720 = vcmp.lt.s32.totalorder %v1719, 2
    %vm1721 = vcmp.eq.s32.totalorder %v1719, 0
    %v1722 = vxor.u32 %v1716, 2147483648
    %v1723 = vsel %vm1721, %v1715, %v1722
    %vm1724 = vcmp.eq.s32.totalorder %v1719, 2
    %v1725 = vxor.u32 %v1715, 2147483648
    %v1726 = vsel %vm1724, %v1725, %v1716
    %v1727 = vsel %vm1720, %v1723, %v1726
    %v1728 = vsel %vm1717, nan, %v1727
    %v1729 = vand.u32 2147483647, %v782
    %vm1730 = vcmp.le.f32.partialorder %v1729, 0.7853982
    %vm1731 = vcmp.lt.s32.totalorder %v782, 0
    %v1732 = vand.u32 %v782, 2139095040
    %v1733 = vshrl.u32 %v1732, 23
    %v1734 = vsub.s32 %v1733, 127
    %v1735 = vand.u32 2147483647, %v782
    %v1736 = vand.u32 %v1735, 8388607
    %v1737 = vor.u32 %v1736, 8388608
    %v1738 = vsub.s32 0, %v1737
    %v1739 = vadd.s32 %v1734, 1
    %vm1740 = vcmp.gt.s32.totalorder %v1739, 0
    %v1741 = vsel %vm1740, %v1739, 0
    %v1742 = vshrl.u32 %v1741, 5
    %v1743 = vand.u32 %v1741, 31
    %v1744 = vsub.s32 32, %v1743
    %v1745 = vshrl.u32 683565275, %v1744
    %v1746 = vshll.u32 683565275, %v1743
    %v1747 = vshrl.u32 2475754826, %v1744
    %v1748 = vor.u32 %v1746, %v1747
    %v1749 = vshll.u32 2475754826, %v1743
    %v1750 = vshrl.u32 2131351028, %v1744
    %v1751 = vor.u32 %v1749, %v1750
    %v1752 = vshll.u32 2131351028, %v1743
    %v1753 = vshrl.u32 2102212464, %v1744
    %v1754 = vor.u32 %v1752, %v1753
    %v1755 = vshll.u32 2102212464, %v1743
    %v1756 = vshrl.u32 920167782, %v1744
    %v1757 = vor.u32 %v1755, %v1756
    %v1758 = vshll.u32 920167782, %v1743
    %v1759 = vshrl.u32 1326507024, %v1744
    %v1760 = vor.u32 %v1758, %v1759
    %vm1761 = vcmp.lt.s32.totalorder %v1742, 1
    %vm1762 = vcmp.lt.s32.totalorder %v1742, 2
    %vm1763 = vcmp.lt.s32.totalorder %v1742, 3
    %vm1764 = vcmp.lt.s32.totalorder %v1742, 4
    %v1765 = vsel %vm1761, %v1745, %v1748
    %v1766 = vsel %vm1764, %v1754, 2102212464
    %v1767 = vsel %vm1763, %v1751, %v1766
    %v1768 = vsel %vm1762, %v1765, %v1767
    %v1769 = vsel %vm1761, %v1748, %v1751
    %v1770 = vsel %vm1764, %v1757, 920167782
    %v1771 = vsel %vm1763, %v1754, %v1770
    %v1772 = vsel %vm1762, %v1769, %v1771
    %v1773 = vsel %vm1761, %v1751, %v1754
    %v1774 = vsel %vm1764, %v1760, 1326507024
    %v1775 = vsel %vm1763, %v1757, %v1774
    %v1776 = vsel %vm1762, %v1773, %v1775
    %v1777 = vshll.u32 %v1737, 8
    %v1778 = vmul.u32.u64.compose %v1777, %v1776
    %v1779 = vextract.low.u32 %v1778
    %v1780 = vextract.high.u32 %v1778
    %v1781 = vmul.u32.u64.compose %v1777, %v1772
    %v1782 = vextract.low.u32 %v1781
    %v1783 = vextract.high.u32 %v1781
    %v1784 = vmul.u32 %v1777, %v1768
    %v1785 = vadd.s32 %v1780, %v1782
    %vm1786 = vc.u32 %v1780, %v1782
    %v1787 = vadd.s32 %v1783, 1
    %v1788 = vsel %vm1786, %v1787, %v1783
    %v1789 = vadd.s32 %v1784, %v1788
    %v1790 = vadd.s32 %v1789, 536870912
    %v1791 = vshrl.u32 %v1790, 30
    %v1792 = vshll.u32 %v1791, 30
    %v1793 = vsub.s32 %v1789, %v1792
    %vm1794 = vcmp.lt.s32.totalorder %v1793, 0
    %v1795 = vsub.s32 0, %v1793
    %v1796 = vsel %vm1794, %v1795, %v1793
    %v1797 = vclz %v1796
    %v1798 = vsub.s32 %v1797, 2
    %vm1799 = vcmp.gt.s32.totalorder 0, %v1798
    %v1800 = vsel %vm1799, 0, %v1798
    %v1801 = vsub.s32 32, %v1800
    %v1802 = vshll.u32 %v1793, %v1800
    %v1803 = vshrl.u32 %v1785, %v1801
    %v1804 = vor.u32 %v1802, %v1803
    %v1805 = vsub.s32 4294967266, %v1800
    %v1806 = vadd.s32 %v1805, 127
    %v1807 = vshll.u32 %v1806, 23
    %v1808 = vor.u32 4788187, %v1807
    %v1809 = vand.u32 2147483647, %v1808
    %v1811 = vcvt.s32.f32 %v1804
    %v1812 = vmul.f32 %v1811, %v1809
    %v1813 = vxor.u32 %v1812, 2147483648
    %v1814 = vsel %vm1731, %v1813, %v1812
    %v1815 = vsub.s32 4, %v1791
    %v1816 = vsel %vm1731, %v1815, %v1791
    %v1817 = vsel %vm1730, %v782, %v1814
    %v1818 = vsel %vm1730, 0, %v1816
    %v1819 = vcosq.f32.pop %v1817
    %v1820 = vsinq.f32.pop %v1817
    %vm1821 = vweird.f32 %v782
    %v1822 = vadd.s32 %v1818, 3
    %v1823 = vand.u32 %v1822, 3
    %vm1824 = vcmp.lt.s32.totalorder %v1823, 2
    %vm1825 = vcmp.eq.s32.totalorder %v1823, 0
    %v1826 = vxor.u32 %v1820, 2147483648
    %v1827 = vsel %vm1825, %v1819, %v1826
    %vm1828 = vcmp.eq.s32.totalorder %v1823, 2
    %v1829 = vxor.u32 %v1819, 2147483648
    %v1830 = vsel %vm1828, %v1829, %v1820
    %v1831 = vsel %vm1824, %v1827, %v1830
    %v1832 = vsel %vm1821, nan, %v1831
    %v1833 = vand.u32 2147483647, %v783
    %vm1834 = vcmp.le.f32.partialorder %v1833, 0.7853982
    %vm1835 = vcmp.lt.s32.totalorder %v783, 0
    %v1836 = vand.u32 %v783, 2139095040
    %v1837 = vshrl.u32 %v1836, 23
    %v1838 = vsub.s32 %v1837, 127
    %v1839 = vand.u32 2147483647, %v783
    %v1840 = vand.u32 %v1839, 8388607
    %v1841 = vor.u32 %v1840, 8388608
    %v1842 = vsub.s32 0, %v1841
    %v1843 = vadd.s32 %v1838, 1
    %vm1844 = vcmp.gt.s32.totalorder %v1843, 0
    %v1845 = vsel %vm1844, %v1843, 0
    %v1846 = vshrl.u32 %v1845, 5
    %v1847 = vand.u32 %v1845, 31
    %v1848 = vsub.s32 32, %v1847
    %v1849 = vshrl.u32 683565275, %v1848
    %v1850 = vshll.u32 683565275, %v1847
    %v1851 = vshrl.u32 2475754826, %v1848
    %v1852 = vor.u32 %v1850, %v1851
    %v1853 = vshll.u32 2475754826, %v1847
    %v1854 = vshrl.u32 2131351028, %v1848
    %v1855 = vor.u32 %v1853, %v1854
    %v1856 = vshll.u32 2131351028, %v1847
    %v1857 = vshrl.u32 2102212464, %v1848
    %v1858 = vor.u32 %v1856, %v1857
    %v1859 = vshll.u32 2102212464, %v1847
    %v1860 = vshrl.u32 920167782, %v1848
    %v1861 = vor.u32 %v1859, %v1860
    %v1862 = vshll.u32 920167782, %v1847
    %v1863 = vshrl.u32 1326507024, %v1848
    %v1864 = vor.u32 %v1862, %v1863
    %vm1865 = vcmp.lt.s32.totalorder %v1846, 1
    %vm1866 = vcmp.lt.s32.totalorder %v1846, 2
    %vm1867 = vcmp.lt.s32.totalorder %v1846, 3
    %vm1868 = vcmp.lt.s32.totalorder %v1846, 4
    %v1869 = vsel %vm1865, %v1849, %v1852
    %v1870 = vsel %vm1868, %v1858, 2102212464
    %v1871 = vsel %vm1867, %v1855, %v1870
    %v1872 = vsel %vm1866, %v1869, %v1871
    %v1873 = vsel %vm1865, %v1852, %v1855
    %v1874 = vsel %vm1868, %v1861, 920167782
    %v1875 = vsel %vm1867, %v1858, %v1874
    %v1876 = vsel %vm1866, %v1873, %v1875
    %v1877 = vsel %vm1865, %v1855, %v1858
    %v1878 = vsel %vm1868, %v1864, 1326507024
    %v1879 = vsel %vm1867, %v1861, %v1878
    %v1880 = vsel %vm1866, %v1877, %v1879
    %v1881 = vshll.u32 %v1841, 8
    %v1882 = vmul.u32.u64.compose %v1881, %v1880
    %v1883 = vextract.low.u32 %v1882
    %v1884 = vextract.high.u32 %v1882
    %v1885 = vmul.u32.u64.compose %v1881, %v1876
    %v1886 = vextract.low.u32 %v1885
    %v1887 = vextract.high.u32 %v1885
    %v1888 = vmul.u32 %v1881, %v1872
    %v1889 = vadd.s32 %v1884, %v1886
    %vm1890 = vc.u32 %v1884, %v1886
    %v1891 = vadd.s32 %v1887, 1
    %v1892 = vsel %vm1890, %v1891, %v1887
    %v1893 = vadd.s32 %v1888, %v1892
    %v1894 = vadd.s32 %v1893, 536870912
    %v1895 = vshrl.u32 %v1894, 30
    %v1896 = vshll.u32 %v1895, 30
    %v1897 = vsub.s32 %v1893, %v1896
    %vm1898 = vcmp.lt.s32.totalorder %v1897, 0
    %v1899 = vsub.s32 0, %v1897
    %v1900 = vsel %vm1898, %v1899, %v1897
    %v1901 = vclz %v1900
    %v1902 = vsub.s32 %v1901, 2
    %vm1903 = vcmp.gt.s32.totalorder 0, %v1902
    %v1904 = vsel %vm1903, 0, %v1902
    %v1905 = vsub.s32 32, %v1904
    %v1906 = vshll.u32 %v1897, %v1904
    %v1907 = vshrl.u32 %v1889, %v1905
    %v1908 = vor.u32 %v1906, %v1907
    %v1909 = vsub.s32 4294967266, %v1904
    %v1910 = vadd.s32 %v1909, 127
    %v1911 = vshll.u32 %v1910, 23
    %v1912 = vor.u32 4788187, %v1911
    %v1913 = vand.u32 2147483647, %v1912
    %v1915 = vcvt.s32.f32 %v1908
    %v1916 = vmul.f32 %v1915, %v1913
    %v1917 = vxor.u32 %v1916, 2147483648
    %v1918 = vsel %vm1835, %v1917, %v1916
    %v1919 = vsub.s32 4, %v1895
    %v1920 = vsel %vm1835, %v1919, %v1895
    %v1921 = vsel %vm1834, %v783, %v1918
    %v1922 = vsel %vm1834, 0, %v1920
    %v1923 = vcosq.f32.pop %v1921
    %v1924 = vsinq.f32.pop %v1921
    %vm1925 = vweird.f32 %v783
    %v1926 = vadd.s32 %v1922, 3
    %v1927 = vand.u32 %v1926, 3
    %vm1928 = vcmp.lt.s32.totalorder %v1927, 2
    %vm1929 = vcmp.eq.s32.totalorder %v1927, 0
    %v1930 = vxor.u32 %v1924, 2147483648
    %v1931 = vsel %vm1929, %v1923, %v1930
    %vm1932 = vcmp.eq.s32.totalorder %v1927, 2
    %v1933 = vxor.u32 %v1923, 2147483648
    %v1934 = vsel %vm1932, %v1933, %v1924
    %v1935 = vsel %vm1928, %v1931, %v1934
    %v1936 = vsel %vm1925, nan, %v1935
    %v1937 = vand.u32 2147483647, %v784
    %vm1938 = vcmp.le.f32.partialorder %v1937, 0.7853982
    %vm1939 = vcmp.lt.s32.totalorder %v784, 0
    %v1940 = vand.u32 %v784, 2139095040
    %v1941 = vshrl.u32 %v1940, 23
    %v1942 = vsub.s32 %v1941, 127
    %v1943 = vand.u32 2147483647, %v784
    %v1944 = vand.u32 %v1943, 8388607
    %v1945 = vor.u32 %v1944, 8388608
    %v1946 = vsub.s32 0, %v1945
    %v1947 = vadd.s32 %v1942, 1
    %vm1948 = vcmp.gt.s32.totalorder %v1947, 0
    %v1949 = vsel %vm1948, %v1947, 0
    %v1950 = vshrl.u32 %v1949, 5
    %v1951 = vand.u32 %v1949, 31
    %v1952 = vsub.s32 32, %v1951
    %v1953 = vshrl.u32 683565275, %v1952
    %v1954 = vshll.u32 683565275, %v1951
    %v1955 = vshrl.u32 2475754826, %v1952
    %v1956 = vor.u32 %v1954, %v1955
    %v1957 = vshll.u32 2475754826, %v1951
    %v1958 = vshrl.u32 2131351028, %v1952
    %v1959 = vor.u32 %v1957, %v1958
    %v1960 = vshll.u32 2131351028, %v1951
    %v1961 = vshrl.u32 2102212464, %v1952
    %v1962 = vor.u32 %v1960, %v1961
    %v1963 = vshll.u32 2102212464, %v1951
    %v1964 = vshrl.u32 920167782, %v1952
    %v1965 = vor.u32 %v1963, %v1964
    %v1966 = vshll.u32 920167782, %v1951
    %v1967 = vshrl.u32 1326507024, %v1952
    %v1968 = vor.u32 %v1966, %v1967
    %vm1969 = vcmp.lt.s32.totalorder %v1950, 1
    %vm1970 = vcmp.lt.s32.totalorder %v1950, 2
    %vm1971 = vcmp.lt.s32.totalorder %v1950, 3
    %vm1972 = vcmp.lt.s32.totalorder %v1950, 4
    %v1973 = vsel %vm1969, %v1953, %v1956
    %v1974 = vsel %vm1972, %v1962, 2102212464
    %v1975 = vsel %vm1971, %v1959, %v1974
    %v1976 = vsel %vm1970, %v1973, %v1975
    %v1977 = vsel %vm1969, %v1956, %v1959
    %v1978 = vsel %vm1972, %v1965, 920167782
    %v1979 = vsel %vm1971, %v1962, %v1978
    %v1980 = vsel %vm1970, %v1977, %v1979
    %v1981 = vsel %vm1969, %v1959, %v1962
    %v1982 = vsel %vm1972, %v1968, 1326507024
    %v1983 = vsel %vm1971, %v1965, %v1982
    %v1984 = vsel %vm1970, %v1981, %v1983
    %v1985 = vshll.u32 %v1945, 8
    %v1986 = vmul.u32.u64.compose %v1985, %v1984
    %v1987 = vextract.low.u32 %v1986
    %v1988 = vextract.high.u32 %v1986
    %v1989 = vmul.u32.u64.compose %v1985, %v1980
    %v1990 = vextract.low.u32 %v1989
    %v1991 = vextract.high.u32 %v1989
    %v1992 = vmul.u32 %v1985, %v1976
    %v1993 = vadd.s32 %v1988, %v1990
    %vm1994 = vc.u32 %v1988, %v1990
    %v1995 = vadd.s32 %v1991, 1
    %v1996 = vsel %vm1994, %v1995, %v1991
    %v1997 = vadd.s32 %v1992, %v1996
    %v1998 = vadd.s32 %v1997, 536870912
    %v1999 = vshrl.u32 %v1998, 30
    %v2000 = vshll.u32 %v1999, 30
    %v2001 = vsub.s32 %v1997, %v2000
    %vm2002 = vcmp.lt.s32.totalorder %v2001, 0
    %v2003 = vsub.s32 0, %v2001
    %v2004 = vsel %vm2002, %v2003, %v2001
    %v2005 = vclz %v2004
    %v2006 = vsub.s32 %v2005, 2
    %vm2007 = vcmp.gt.s32.totalorder 0, %v2006
    %v2008 = vsel %vm2007, 0, %v2006
    %v2009 = vsub.s32 32, %v2008
    %v2010 = vshll.u32 %v2001, %v2008
    %v2011 = vshrl.u32 %v1993, %v2009
    %v2012 = vor.u32 %v2010, %v2011
    %v2013 = vsub.s32 4294967266, %v2008
    %v2014 = vadd.s32 %v2013, 127
    %v2015 = vshll.u32 %v2014, 23
    %v2016 = vor.u32 4788187, %v2015
    %v2017 = vand.u32 2147483647, %v2016
    %v2019 = vcvt.s32.f32 %v2012
    %v2020 = vmul.f32 %v2019, %v2017
    %v2021 = vxor.u32 %v2020, 2147483648
    %v2022 = vsel %vm1939, %v2021, %v2020
    %v2023 = vsub.s32 4, %v1999
    %v2024 = vsel %vm1939, %v2023, %v1999
    %v2025 = vsel %vm1938, %v784, %v2022
    %v2026 = vsel %vm1938, 0, %v2024
    %v2027 = vcosq.f32.pop %v2025
    %v2028 = vsinq.f32.pop %v2025
    %vm2029 = vweird.f32 %v784
    %v2030 = vadd.s32 %v2026, 3
    %v2031 = vand.u32 %v2030, 3
    %vm2032 = vcmp.lt.s32.totalorder %v2031, 2
    %vm2033 = vcmp.eq.s32.totalorder %v2031, 0
    %v2034 = vxor.u32 %v2028, 2147483648
    %v2035 = vsel %vm2033, %v2027, %v2034
    %vm2036 = vcmp.eq.s32.totalorder %v2031, 2
    %v2037 = vxor.u32 %v2027, 2147483648
    %v2038 = vsel %vm2036, %v2037, %v2028
    %v2039 = vsel %vm2032, %v2035, %v2038
    %v2040 = vsel %vm2029, nan, %v2039
    %v2041 = vand.u32 2147483647, %v781
    %vm2042 = vcmp.le.f32.partialorder %v2041, 0.7853982
    %vm2043 = vcmp.lt.s32.totalorder %v781, 0
    %v2044 = vand.u32 %v781, 2139095040
    %v2045 = vshrl.u32 %v2044, 23
    %v2046 = vsub.s32 %v2045, 127
    %v2047 = vand.u32 2147483647, %v781
    %v2048 = vand.u32 %v2047, 8388607
    %v2049 = vor.u32 %v2048, 8388608
    %v2050 = vsub.s32 0, %v2049
    %v2051 = vadd.s32 %v2046, 1
    %vm2052 = vcmp.gt.s32.totalorder %v2051, 0
    %v2053 = vsel %vm2052, %v2051, 0
    %v2054 = vshrl.u32 %v2053, 5
    %v2055 = vand.u32 %v2053, 31
    %v2056 = vsub.s32 32, %v2055
    %v2057 = vshrl.u32 683565275, %v2056
    %v2058 = vshll.u32 683565275, %v2055
    %v2059 = vshrl.u32 2475754826, %v2056
    %v2060 = vor.u32 %v2058, %v2059
    %v2061 = vshll.u32 2475754826, %v2055
    %v2062 = vshrl.u32 2131351028, %v2056
    %v2063 = vor.u32 %v2061, %v2062
    %v2064 = vshll.u32 2131351028, %v2055
    %v2065 = vshrl.u32 2102212464, %v2056
    %v2066 = vor.u32 %v2064, %v2065
    %v2067 = vshll.u32 2102212464, %v2055
    %v2068 = vshrl.u32 920167782, %v2056
    %v2069 = vor.u32 %v2067, %v2068
    %v2070 = vshll.u32 920167782, %v2055
    %v2071 = vshrl.u32 1326507024, %v2056
    %v2072 = vor.u32 %v2070, %v2071
    %vm2073 = vcmp.lt.s32.totalorder %v2054, 1
    %vm2074 = vcmp.lt.s32.totalorder %v2054, 2
    %vm2075 = vcmp.lt.s32.totalorder %v2054, 3
    %vm2076 = vcmp.lt.s32.totalorder %v2054, 4
    %v2077 = vsel %vm2073, %v2057, %v2060
    %v2078 = vsel %vm2076, %v2066, 2102212464
    %v2079 = vsel %vm2075, %v2063, %v2078
    %v2080 = vsel %vm2074, %v2077, %v2079
    %v2081 = vsel %vm2073, %v2060, %v2063
    %v2082 = vsel %vm2076, %v2069, 920167782
    %v2083 = vsel %vm2075, %v2066, %v2082
    %v2084 = vsel %vm2074, %v2081, %v2083
    %v2085 = vsel %vm2073, %v2063, %v2066
    %v2086 = vsel %vm2076, %v2072, 1326507024
    %v2087 = vsel %vm2075, %v2069, %v2086
    %v2088 = vsel %vm2074, %v2085, %v2087
    %v2089 = vshll.u32 %v2049, 8
    %v2090 = vmul.u32.u64.compose %v2089, %v2088
    %v2091 = vextract.low.u32 %v2090
    %v2092 = vextract.high.u32 %v2090
    %v2093 = vmul.u32.u64.compose %v2089, %v2084
    %v2094 = vextract.low.u32 %v2093
    %v2095 = vextract.high.u32 %v2093
    %v2096 = vmul.u32 %v2089, %v2080
    %v2097 = vadd.s32 %v2092, %v2094
    %vm2098 = vc.u32 %v2092, %v2094
    %v2099 = vadd.s32 %v2095, 1
    %v2100 = vsel %vm2098, %v2099, %v2095
    %v2101 = vadd.s32 %v2096, %v2100
    %v2102 = vadd.s32 %v2101, 536870912
    %v2103 = vshrl.u32 %v2102, 30
    %v2104 = vshll.u32 %v2103, 30
    %v2105 = vsub.s32 %v2101, %v2104
    %vm2106 = vcmp.lt.s32.totalorder %v2105, 0
    %v2107 = vsub.s32 0, %v2105
    %v2108 = vsel %vm2106, %v2107, %v2105
    %v2109 = vclz %v2108
    %v2110 = vsub.s32 %v2109, 2
    %vm2111 = vcmp.gt.s32.totalorder 0, %v2110
    %v2112 = vsel %vm2111, 0, %v2110
    %v2113 = vsub.s32 32, %v2112
    %v2114 = vshll.u32 %v2105, %v2112
    %v2115 = vshrl.u32 %v2097, %v2113
    %v2116 = vor.u32 %v2114, %v2115
    %v2117 = vsub.s32 4294967266, %v2112
    %v2118 = vadd.s32 %v2117, 127
    %v2119 = vshll.u32 %v2118, 23
    %v2120 = vor.u32 4788187, %v2119
    %v2121 = vand.u32 2147483647, %v2120
    %v2123 = vcvt.s32.f32 %v2116
    %v2124 = vmul.f32 %v2123, %v2121
    %v2125 = vxor.u32 %v2124, 2147483648
    %v2126 = vsel %vm2043, %v2125, %v2124
    %v2127 = vsub.s32 4, %v2103
    %v2128 = vsel %vm2043, %v2127, %v2103
    %v2129 = vsel %vm2042, %v781, %v2126
    %v2130 = vsel %vm2042, 0, %v2128
    %v2131 = vcosq.f32.pop %v2129
    %v2132 = vsinq.f32.pop %v2129
    %vm2133 = vweird.f32 %v781
    %v2134 = vand.u32 %v2130, 3
    %vm2135 = vcmp.lt.s32.totalorder %v2134, 2
    %vm2136 = vcmp.eq.s32.totalorder %v2134, 0
    %v2137 = vxor.u32 %v2132, 2147483648
    %v2138 = vsel %vm2136, %v2131, %v2137
    %vm2139 = vcmp.eq.s32.totalorder %v2134, 2
    %v2140 = vxor.u32 %v2131, 2147483648
    %v2141 = vsel %vm2139, %v2140, %v2132
    %v2142 = vsel %vm2135, %v2138, %v2141
    %v2143 = vsel %vm2133, nan, %v2142
    %v2144 = vand.u32 2147483647, %v782
    %vm2145 = vcmp.le.f32.partialorder %v2144, 0.7853982
    %vm2146 = vcmp.lt.s32.totalorder %v782, 0
    %v2147 = vand.u32 %v782, 2139095040
    %v2148 = vshrl.u32 %v2147, 23
    %v2149 = vsub.s32 %v2148, 127
    %v2150 = vand.u32 2147483647, %v782
    %v2151 = vand.u32 %v2150, 8388607
    %v2152 = vor.u32 %v2151, 8388608
    %v2153 = vsub.s32 0, %v2152
    %v2154 = vadd.s32 %v2149, 1
    %vm2155 = vcmp.gt.s32.totalorder %v2154, 0
    %v2156 = vsel %vm2155, %v2154, 0
    %v2157 = vshrl.u32 %v2156, 5
    %v2158 = vand.u32 %v2156, 31
    %v2159 = vsub.s32 32, %v2158
    %v2160 = vshrl.u32 683565275, %v2159
    %v2161 = vshll.u32 683565275, %v2158
    %v2162 = vshrl.u32 2475754826, %v2159
    %v2163 = vor.u32 %v2161, %v2162
    %v2164 = vshll.u32 2475754826, %v2158
    %v2165 = vshrl.u32 2131351028, %v2159
    %v2166 = vor.u32 %v2164, %v2165
    %v2167 = vshll.u32 2131351028, %v2158
    %v2168 = vshrl.u32 2102212464, %v2159
    %v2169 = vor.u32 %v2167, %v2168
    %v2170 = vshll.u32 2102212464, %v2158
    %v2171 = vshrl.u32 920167782, %v2159
    %v2172 = vor.u32 %v2170, %v2171
    %v2173 = vshll.u32 920167782, %v2158
    %v2174 = vshrl.u32 1326507024, %v2159
    %v2175 = vor.u32 %v2173, %v2174
    %vm2176 = vcmp.lt.s32.totalorder %v2157, 1
    %vm2177 = vcmp.lt.s32.totalorder %v2157, 2
    %vm2178 = vcmp.lt.s32.totalorder %v2157, 3
    %vm2179 = vcmp.lt.s32.totalorder %v2157, 4
    %v2180 = vsel %vm2176, %v2160, %v2163
    %v2181 = vsel %vm2179, %v2169, 2102212464
    %v2182 = vsel %vm2178, %v2166, %v2181
    %v2183 = vsel %vm2177, %v2180, %v2182
    %v2184 = vsel %vm2176, %v2163, %v2166
    %v2185 = vsel %vm2179, %v2172, 920167782
    %v2186 = vsel %vm2178, %v2169, %v2185
    %v2187 = vsel %vm2177, %v2184, %v2186
    %v2188 = vsel %vm2176, %v2166, %v2169
    %v2189 = vsel %vm2179, %v2175, 1326507024
    %v2190 = vsel %vm2178, %v2172, %v2189
    %v2191 = vsel %vm2177, %v2188, %v2190
    %v2192 = vshll.u32 %v2152, 8
    %v2193 = vmul.u32.u64.compose %v2192, %v2191
    %v2194 = vextract.low.u32 %v2193
    %v2195 = vextract.high.u32 %v2193
    %v2196 = vmul.u32.u64.compose %v2192, %v2187
    %v2197 = vextract.low.u32 %v2196
    %v2198 = vextract.high.u32 %v2196
    %v2199 = vmul.u32 %v2192, %v2183
    %v2200 = vadd.s32 %v2195, %v2197
    %vm2201 = vc.u32 %v2195, %v2197
    %v2202 = vadd.s32 %v2198, 1
    %v2203 = vsel %vm2201, %v2202, %v2198
    %v2204 = vadd.s32 %v2199, %v2203
    %v2205 = vadd.s32 %v2204, 536870912
    %v2206 = vshrl.u32 %v2205, 30
    %v2207 = vshll.u32 %v2206, 30
    %v2208 = vsub.s32 %v2204, %v2207
    %vm2209 = vcmp.lt.s32.totalorder %v2208, 0
    %v2210 = vsub.s32 0, %v2208
    %v2211 = vsel %vm2209, %v2210, %v2208
    %v2212 = vclz %v2211
    %v2213 = vsub.s32 %v2212, 2
    %vm2214 = vcmp.gt.s32.totalorder 0, %v2213
    %v2215 = vsel %vm2214, 0, %v2213
    %v2216 = vsub.s32 32, %v2215
    %v2217 = vshll.u32 %v2208, %v2215
    %v2218 = vshrl.u32 %v2200, %v2216
    %v2219 = vor.u32 %v2217, %v2218
    %v2220 = vsub.s32 4294967266, %v2215
    %v2221 = vadd.s32 %v2220, 127
    %v2222 = vshll.u32 %v2221, 23
    %v2223 = vor.u32 4788187, %v2222
    %v2224 = vand.u32 2147483647, %v2223
    %v2226 = vcvt.s32.f32 %v2219
    %v2227 = vmul.f32 %v2226, %v2224
    %v2228 = vxor.u32 %v2227, 2147483648
    %v2229 = vsel %vm2146, %v2228, %v2227
    %v2230 = vsub.s32 4, %v2206
    %v2231 = vsel %vm2146, %v2230, %v2206
    %v2232 = vsel %vm2145, %v782, %v2229
    %v2233 = vsel %vm2145, 0, %v2231
    %v2234 = vcosq.f32.pop %v2232
    %v2235 = vsinq.f32.pop %v2232
    %vm2236 = vweird.f32 %v782
    %v2237 = vand.u32 %v2233, 3
    %vm2238 = vcmp.lt.s32.totalorder %v2237, 2
    %vm2239 = vcmp.eq.s32.totalorder %v2237, 0
    %v2240 = vxor.u32 %v2235, 2147483648
    %v2241 = vsel %vm2239, %v2234, %v2240
    %vm2242 = vcmp.eq.s32.totalorder %v2237, 2
    %v2243 = vxor.u32 %v2234, 2147483648
    %v2244 = vsel %vm2242, %v2243, %v2235
    %v2245 = vsel %vm2238, %v2241, %v2244
    %v2246 = vsel %vm2236, nan, %v2245
    %v2247 = vand.u32 2147483647, %v783
    %vm2248 = vcmp.le.f32.partialorder %v2247, 0.7853982
    %vm2249 = vcmp.lt.s32.totalorder %v783, 0
    %v2250 = vand.u32 %v783, 2139095040
    %v2251 = vshrl.u32 %v2250, 23
    %v2252 = vsub.s32 %v2251, 127
    %v2253 = vand.u32 2147483647, %v783
    %v2254 = vand.u32 %v2253, 8388607
    %v2255 = vor.u32 %v2254, 8388608
    %v2256 = vsub.s32 0, %v2255
    %v2257 = vadd.s32 %v2252, 1
    %vm2258 = vcmp.gt.s32.totalorder %v2257, 0
    %v2259 = vsel %vm2258, %v2257, 0
    %v2260 = vshrl.u32 %v2259, 5
    %v2261 = vand.u32 %v2259, 31
    %v2262 = vsub.s32 32, %v2261
    %v2263 = vshrl.u32 683565275, %v2262
    %v2264 = vshll.u32 683565275, %v2261
    %v2265 = vshrl.u32 2475754826, %v2262
    %v2266 = vor.u32 %v2264, %v2265
    %v2267 = vshll.u32 2475754826, %v2261
    %v2268 = vshrl.u32 2131351028, %v2262
    %v2269 = vor.u32 %v2267, %v2268
    %v2270 = vshll.u32 2131351028, %v2261
    %v2271 = vshrl.u32 2102212464, %v2262
    %v2272 = vor.u32 %v2270, %v2271
    %v2273 = vshll.u32 2102212464, %v2261
    %v2274 = vshrl.u32 920167782, %v2262
    %v2275 = vor.u32 %v2273, %v2274
    %v2276 = vshll.u32 920167782, %v2261
    %v2277 = vshrl.u32 1326507024, %v2262
    %v2278 = vor.u32 %v2276, %v2277
    %vm2279 = vcmp.lt.s32.totalorder %v2260, 1
    %vm2280 = vcmp.lt.s32.totalorder %v2260, 2
    %vm2281 = vcmp.lt.s32.totalorder %v2260, 3
    %vm2282 = vcmp.lt.s32.totalorder %v2260, 4
    %v2283 = vsel %vm2279, %v2263, %v2266
    %v2284 = vsel %vm2282, %v2272, 2102212464
    %v2285 = vsel %vm2281, %v2269, %v2284
    %v2286 = vsel %vm2280, %v2283, %v2285
    %v2287 = vsel %vm2279, %v2266, %v2269
    %v2288 = vsel %vm2282, %v2275, 920167782
    %v2289 = vsel %vm2281, %v2272, %v2288
    %v2290 = vsel %vm2280, %v2287, %v2289
    %v2291 = vsel %vm2279, %v2269, %v2272
    %v2292 = vsel %vm2282, %v2278, 1326507024
    %v2293 = vsel %vm2281, %v2275, %v2292
    %v2294 = vsel %vm2280, %v2291, %v2293
    %v2295 = vshll.u32 %v2255, 8
    %v2296 = vmul.u32.u64.compose %v2295, %v2294
    %v2297 = vextract.low.u32 %v2296
    %v2298 = vextract.high.u32 %v2296
    %v2299 = vmul.u32.u64.compose %v2295, %v2290
    %v2300 = vextract.low.u32 %v2299
    %v2301 = vextract.high.u32 %v2299
    %v2302 = vmul.u32 %v2295, %v2286
    %v2303 = vadd.s32 %v2298, %v2300
    %vm2304 = vc.u32 %v2298, %v2300
    %v2305 = vadd.s32 %v2301, 1
    %v2306 = vsel %vm2304, %v2305, %v2301
    %v2307 = vadd.s32 %v2302, %v2306
    %v2308 = vadd.s32 %v2307, 536870912
    %v2309 = vshrl.u32 %v2308, 30
    %v2310 = vshll.u32 %v2309, 30
    %v2311 = vsub.s32 %v2307, %v2310
    %vm2312 = vcmp.lt.s32.totalorder %v2311, 0
    %v2313 = vsub.s32 0, %v2311
    %v2314 = vsel %vm2312, %v2313, %v2311
    %v2315 = vclz %v2314
    %v2316 = vsub.s32 %v2315, 2
    %vm2317 = vcmp.gt.s32.totalorder 0, %v2316
    %v2318 = vsel %vm2317, 0, %v2316
    %v2319 = vsub.s32 32, %v2318
    %v2320 = vshll.u32 %v2311, %v2318
    %v2321 = vshrl.u32 %v2303, %v2319
    %v2322 = vor.u32 %v2320, %v2321
    %v2323 = vsub.s32 4294967266, %v2318
    %v2324 = vadd.s32 %v2323, 127
    %v2325 = vshll.u32 %v2324, 23
    %v2326 = vor.u32 4788187, %v2325
    %v2327 = vand.u32 2147483647, %v2326
    %v2329 = vcvt.s32.f32 %v2322
    %v2330 = vmul.f32 %v2329, %v2327
    %v2331 = vxor.u32 %v2330, 2147483648
    %v2332 = vsel %vm2249, %v2331, %v2330
    %v2333 = vsub.s32 4, %v2309
    %v2334 = vsel %vm2249, %v2333, %v2309
    %v2335 = vsel %vm2248, %v783, %v2332
    %v2336 = vsel %vm2248, 0, %v2334
    %v2337 = vcosq.f32.pop %v2335
    %v2338 = vsinq.f32.pop %v2335
    %vm2339 = vweird.f32 %v783
    %v2340 = vand.u32 %v2336, 3
    %vm2341 = vcmp.lt.s32.totalorder %v2340, 2
    %vm2342 = vcmp.eq.s32.totalorder %v2340, 0
    %v2343 = vxor.u32 %v2338, 2147483648
    %v2344 = vsel %vm2342, %v2337, %v2343
    %vm2345 = vcmp.eq.s32.totalorder %v2340, 2
    %v2346 = vxor.u32 %v2337, 2147483648
    %v2347 = vsel %vm2345, %v2346, %v2338
    %v2348 = vsel %vm2341, %v2344, %v2347
    %v2349 = vsel %vm2339, nan, %v2348
    %v2350 = vand.u32 2147483647, %v784
    %vm2351 = vcmp.le.f32.partialorder %v2350, 0.7853982
    %vm2352 = vcmp.lt.s32.totalorder %v784, 0
    %v2353 = vand.u32 %v784, 2139095040
    %v2354 = vshrl.u32 %v2353, 23
    %v2355 = vsub.s32 %v2354, 127
    %v2356 = vand.u32 2147483647, %v784
    %v2357 = vand.u32 %v2356, 8388607
    %v2358 = vor.u32 %v2357, 8388608
    %v2359 = vsub.s32 0, %v2358
    %v2360 = vadd.s32 %v2355, 1
    %vm2361 = vcmp.gt.s32.totalorder %v2360, 0
    %v2362 = vsel %vm2361, %v2360, 0
    %v2363 = vshrl.u32 %v2362, 5
    %v2364 = vand.u32 %v2362, 31
    %v2365 = vsub.s32 32, %v2364
    %v2366 = vshrl.u32 683565275, %v2365
    %v2367 = vshll.u32 683565275, %v2364
    %v2368 = vshrl.u32 2475754826, %v2365
    %v2369 = vor.u32 %v2367, %v2368
    %v2370 = vshll.u32 2475754826, %v2364
    %v2371 = vshrl.u32 2131351028, %v2365
    %v2372 = vor.u32 %v2370, %v2371
    %v2373 = vshll.u32 2131351028, %v2364
    %v2374 = vshrl.u32 2102212464, %v2365
    %v2375 = vor.u32 %v2373, %v2374
    %v2376 = vshll.u32 2102212464, %v2364
    %v2377 = vshrl.u32 920167782, %v2365
    %v2378 = vor.u32 %v2376, %v2377
    %v2379 = vshll.u32 920167782, %v2364
    %v2380 = vshrl.u32 1326507024, %v2365
    %v2381 = vor.u32 %v2379, %v2380
    %vm2382 = vcmp.lt.s32.totalorder %v2363, 1
    %vm2383 = vcmp.lt.s32.totalorder %v2363, 2
    %vm2384 = vcmp.lt.s32.totalorder %v2363, 3
    %vm2385 = vcmp.lt.s32.totalorder %v2363, 4
    %v2386 = vsel %vm2382, %v2366, %v2369
    %v2387 = vsel %vm2385, %v2375, 2102212464
    %v2388 = vsel %vm2384, %v2372, %v2387
    %v2389 = vsel %vm2383, %v2386, %v2388
    %v2390 = vsel %vm2382, %v2369, %v2372
    %v2391 = vsel %vm2385, %v2378, 920167782
    %v2392 = vsel %vm2384, %v2375, %v2391
    %v2393 = vsel %vm2383, %v2390, %v2392
    %v2394 = vsel %vm2382, %v2372, %v2375
    %v2395 = vsel %vm2385, %v2381, 1326507024
    %v2396 = vsel %vm2384, %v2378, %v2395
    %v2397 = vsel %vm2383, %v2394, %v2396
    %v2398 = vshll.u32 %v2358, 8
    %v2399 = vmul.u32.u64.compose %v2398, %v2397
    %v2400 = vextract.low.u32 %v2399
    %v2401 = vextract.high.u32 %v2399
    %v2402 = vmul.u32.u64.compose %v2398, %v2393
    %v2403 = vextract.low.u32 %v2402
    %v2404 = vextract.high.u32 %v2402
    %v2405 = vmul.u32 %v2398, %v2389
    %v2406 = vadd.s32 %v2401, %v2403
    %vm2407 = vc.u32 %v2401, %v2403
    %v2408 = vadd.s32 %v2404, 1
    %v2409 = vsel %vm2407, %v2408, %v2404
    %v2410 = vadd.s32 %v2405, %v2409
    %v2411 = vadd.s32 %v2410, 536870912
    %v2412 = vshrl.u32 %v2411, 30
    %v2413 = vshll.u32 %v2412, 30
    %v2414 = vsub.s32 %v2410, %v2413
    %vm2415 = vcmp.lt.s32.totalorder %v2414, 0
    %v2416 = vsub.s32 0, %v2414
    %v2417 = vsel %vm2415, %v2416, %v2414
    %v2418 = vclz %v2417
    %v2419 = vsub.s32 %v2418, 2
    %vm2420 = vcmp.gt.s32.totalorder 0, %v2419
    %v2421 = vsel %vm2420, 0, %v2419
    %v2422 = vsub.s32 32, %v2421
    %v2423 = vshll.u32 %v2414, %v2421
    %v2424 = vshrl.u32 %v2406, %v2422
    %v2425 = vor.u32 %v2423, %v2424
    %v2426 = vsub.s32 4294967266, %v2421
    %v2427 = vadd.s32 %v2426, 127
    %v2428 = vshll.u32 %v2427, 23
    %v2429 = vor.u32 4788187, %v2428
    %v2430 = vand.u32 2147483647, %v2429
    %v2432 = vcvt.s32.f32 %v2425
    %v2433 = vmul.f32 %v2432, %v2430
    %v2434 = vxor.u32 %v2433, 2147483648
    %v2435 = vsel %vm2352, %v2434, %v2433
    %v2436 = vsub.s32 4, %v2412
    %v2437 = vsel %vm2352, %v2436, %v2412
    %v2438 = vsel %vm2351, %v784, %v2435
    %v2439 = vsel %vm2351, 0, %v2437
    %v2440 = vcosq.f32.pop %v2438
    %v2441 = vsinq.f32.pop %v2438
    %vm2442 = vweird.f32 %v784
    %v2443 = vand.u32 %v2439, 3
    %vm2444 = vcmp.lt.s32.totalorder %v2443, 2
    %vm2445 = vcmp.eq.s32.totalorder %v2443, 0
    %v2446 = vxor.u32 %v2441, 2147483648
    %v2447 = vsel %vm2445, %v2440, %v2446
    %vm2448 = vcmp.eq.s32.totalorder %v2443, 2
    %v2449 = vxor.u32 %v2440, 2147483648
    %v2450 = vsel %vm2448, %v2449, %v2441
    %v2451 = vsel %vm2444, %v2447, %v2450
    %v2452 = vsel %vm2442, nan, %v2451
    %v2453 = vsub.f32 %v1728, %v900
    %v2454 = vsub.f32 %v1832, %v1004
    %v2455 = vsub.f32 %v1936, %v1108
    %v2456 = vsub.f32 %v2040, %v1212
    %v2457 = vmul.f32 %v437, %v2453
    %v2458 = vmul.f32 %v438, %v2454
    %v2459 = vmul.f32 %v439, %v2455
    %v2460 = vmul.f32 %v440, %v2456
    %v2461 = vmul.f32 %v2457, %v790
    %v2462 = vmul.f32 %v2458, %v792
    %v2463 = vmul.f32 %v2459, %v794
    %v2464 = vmul.f32 %v2460, %v796
    %v2465 = vadd.f32 %v301, %v2461
    %v2466 = vadd.f32 %v302, %v2462
    %v2467 = vadd.f32 %v303, %v2463
    %v2468 = vadd.f32 %v304, %v2464
    %v2469 = vsub.f32 %v2143, %v1315
    %v2470 = vsub.f32 %v2246, %v1418
    %v2471 = vsub.f32 %v2349, %v1521
    %v2472 = vsub.f32 %v2452, %v1624
    %v2473 = vmul.f32 %v437, %v2469
    %v2474 = vmul.f32 %v438, %v2470
    %v2475 = vmul.f32 %v439, %v2471
    %v2476 = vmul.f32 %v440, %v2472
    %v2477 = vmul.f32 %v2473, %v790
    %v2478 = vmul.f32 %v2474, %v792
    %v2479 = vmul.f32 %v2475, %v794
    %v2480 = vmul.f32 %v2476, %v796
    %v2481 = vsub.f32 %v369, %v2477
    %v2482 = vsub.f32 %v370, %v2478
    %v2483 = vsub.f32 %v371, %v2479
    %v2484 = vsub.f32 %v372, %v2480
    %v2485 = vsub.f32 %v37, %v229
    %v2486 = vsub.f32 %v38, %v230
    %v2487 = vsub.f32 %v39, %v231
    %v2488 = vsub.f32 %v40, %v232
    %v2489 = vand.u32 2147483647, %v501
    %vm2490 = vcmp.le.f32.partialorder %v2489, 0.7853982
    %vm2491 = vcmp.lt.s32.totalorder %v501, 0
    %v2492 = vand.u32 %v501, 2139095040
    %v2493 = vshrl.u32 %v2492, 23
    %v2494 = vsub.s32 %v2493, 127
    %v2495 = vand.u32 2147483647, %v501
    %v2496 = vand.u32 %v2495, 8388607
    %v2497 = vor.u32 %v2496, 8388608
    %v2498 = vsub.s32 0, %v2497
    %v2499 = vadd.s32 %v2494, 1
    %vm2500 = vcmp.gt.s32.totalorder %v2499, 0
    %v2501 = vsel %vm2500, %v2499, 0
    %v2502 = vshrl.u32 %v2501, 5
    %v2503 = vand.u32 %v2501, 31
    %v2504 = vsub.s32 32, %v2503
    %v2505 = vshrl.u32 683565275, %v2504
    %v2506 = vshll.u32 683565275, %v2503
    %v2507 = vshrl.u32 2475754826, %v2504
    %v2508 = vor.u32 %v2506, %v2507
    %v2509 = vshll.u32 2475754826, %v2503
    %v2510 = vshrl.u32 2131351028, %v2504
    %v2511 = vor.u32 %v2509, %v2510
    %v2512 = vshll.u32 2131351028, %v2503
    %v2513 = vshrl.u32 2102212464, %v2504
    %v2514 = vor.u32 %v2512, %v2513
    %v2515 = vshll.u32 2102212464, %v2503
    %v2516 = vshrl.u32 920167782, %v2504
    %v2517 = vor.u32 %v2515, %v2516
    %v2518 = vshll.u32 920167782, %v2503
    %v2519 = vshrl.u32 1326507024, %v2504
    %v2520 = vor.u32 %v2518, %v2519
    %vm2521 = vcmp.lt.s32.totalorder %v2502, 1
    %vm2522 = vcmp.lt.s32.totalorder %v2502, 2
    %vm2523 = vcmp.lt.s32.totalorder %v2502, 3
    %vm2524 = vcmp.lt.s32.totalorder %v2502, 4
    %v2525 = vsel %vm2521, %v2505, %v2508
    %v2526 = vsel %vm2524, %v2514, 2102212464
    %v2527 = vsel %vm2523, %v2511, %v2526
    %v2528 = vsel %vm2522, %v2525, %v2527
    %v2529 = vsel %vm2521, %v2508, %v2511
    %v2530 = vsel %vm2524, %v2517, 920167782
    %v2531 = vsel %vm2523, %v2514, %v2530
    %v2532 = vsel %vm2522, %v2529, %v2531
    %v2533 = vsel %vm2521, %v2511, %v2514
    %v2534 = vsel %vm2524, %v2520, 1326507024
    %v2535 = vsel %vm2523, %v2517, %v2534
    %v2536 = vsel %vm2522, %v2533, %v2535
    %v2537 = vshll.u32 %v2497, 8
    %v2538 = vmul.u32.u64.compose %v2537, %v2536
    %v2539 = vextract.low.u32 %v2538
    %v2540 = vextract.high.u32 %v2538
    %v2541 = vmul.u32.u64.compose %v2537, %v2532
    %v2542 = vextract.low.u32 %v2541
    %v2543 = vextract.high.u32 %v2541
    %v2544 = vmul.u32 %v2537, %v2528
    %v2545 = vadd.s32 %v2540, %v2542
    %vm2546 = vc.u32 %v2540, %v2542
    %v2547 = vadd.s32 %v2543, 1
    %v2548 = vsel %vm2546, %v2547, %v2543
    %v2549 = vadd.s32 %v2544, %v2548
    %v2550 = vadd.s32 %v2549, 536870912
    %v2551 = vshrl.u32 %v2550, 30
    %v2552 = vshll.u32 %v2551, 30
    %v2553 = vsub.s32 %v2549, %v2552
    %vm2554 = vcmp.lt.s32.totalorder %v2553, 0
    %v2555 = vsub.s32 0, %v2553
    %v2556 = vsel %vm2554, %v2555, %v2553
    %v2557 = vclz %v2556
    %v2558 = vsub.s32 %v2557, 2
    %vm2559 = vcmp.gt.s32.totalorder 0, %v2558
    %v2560 = vsel %vm2559, 0, %v2558
    %v2561 = vsub.s32 32, %v2560
    %v2562 = vshll.u32 %v2553, %v2560
    %v2563 = vshrl.u32 %v2545, %v2561
    %v2564 = vor.u32 %v2562, %v2563
    %v2565 = vsub.s32 4294967266, %v2560
    %v2566 = vadd.s32 %v2565, 127
    %v2567 = vshll.u32 %v2566, 23
    %v2568 = vor.u32 4788187, %v2567
    %v2569 = vand.u32 2147483647, %v2568
    %v2571 = vcvt.s32.f32 %v2564
    %v2572 = vmul.f32 %v2571, %v2569
    %v2573 = vxor.u32 %v2572, 2147483648
    %v2574 = vsel %vm2491, %v2573, %v2572
    %v2575 = vsub.s32 4, %v2551
    %v2576 = vsel %vm2491, %v2575, %v2551
    %v2577 = vsel %vm2490, %v501, %v2574
    %v2578 = vsel %vm2490, 0, %v2576
    %v2579 = vcosq.f32.pop %v2577
    %v2580 = vsinq.f32.pop %v2577
    %vm2581 = vweird.f32 %v501
    %v2582 = vand.u32 %v2578, 3
    %vm2583 = vcmp.lt.s32.totalorder %v2582, 2
    %vm2584 = vcmp.eq.s32.totalorder %v2582, 0
    %v2585 = vxor.u32 %v2580, 2147483648
    %v2586 = vsel %vm2584, %v2579, %v2585
    %vm2587 = vcmp.eq.s32.totalorder %v2582, 2
    %v2588 = vxor.u32 %v2579, 2147483648
    %v2589 = vsel %vm2587, %v2588, %v2580
    %v2590 = vsel %vm2583, %v2586, %v2589
    %v2591 = vsel %vm2581, nan, %v2590
    %v2592 = vand.u32 2147483647, %v502
    %vm2593 = vcmp.le.f32.partialorder %v2592, 0.7853982
    %vm2594 = vcmp.lt.s32.totalorder %v502, 0
    %v2595 = vand.u32 %v502, 2139095040
    %v2596 = vshrl.u32 %v2595, 23
    %v2597 = vsub.s32 %v2596, 127
    %v2598 = vand.u32 2147483647, %v502
    %v2599 = vand.u32 %v2598, 8388607
    %v2600 = vor.u32 %v2599, 8388608
    %v2601 = vsub.s32 0, %v2600
    %v2602 = vadd.s32 %v2597, 1
    %vm2603 = vcmp.gt.s32.totalorder %v2602, 0
    %v2604 = vsel %vm2603, %v2602, 0
    %v2605 = vshrl.u32 %v2604, 5
    %v2606 = vand.u32 %v2604, 31
    %v2607 = vsub.s32 32, %v2606
    %v2608 = vshrl.u32 683565275, %v2607
    %v2609 = vshll.u32 683565275, %v2606
    %v2610 = vshrl.u32 2475754826, %v2607
    %v2611 = vor.u32 %v2609, %v2610
    %v2612 = vshll.u32 2475754826, %v2606
    %v2613 = vshrl.u32 2131351028, %v2607
    %v2614 = vor.u32 %v2612, %v2613
    %v2615 = vshll.u32 2131351028, %v2606
    %v2616 = vshrl.u32 2102212464, %v2607
    %v2617 = vor.u32 %v2615, %v2616
    %v2618 = vshll.u32 2102212464, %v2606
    %v2619 = vshrl.u32 920167782, %v2607
    %v2620 = vor.u32 %v2618, %v2619
    %v2621 = vshll.u32 920167782, %v2606
    %v2622 = vshrl.u32 1326507024, %v2607
    %v2623 = vor.u32 %v2621, %v2622
    %vm2624 = vcmp.lt.s32.totalorder %v2605, 1
    %vm2625 = vcmp.lt.s32.totalorder %v2605, 2
    %vm2626 = vcmp.lt.s32.totalorder %v2605, 3
    %vm2627 = vcmp.lt.s32.totalorder %v2605, 4
    %v2628 = vsel %vm2624, %v2608, %v2611
    %v2629 = vsel %vm2627, %v2617, 2102212464
    %v2630 = vsel %vm2626, %v2614, %v2629
    %v2631 = vsel %vm2625, %v2628, %v2630
    %v2632 = vsel %vm2624, %v2611, %v2614
    %v2633 = vsel %vm2627, %v2620, 920167782
    %v2634 = vsel %vm2626, %v2617, %v2633
    %v2635 = vsel %vm2625, %v2632, %v2634
    %v2636 = vsel %vm2624, %v2614, %v2617
    %v2637 = vsel %vm2627, %v2623, 1326507024
    %v2638 = vsel %vm2626, %v2620, %v2637
    %v2639 = vsel %vm2625, %v2636, %v2638
    %v2640 = vshll.u32 %v2600, 8
    %v2641 = vmul.u32.u64.compose %v2640, %v2639
    %v2642 = vextract.low.u32 %v2641
    %v2643 = vextract.high.u32 %v2641
    %v2644 = vmul.u32.u64.compose %v2640, %v2635
    %v2645 = vextract.low.u32 %v2644
    %v2646 = vextract.high.u32 %v2644
    %v2647 = vmul.u32 %v2640, %v2631
    %v2648 = vadd.s32 %v2643, %v2645
    %vm2649 = vc.u32 %v2643, %v2645
    %v2650 = vadd.s32 %v2646, 1
    %v2651 = vsel %vm2649, %v2650, %v2646
    %v2652 = vadd.s32 %v2647, %v2651
    %v2653 = vadd.s32 %v2652, 536870912
    %v2654 = vshrl.u32 %v2653, 30
    %v2655 = vshll.u32 %v2654, 30
    %v2656 = vsub.s32 %v2652, %v2655
    %vm2657 = vcmp.lt.s32.totalorder %v2656, 0
    %v2658 = vsub.s32 0, %v2656
    %v2659 = vsel %vm2657, %v2658, %v2656
    %v2660 = vclz %v2659
    %v2661 = vsub.s32 %v2660, 2
    %vm2662 = vcmp.gt.s32.totalorder 0, %v2661
    %v2663 = vsel %vm2662, 0, %v2661
    %v2664 = vsub.s32 32, %v2663
    %v2665 = vshll.u32 %v2656, %v2663
    %v2666 = vshrl.u32 %v2648, %v2664
    %v2667 = vor.u32 %v2665, %v2666
    %v2668 = vsub.s32 4294967266, %v2663
    %v2669 = vadd.s32 %v2668, 127
    %v2670 = vshll.u32 %v2669, 23
    %v2671 = vor.u32 4788187, %v2670
    %v2672 = vand.u32 2147483647, %v2671
    %v2674 = vcvt.s32.f32 %v2667
    %v2675 = vmul.f32 %v2674, %v2672
    %v2676 = vxor.u32 %v2675, 2147483648
    %v2677 = vsel %vm2594, %v2676, %v2675
    %v2678 = vsub.s32 4, %v2654
    %v2679 = vsel %vm2594, %v2678, %v2654
    %v2680 = vsel %vm2593, %v502, %v2677
    %v2681 = vsel %vm2593, 0, %v2679
    %v2682 = vcosq.f32.pop %v2680
    %v2683 = vsinq.f32.pop %v2680
    %vm2684 = vweird.f32 %v502
    %v2685 = vand.u32 %v2681, 3
    %vm2686 = vcmp.lt.s32.totalorder %v2685, 2
    %vm2687 = vcmp.eq.s32.totalorder %v2685, 0
    %v2688 = vxor.u32 %v2683, 2147483648
    %v2689 = vsel %vm2687, %v2682, %v2688
    %vm2690 = vcmp.eq.s32.totalorder %v2685, 2
    %v2691 = vxor.u32 %v2682, 2147483648
    %v2692 = vsel %vm2690, %v2691, %v2683
    %v2693 = vsel %vm2686, %v2689, %v2692
    %v2694 = vsel %vm2684, nan, %v2693
    %v2695 = vand.u32 2147483647, %v503
    %vm2696 = vcmp.le.f32.partialorder %v2695, 0.7853982
    %vm2697 = vcmp.lt.s32.totalorder %v503, 0
    %v2698 = vand.u32 %v503, 2139095040
    %v2699 = vshrl.u32 %v2698, 23
    %v2700 = vsub.s32 %v2699, 127
    %v2701 = vand.u32 2147483647, %v503
    %v2702 = vand.u32 %v2701, 8388607
    %v2703 = vor.u32 %v2702, 8388608
    %v2704 = vsub.s32 0, %v2703
    %v2705 = vadd.s32 %v2700, 1
    %vm2706 = vcmp.gt.s32.totalorder %v2705, 0
    %v2707 = vsel %vm2706, %v2705, 0
    %v2708 = vshrl.u32 %v2707, 5
    %v2709 = vand.u32 %v2707, 31
    %v2710 = vsub.s32 32, %v2709
    %v2711 = vshrl.u32 683565275, %v2710
    %v2712 = vshll.u32 683565275, %v2709
    %v2713 = vshrl.u32 2475754826, %v2710
    %v2714 = vor.u32 %v2712, %v2713
    %v2715 = vshll.u32 2475754826, %v2709
    %v2716 = vshrl.u32 2131351028, %v2710
    %v2717 = vor.u32 %v2715, %v2716
    %v2718 = vshll.u32 2131351028, %v2709
    %v2719 = vshrl.u32 2102212464, %v2710
    %v2720 = vor.u32 %v2718, %v2719
    %v2721 = vshll.u32 2102212464, %v2709
    %v2722 = vshrl.u32 920167782, %v2710
    %v2723 = vor.u32 %v2721, %v2722
    %v2724 = vshll.u32 920167782, %v2709
    %v2725 = vshrl.u32 1326507024, %v2710
    %v2726 = vor.u32 %v2724, %v2725
    %vm2727 = vcmp.lt.s32.totalorder %v2708, 1
    %vm2728 = vcmp.lt.s32.totalorder %v2708, 2
    %vm2729 = vcmp.lt.s32.totalorder %v2708, 3
    %vm2730 = vcmp.lt.s32.totalorder %v2708, 4
    %v2731 = vsel %vm2727, %v2711, %v2714
    %v2732 = vsel %vm2730, %v2720, 2102212464
    %v2733 = vsel %vm2729, %v2717, %v2732
    %v2734 = vsel %vm2728, %v2731, %v2733
    %v2735 = vsel %vm2727, %v2714, %v2717
    %v2736 = vsel %vm2730, %v2723, 920167782
    %v2737 = vsel %vm2729, %v2720, %v2736
    %v2738 = vsel %vm2728, %v2735, %v2737
    %v2739 = vsel %vm2727, %v2717, %v2720
    %v2740 = vsel %vm2730, %v2726, 1326507024
    %v2741 = vsel %vm2729, %v2723, %v2740
    %v2742 = vsel %vm2728, %v2739, %v2741
    %v2743 = vshll.u32 %v2703, 8
    %v2744 = vmul.u32.u64.compose %v2743, %v2742
    %v2745 = vextract.low.u32 %v2744
    %v2746 = vextract.high.u32 %v2744
    %v2747 = vmul.u32.u64.compose %v2743, %v2738
    %v2748 = vextract.low.u32 %v2747
    %v2749 = vextract.high.u32 %v2747
    %v2750 = vmul.u32 %v2743, %v2734
    %v2751 = vadd.s32 %v2746, %v2748
    %vm2752 = vc.u32 %v2746, %v2748
    %v2753 = vadd.s32 %v2749, 1
    %v2754 = vsel %vm2752, %v2753, %v2749
    %v2755 = vadd.s32 %v2750, %v2754
    %v2756 = vadd.s32 %v2755, 536870912
    %v2757 = vshrl.u32 %v2756, 30
    %v2758 = vshll.u32 %v2757, 30
    %v2759 = vsub.s32 %v2755, %v2758
    %vm2760 = vcmp.lt.s32.totalorder %v2759, 0
    %v2761 = vsub.s32 0, %v2759
    %v2762 = vsel %vm2760, %v2761, %v2759
    %v2763 = vclz %v2762
    %v2764 = vsub.s32 %v2763, 2
    %vm2765 = vcmp.gt.s32.totalorder 0, %v2764
    %v2766 = vsel %vm2765, 0, %v2764
    %v2767 = vsub.s32 32, %v2766
    %v2768 = vshll.u32 %v2759, %v2766
    %v2769 = vshrl.u32 %v2751, %v2767
    %v2770 = vor.u32 %v2768, %v2769
    %v2771 = vsub.s32 4294967266, %v2766
    %v2772 = vadd.s32 %v2771, 127
    %v2773 = vshll.u32 %v2772, 23
    %v2774 = vor.u32 4788187, %v2773
    %v2775 = vand.u32 2147483647, %v2774
    %v2777 = vcvt.s32.f32 %v2770
    %v2778 = vmul.f32 %v2777, %v2775
    %v2779 = vxor.u32 %v2778, 2147483648
    %v2780 = vsel %vm2697, %v2779, %v2778
    %v2781 = vsub.s32 4, %v2757
    %v2782 = vsel %vm2697, %v2781, %v2757
    %v2783 = vsel %vm2696, %v503, %v2780
    %v2784 = vsel %vm2696, 0, %v2782
    %v2785 = vcosq.f32.pop %v2783
    %v2786 = vsinq.f32.pop %v2783
    %vm2787 = vweird.f32 %v503
    %v2788 = vand.u32 %v2784, 3
    %vm2789 = vcmp.lt.s32.totalorder %v2788, 2
    %vm2790 = vcmp.eq.s32.totalorder %v2788, 0
    %v2791 = vxor.u32 %v2786, 2147483648
    %v2792 = vsel %vm2790, %v2785, %v2791
    %vm2793 = vcmp.eq.s32.totalorder %v2788, 2
    %v2794 = vxor.u32 %v2785, 2147483648
    %v2795 = vsel %vm2793, %v2794, %v2786
    %v2796 = vsel %vm2789, %v2792, %v2795
    %v2797 = vsel %vm2787, nan, %v2796
    %v2798 = vand.u32 2147483647, %v504
    %vm2799 = vcmp.le.f32.partialorder %v2798, 0.7853982
    %vm2800 = vcmp.lt.s32.totalorder %v504, 0
    %v2801 = vand.u32 %v504, 2139095040
    %v2802 = vshrl.u32 %v2801, 23
    %v2803 = vsub.s32 %v2802, 127
    %v2804 = vand.u32 2147483647, %v504
    %v2805 = vand.u32 %v2804, 8388607
    %v2806 = vor.u32 %v2805, 8388608
    %v2807 = vsub.s32 0, %v2806
    %v2808 = vadd.s32 %v2803, 1
    %vm2809 = vcmp.gt.s32.totalorder %v2808, 0
    %v2810 = vsel %vm2809, %v2808, 0
    %v2811 = vshrl.u32 %v2810, 5
    %v2812 = vand.u32 %v2810, 31
    %v2813 = vsub.s32 32, %v2812
    %v2814 = vshrl.u32 683565275, %v2813
    %v2815 = vshll.u32 683565275, %v2812
    %v2816 = vshrl.u32 2475754826, %v2813
    %v2817 = vor.u32 %v2815, %v2816
    %v2818 = vshll.u32 2475754826, %v2812
    %v2819 = vshrl.u32 2131351028, %v2813
    %v2820 = vor.u32 %v2818, %v2819
    %v2821 = vshll.u32 2131351028, %v2812
    %v2822 = vshrl.u32 2102212464, %v2813
    %v2823 = vor.u32 %v2821, %v2822
    %v2824 = vshll.u32 2102212464, %v2812
    %v2825 = vshrl.u32 920167782, %v2813
    %v2826 = vor.u32 %v2824, %v2825
    %v2827 = vshll.u32 920167782, %v2812
    %v2828 = vshrl.u32 1326507024, %v2813
    %v2829 = vor.u32 %v2827, %v2828
    %vm2830 = vcmp.lt.s32.totalorder %v2811, 1
    %vm2831 = vcmp.lt.s32.totalorder %v2811, 2
    %vm2832 = vcmp.lt.s32.totalorder %v2811, 3
    %vm2833 = vcmp.lt.s32.totalorder %v2811, 4
    %v2834 = vsel %vm2830, %v2814, %v2817
    %v2835 = vsel %vm2833, %v2823, 2102212464
    %v2836 = vsel %vm2832, %v2820, %v2835
    %v2837 = vsel %vm2831, %v2834, %v2836
    %v2838 = vsel %vm2830, %v2817, %v2820
    %v2839 = vsel %vm2833, %v2826, 920167782
    %v2840 = vsel %vm2832, %v2823, %v2839
    %v2841 = vsel %vm2831, %v2838, %v2840
    %v2842 = vsel %vm2830, %v2820, %v2823
    %v2843 = vsel %vm2833, %v2829, 1326507024
    %v2844 = vsel %vm2832, %v2826, %v2843
    %v2845 = vsel %vm2831, %v2842, %v2844
    %v2846 = vshll.u32 %v2806, 8
    %v2847 = vmul.u32.u64.compose %v2846, %v2845
    %v2848 = vextract.low.u32 %v2847
    %v2849 = vextract.high.u32 %v2847
    %v2850 = vmul.u32.u64.compose %v2846, %v2841
    %v2851 = vextract.low.u32 %v2850
    %v2852 = vextract.high.u32 %v2850
    %v2853 = vmul.u32 %v2846, %v2837
    %v2854 = vadd.s32 %v2849, %v2851
    %vm2855 = vc.u32 %v2849, %v2851
    %v2856 = vadd.s32 %v2852, 1
    %v2857 = vsel %vm2855, %v2856, %v2852
    %v2858 = vadd.s32 %v2853, %v2857
    %v2859 = vadd.s32 %v2858, 536870912
    %v2860 = vshrl.u32 %v2859, 30
    %v2861 = vshll.u32 %v2860, 30
    %v2862 = vsub.s32 %v2858, %v2861
    %vm2863 = vcmp.lt.s32.totalorder %v2862, 0
    %v2864 = vsub.s32 0, %v2862
    %v2865 = vsel %vm2863, %v2864, %v2862
    %v2866 = vclz %v2865
    %v2867 = vsub.s32 %v2866, 2
    %vm2868 = vcmp.gt.s32.totalorder 0, %v2867
    %v2869 = vsel %vm2868, 0, %v2867
    %v2870 = vsub.s32 32, %v2869
    %v2871 = vshll.u32 %v2862, %v2869
    %v2872 = vshrl.u32 %v2854, %v2870
    %v2873 = vor.u32 %v2871, %v2872
    %v2874 = vsub.s32 4294967266, %v2869
    %v2875 = vadd.s32 %v2874, 127
    %v2876 = vshll.u32 %v2875, 23
    %v2877 = vor.u32 4788187, %v2876
    %v2878 = vand.u32 2147483647, %v2877
    %v2880 = vcvt.s32.f32 %v2873
    %v2881 = vmul.f32 %v2880, %v2878
    %v2882 = vxor.u32 %v2881, 2147483648
    %v2883 = vsel %vm2800, %v2882, %v2881
    %v2884 = vsub.s32 4, %v2860
    %v2885 = vsel %vm2800, %v2884, %v2860
    %v2886 = vsel %vm2799, %v504, %v2883
    %v2887 = vsel %vm2799, 0, %v2885
    %v2888 = vcosq.f32.pop %v2886
    %v2889 = vsinq.f32.pop %v2886
    %vm2890 = vweird.f32 %v504
    %v2891 = vand.u32 %v2887, 3
    %vm2892 = vcmp.lt.s32.totalorder %v2891, 2
    %vm2893 = vcmp.eq.s32.totalorder %v2891, 0
    %v2894 = vxor.u32 %v2889, 2147483648
    %v2895 = vsel %vm2893, %v2888, %v2894
    %vm2896 = vcmp.eq.s32.totalorder %v2891, 2
    %v2897 = vxor.u32 %v2888, 2147483648
    %v2898 = vsel %vm2896, %v2897, %v2889
    %v2899 = vsel %vm2892, %v2895, %v2898
    %v2900 = vsel %vm2890, nan, %v2899
    %v2901 = vmul.f32 %v2485, %v2591
    %v2902 = vmul.f32 %v2486, %v2694
    %v2903 = vmul.f32 %v2487, %v2797
    %v2904 = vmul.f32 %v2488, %v2900
    %v2905 = vmul.f32 %v2901, %v433
    %v2906 = vmul.f32 %v2902, %v434
    %v2907 = vmul.f32 %v2903, %v435
    %v2908 = vmul.f32 %v2904, %v436
    %v2909 = vadd.f32 %v297, %v2905
    %v2910 = vadd.f32 %v298, %v2906
    %v2911 = vadd.f32 %v299, %v2907
    %v2912 = vadd.f32 %v300, %v2908
    %v2913 = vand.u32 2147483647, %v501
    %vm2914 = vcmp.le.f32.partialorder %v2913, 0.7853982
    %vm2915 = vcmp.lt.s32.totalorder %v501, 0
    %v2916 = vand.u32 %v501, 2139095040
    %v2917 = vshrl.u32 %v2916, 23
    %v2918 = vsub.s32 %v2917, 127
    %v2919 = vand.u32 2147483647, %v501
    %v2920 = vand.u32 %v2919, 8388607
    %v2921 = vor.u32 %v2920, 8388608
    %v2922 = vsub.s32 0, %v2921
    %v2923 = vadd.s32 %v2918, 1
    %vm2924 = vcmp.gt.s32.totalorder %v2923, 0
    %v2925 = vsel %vm2924, %v2923, 0
    %v2926 = vshrl.u32 %v2925, 5
    %v2927 = vand.u32 %v2925, 31
    %v2928 = vsub.s32 32, %v2927
    %v2929 = vshrl.u32 683565275, %v2928
    %v2930 = vshll.u32 683565275, %v2927
    %v2931 = vshrl.u32 2475754826, %v2928
    %v2932 = vor.u32 %v2930, %v2931
    %v2933 = vshll.u32 2475754826, %v2927
    %v2934 = vshrl.u32 2131351028, %v2928
    %v2935 = vor.u32 %v2933, %v2934
    %v2936 = vshll.u32 2131351028, %v2927
    %v2937 = vshrl.u32 2102212464, %v2928
    %v2938 = vor.u32 %v2936, %v2937
    %v2939 = vshll.u32 2102212464, %v2927
    %v2940 = vshrl.u32 920167782, %v2928
    %v2941 = vor.u32 %v2939, %v2940
    %v2942 = vshll.u32 920167782, %v2927
    %v2943 = vshrl.u32 1326507024, %v2928
    %v2944 = vor.u32 %v2942, %v2943
    %vm2945 = vcmp.lt.s32.totalorder %v2926, 1
    %vm2946 = vcmp.lt.s32.totalorder %v2926, 2
    %vm2947 = vcmp.lt.s32.totalorder %v2926, 3
    %vm2948 = vcmp.lt.s32.totalorder %v2926, 4
    %v2949 = vsel %vm2945, %v2929, %v2932
    %v2950 = vsel %vm2948, %v2938, 2102212464
    %v2951 = vsel %vm2947, %v2935, %v2950
    %v2952 = vsel %vm2946, %v2949, %v2951
    %v2953 = vsel %vm2945, %v2932, %v2935
    %v2954 = vsel %vm2948, %v2941, 920167782
    %v2955 = vsel %vm2947, %v2938, %v2954
    %v2956 = vsel %vm2946, %v2953, %v2955
    %v2957 = vsel %vm2945, %v2935, %v2938
    %v2958 = vsel %vm2948, %v2944, 1326507024
    %v2959 = vsel %vm2947, %v2941, %v2958
    %v2960 = vsel %vm2946, %v2957, %v2959
    %v2961 = vshll.u32 %v2921, 8
    %v2962 = vmul.u32.u64.compose %v2961, %v2960
    %v2963 = vextract.low.u32 %v2962
    %v2964 = vextract.high.u32 %v2962
    %v2965 = vmul.u32.u64.compose %v2961, %v2956
    %v2966 = vextract.low.u32 %v2965
    %v2967 = vextract.high.u32 %v2965
    %v2968 = vmul.u32 %v2961, %v2952
    %v2969 = vadd.s32 %v2964, %v2966
    %vm2970 = vc.u32 %v2964, %v2966
    %v2971 = vadd.s32 %v2967, 1
    %v2972 = vsel %vm2970, %v2971, %v2967
    %v2973 = vadd.s32 %v2968, %v2972
    %v2974 = vadd.s32 %v2973, 536870912
    %v2975 = vshrl.u32 %v2974, 30
    %v2976 = vshll.u32 %v2975, 30
    %v2977 = vsub.s32 %v2973, %v2976
    %vm2978 = vcmp.lt.s32.totalorder %v2977, 0
    %v2979 = vsub.s32 0, %v2977
    %v2980 = vsel %vm2978, %v2979, %v2977
    %v2981 = vclz %v2980
    %v2982 = vsub.s32 %v2981, 2
    %vm2983 = vcmp.gt.s32.totalorder 0, %v2982
    %v2984 = vsel %vm2983, 0, %v2982
    %v2985 = vsub.s32 32, %v2984
    %v2986 = vshll.u32 %v2977, %v2984
    %v2987 = vshrl.u32 %v2969, %v2985
    %v2988 = vor.u32 %v2986, %v2987
    %v2989 = vsub.s32 4294967266, %v2984
    %v2990 = vadd.s32 %v2989, 127
    %v2991 = vshll.u32 %v2990, 23
    %v2992 = vor.u32 4788187, %v2991
    %v2993 = vand.u32 2147483647, %v2992
    %v2995 = vcvt.s32.f32 %v2988
    %v2996 = vmul.f32 %v2995, %v2993
    %v2997 = vxor.u32 %v2996, 2147483648
    %v2998 = vsel %vm2915, %v2997, %v2996
    %v2999 = vsub.s32 4, %v2975
    %v3000 = vsel %vm2915, %v2999, %v2975
    %v3001 = vsel %vm2914, %v501, %v2998
    %v3002 = vsel %vm2914, 0, %v3000
    %v3003 = vcosq.f32.pop %v3001
    %v3004 = vsinq.f32.pop %v3001
    %vm3005 = vweird.f32 %v501
    %v3006 = vadd.s32 %v3002, 3
    %v3007 = vand.u32 %v3006, 3
    %vm3008 = vcmp.lt.s32.totalorder %v3007, 2
    %vm3009 = vcmp.eq.s32.totalorder %v3007, 0
    %v3010 = vxor.u32 %v3004, 2147483648
    %v3011 = vsel %vm3009, %v3003, %v3010
    %vm3012 = vcmp.eq.s32.totalorder %v3007, 2
    %v3013 = vxor.u32 %v3003, 2147483648
    %v3014 = vsel %vm3012, %v3013, %v3004
    %v3015 = vsel %vm3008, %v3011, %v3014
    %v3016 = vsel %vm3005, nan, %v3015
    %v3017 = vand.u32 2147483647, %v502
    %vm3018 = vcmp.le.f32.partialorder %v3017, 0.7853982
    %vm3019 = vcmp.lt.s32.totalorder %v502, 0
    %v3020 = vand.u32 %v502, 2139095040
    %v3021 = vshrl.u32 %v3020, 23
    %v3022 = vsub.s32 %v3021, 127
    %v3023 = vand.u32 2147483647, %v502
    %v3024 = vand.u32 %v3023, 8388607
    %v3025 = vor.u32 %v3024, 8388608
    %v3026 = vsub.s32 0, %v3025
    %v3027 = vadd.s32 %v3022, 1
    %vm3028 = vcmp.gt.s32.totalorder %v3027, 0
    %v3029 = vsel %vm3028, %v3027, 0
    %v3030 = vshrl.u32 %v3029, 5
    %v3031 = vand.u32 %v3029, 31
    %v3032 = vsub.s32 32, %v3031
    %v3033 = vshrl.u32 683565275, %v3032
    %v3034 = vshll.u32 683565275, %v3031
    %v3035 = vshrl.u32 2475754826, %v3032
    %v3036 = vor.u32 %v3034, %v3035
    %v3037 = vshll.u32 2475754826, %v3031
    %v3038 = vshrl.u32 2131351028, %v3032
    %v3039 = vor.u32 %v3037, %v3038
    %v3040 = vshll.u32 2131351028, %v3031
    %v3041 = vshrl.u32 2102212464, %v3032
    %v3042 = vor.u32 %v3040, %v3041
    %v3043 = vshll.u32 2102212464, %v3031
    %v3044 = vshrl.u32 920167782, %v3032
    %v3045 = vor.u32 %v3043, %v3044
    %v3046 = vshll.u32 920167782, %v3031
    %v3047 = vshrl.u32 1326507024, %v3032
    %v3048 = vor.u32 %v3046, %v3047
    %vm3049 = vcmp.lt.s32.totalorder %v3030, 1
    %vm3050 = vcmp.lt.s32.totalorder %v3030, 2
    %vm3051 = vcmp.lt.s32.totalorder %v3030, 3
    %vm3052 = vcmp.lt.s32.totalorder %v3030, 4
    %v3053 = vsel %vm3049, %v3033, %v3036
    %v3054 = vsel %vm3052, %v3042, 2102212464
    %v3055 = vsel %vm3051, %v3039, %v3054
    %v3056 = vsel %vm3050, %v3053, %v3055
    %v3057 = vsel %vm3049, %v3036, %v3039
    %v3058 = vsel %vm3052, %v3045, 920167782
    %v3059 = vsel %vm3051, %v3042, %v3058
    %v3060 = vsel %vm3050, %v3057, %v3059
    %v3061 = vsel %vm3049, %v3039, %v3042
    %v3062 = vsel %vm3052, %v3048, 1326507024
    %v3063 = vsel %vm3051, %v3045, %v3062
    %v3064 = vsel %vm3050, %v3061, %v3063
    %v3065 = vshll.u32 %v3025, 8
    %v3066 = vmul.u32.u64.compose %v3065, %v3064
    %v3067 = vextract.low.u32 %v3066
    %v3068 = vextract.high.u32 %v3066
    %v3069 = vmul.u32.u64.compose %v3065, %v3060
    %v3070 = vextract.low.u32 %v3069
    %v3071 = vextract.high.u32 %v3069
    %v3072 = vmul.u32 %v3065, %v3056
    %v3073 = vadd.s32 %v3068, %v3070
    %vm3074 = vc.u32 %v3068, %v3070
    %v3075 = vadd.s32 %v3071, 1
    %v3076 = vsel %vm3074, %v3075, %v3071
    %v3077 = vadd.s32 %v3072, %v3076
    %v3078 = vadd.s32 %v3077, 536870912
    %v3079 = vshrl.u32 %v3078, 30
    %v3080 = vshll.u32 %v3079, 30
    %v3081 = vsub.s32 %v3077, %v3080
    %vm3082 = vcmp.lt.s32.totalorder %v3081, 0
    %v3083 = vsub.s32 0, %v3081
    %v3084 = vsel %vm3082, %v3083, %v3081
    %v3085 = vclz %v3084
    %v3086 = vsub.s32 %v3085, 2
    %vm3087 = vcmp.gt.s32.totalorder 0, %v3086
    %v3088 = vsel %vm3087, 0, %v3086
    %v3089 = vsub.s32 32, %v3088
    %v3090 = vshll.u32 %v3081, %v3088
    %v3091 = vshrl.u32 %v3073, %v3089
    %v3092 = vor.u32 %v3090, %v3091
    %v3093 = vsub.s32 4294967266, %v3088
    %v3094 = vadd.s32 %v3093, 127
    %v3095 = vshll.u32 %v3094, 23
    %v3096 = vor.u32 4788187, %v3095
    %v3097 = vand.u32 2147483647, %v3096
    %v3099 = vcvt.s32.f32 %v3092
    %v3100 = vmul.f32 %v3099, %v3097
    %v3101 = vxor.u32 %v3100, 2147483648
    %v3102 = vsel %vm3019, %v3101, %v3100
    %v3103 = vsub.s32 4, %v3079
    %v3104 = vsel %vm3019, %v3103, %v3079
    %v3105 = vsel %vm3018, %v502, %v3102
    %v3106 = vsel %vm3018, 0, %v3104
    %v3107 = vcosq.f32.pop %v3105
    %v3108 = vsinq.f32.pop %v3105
    %vm3109 = vweird.f32 %v502
    %v3110 = vadd.s32 %v3106, 3
    %v3111 = vand.u32 %v3110, 3
    %vm3112 = vcmp.lt.s32.totalorder %v3111, 2
    %vm3113 = vcmp.eq.s32.totalorder %v3111, 0
    %v3114 = vxor.u32 %v3108, 2147483648
    %v3115 = vsel %vm3113, %v3107, %v3114
    %vm3116 = vcmp.eq.s32.totalorder %v3111, 2
    %v3117 = vxor.u32 %v3107, 2147483648
    %v3118 = vsel %vm3116, %v3117, %v3108
    %v3119 = vsel %vm3112, %v3115, %v3118
    %v3120 = vsel %vm3109, nan, %v3119
    %v3121 = vand.u32 2147483647, %v503
    %vm3122 = vcmp.le.f32.partialorder %v3121, 0.7853982
    %vm3123 = vcmp.lt.s32.totalorder %v503, 0
    %v3124 = vand.u32 %v503, 2139095040
    %v3125 = vshrl.u32 %v3124, 23
    %v3126 = vsub.s32 %v3125, 127
    %v3127 = vand.u32 2147483647, %v503
    %v3128 = vand.u32 %v3127, 8388607
    %v3129 = vor.u32 %v3128, 8388608
    %v3130 = vsub.s32 0, %v3129
    %v3131 = vadd.s32 %v3126, 1
    %vm3132 = vcmp.gt.s32.totalorder %v3131, 0
    %v3133 = vsel %vm3132, %v3131, 0
    %v3134 = vshrl.u32 %v3133, 5
    %v3135 = vand.u32 %v3133, 31
    %v3136 = vsub.s32 32, %v3135
    %v3137 = vshrl.u32 683565275, %v3136
    %v3138 = vshll.u32 683565275, %v3135
    %v3139 = vshrl.u32 2475754826, %v3136
    %v3140 = vor.u32 %v3138, %v3139
    %v3141 = vshll.u32 2475754826, %v3135
    %v3142 = vshrl.u32 2131351028, %v3136
    %v3143 = vor.u32 %v3141, %v3142
    %v3144 = vshll.u32 2131351028, %v3135
    %v3145 = vshrl.u32 2102212464, %v3136
    %v3146 = vor.u32 %v3144, %v3145
    %v3147 = vshll.u32 2102212464, %v3135
    %v3148 = vshrl.u32 920167782, %v3136
    %v3149 = vor.u32 %v3147, %v3148
    %v3150 = vshll.u32 920167782, %v3135
    %v3151 = vshrl.u32 1326507024, %v3136
    %v3152 = vor.u32 %v3150, %v3151
    %vm3153 = vcmp.lt.s32.totalorder %v3134, 1
    %vm3154 = vcmp.lt.s32.totalorder %v3134, 2
    %vm3155 = vcmp.lt.s32.totalorder %v3134, 3
    %vm3156 = vcmp.lt.s32.totalorder %v3134, 4
    %v3157 = vsel %vm3153, %v3137, %v3140
    %v3158 = vsel %vm3156, %v3146, 2102212464
    %v3159 = vsel %vm3155, %v3143, %v3158
    %v3160 = vsel %vm3154, %v3157, %v3159
    %v3161 = vsel %vm3153, %v3140, %v3143
    %v3162 = vsel %vm3156, %v3149, 920167782
    %v3163 = vsel %vm3155, %v3146, %v3162
    %v3164 = vsel %vm3154, %v3161, %v3163
    %v3165 = vsel %vm3153, %v3143, %v3146
    %v3166 = vsel %vm3156, %v3152, 1326507024
    %v3167 = vsel %vm3155, %v3149, %v3166
    %v3168 = vsel %vm3154, %v3165, %v3167
    %v3169 = vshll.u32 %v3129, 8
    %v3170 = vmul.u32.u64.compose %v3169, %v3168
    %v3171 = vextract.low.u32 %v3170
    %v3172 = vextract.high.u32 %v3170
    %v3173 = vmul.u32.u64.compose %v3169, %v3164
    %v3174 = vextract.low.u32 %v3173
    %v3175 = vextract.high.u32 %v3173
    %v3176 = vmul.u32 %v3169, %v3160
    %v3177 = vadd.s32 %v3172, %v3174
    %vm3178 = vc.u32 %v3172, %v3174
    %v3179 = vadd.s32 %v3175, 1
    %v3180 = vsel %vm3178, %v3179, %v3175
    %v3181 = vadd.s32 %v3176, %v3180
    %v3182 = vadd.s32 %v3181, 536870912
    %v3183 = vshrl.u32 %v3182, 30
    %v3184 = vshll.u32 %v3183, 30
    %v3185 = vsub.s32 %v3181, %v3184
    %vm3186 = vcmp.lt.s32.totalorder %v3185, 0
    %v3187 = vsub.s32 0, %v3185
    %v3188 = vsel %vm3186, %v3187, %v3185
    %v3189 = vclz %v3188
    %v3190 = vsub.s32 %v3189, 2
    %vm3191 = vcmp.gt.s32.totalorder 0, %v3190
    %v3192 = vsel %vm3191, 0, %v3190
    %v3193 = vsub.s32 32, %v3192
    %v3194 = vshll.u32 %v3185, %v3192
    %v3195 = vshrl.u32 %v3177, %v3193
    %v3196 = vor.u32 %v3194, %v3195
    %v3197 = vsub.s32 4294967266, %v3192
    %v3198 = vadd.s32 %v3197, 127
    %v3199 = vshll.u32 %v3198, 23
    %v3200 = vor.u32 4788187, %v3199
    %v3201 = vand.u32 2147483647, %v3200
    %v3203 = vcvt.s32.f32 %v3196
    %v3204 = vmul.f32 %v3203, %v3201
    %v3205 = vxor.u32 %v3204, 2147483648
    %v3206 = vsel %vm3123, %v3205, %v3204
    %v3207 = vsub.s32 4, %v3183
    %v3208 = vsel %vm3123, %v3207, %v3183
    %v3209 = vsel %vm3122, %v503, %v3206
    %v3210 = vsel %vm3122, 0, %v3208
    %v3211 = vcosq.f32.pop %v3209
    %v3212 = vsinq.f32.pop %v3209
    %vm3213 = vweird.f32 %v503
    %v3214 = vadd.s32 %v3210, 3
    %v3215 = vand.u32 %v3214, 3
    %vm3216 = vcmp.lt.s32.totalorder %v3215, 2
    %vm3217 = vcmp.eq.s32.totalorder %v3215, 0
    %v3218 = vxor.u32 %v3212, 2147483648
    %v3219 = vsel %vm3217, %v3211, %v3218
    %vm3220 = vcmp.eq.s32.totalorder %v3215, 2
    %v3221 = vxor.u32 %v3211, 2147483648
    %v3222 = vsel %vm3220, %v3221, %v3212
    %v3223 = vsel %vm3216, %v3219, %v3222
    %v3224 = vsel %vm3213, nan, %v3223
    %v3225 = vand.u32 2147483647, %v504
    %vm3226 = vcmp.le.f32.partialorder %v3225, 0.7853982
    %vm3227 = vcmp.lt.s32.totalorder %v504, 0
    %v3228 = vand.u32 %v504, 2139095040
    %v3229 = vshrl.u32 %v3228, 23
    %v3230 = vsub.s32 %v3229, 127
    %v3231 = vand.u32 2147483647, %v504
    %v3232 = vand.u32 %v3231, 8388607
    %v3233 = vor.u32 %v3232, 8388608
    %v3234 = vsub.s32 0, %v3233
    %v3235 = vadd.s32 %v3230, 1
    %vm3236 = vcmp.gt.s32.totalorder %v3235, 0
    %v3237 = vsel %vm3236, %v3235, 0
    %v3238 = vshrl.u32 %v3237, 5
    %v3239 = vand.u32 %v3237, 31
    %v3240 = vsub.s32 32, %v3239
    %v3241 = vshrl.u32 683565275, %v3240
    %v3242 = vshll.u32 683565275, %v3239
    %v3243 = vshrl.u32 2475754826, %v3240
    %v3244 = vor.u32 %v3242, %v3243
    %v3245 = vshll.u32 2475754826, %v3239
    %v3246 = vshrl.u32 2131351028, %v3240
    %v3247 = vor.u32 %v3245, %v3246
    %v3248 = vshll.u32 2131351028, %v3239
    %v3249 = vshrl.u32 2102212464, %v3240
    %v3250 = vor.u32 %v3248, %v3249
    %v3251 = vshll.u32 2102212464, %v3239
    %v3252 = vshrl.u32 920167782, %v3240
    %v3253 = vor.u32 %v3251, %v3252
    %v3254 = vshll.u32 920167782, %v3239
    %v3255 = vshrl.u32 1326507024, %v3240
    %v3256 = vor.u32 %v3254, %v3255
    %vm3257 = vcmp.lt.s32.totalorder %v3238, 1
    %vm3258 = vcmp.lt.s32.totalorder %v3238, 2
    %vm3259 = vcmp.lt.s32.totalorder %v3238, 3
    %vm3260 = vcmp.lt.s32.totalorder %v3238, 4
    %v3261 = vsel %vm3257, %v3241, %v3244
    %v3262 = vsel %vm3260, %v3250, 2102212464
    %v3263 = vsel %vm3259, %v3247, %v3262
    %v3264 = vsel %vm3258, %v3261, %v3263
    %v3265 = vsel %vm3257, %v3244, %v3247
    %v3266 = vsel %vm3260, %v3253, 920167782
    %v3267 = vsel %vm3259, %v3250, %v3266
    %v3268 = vsel %vm3258, %v3265, %v3267
    %v3269 = vsel %vm3257, %v3247, %v3250
    %v3270 = vsel %vm3260, %v3256, 1326507024
    %v3271 = vsel %vm3259, %v3253, %v3270
    %v3272 = vsel %vm3258, %v3269, %v3271
    %v3273 = vshll.u32 %v3233, 8
    %v3274 = vmul.u32.u64.compose %v3273, %v3272
    %v3275 = vextract.low.u32 %v3274
    %v3276 = vextract.high.u32 %v3274
    %v3277 = vmul.u32.u64.compose %v3273, %v3268
    %v3278 = vextract.low.u32 %v3277
    %v3279 = vextract.high.u32 %v3277
    %v3280 = vmul.u32 %v3273, %v3264
    %v3281 = vadd.s32 %v3276, %v3278
    %vm3282 = vc.u32 %v3276, %v3278
    %v3283 = vadd.s32 %v3279, 1
    %v3284 = vsel %vm3282, %v3283, %v3279
    %v3285 = vadd.s32 %v3280, %v3284
    %v3286 = vadd.s32 %v3285, 536870912
    %v3287 = vshrl.u32 %v3286, 30
    %v3288 = vshll.u32 %v3287, 30
    %v3289 = vsub.s32 %v3285, %v3288
    %vm3290 = vcmp.lt.s32.totalorder %v3289, 0
    %v3291 = vsub.s32 0, %v3289
    %v3292 = vsel %vm3290, %v3291, %v3289
    %v3293 = vclz %v3292
    %v3294 = vsub.s32 %v3293, 2
    %vm3295 = vcmp.gt.s32.totalorder 0, %v3294
    %v3296 = vsel %vm3295, 0, %v3294
    %v3297 = vsub.s32 32, %v3296
    %v3298 = vshll.u32 %v3289, %v3296
    %v3299 = vshrl.u32 %v3281, %v3297
    %v3300 = vor.u32 %v3298, %v3299
    %v3301 = vsub.s32 4294967266, %v3296
    %v3302 = vadd.s32 %v3301, 127
    %v3303 = vshll.u32 %v3302, 23
    %v3304 = vor.u32 4788187, %v3303
    %v3305 = vand.u32 2147483647, %v3304
    %v3307 = vcvt.s32.f32 %v3300
    %v3308 = vmul.f32 %v3307, %v3305
    %v3309 = vxor.u32 %v3308, 2147483648
    %v3310 = vsel %vm3227, %v3309, %v3308
    %v3311 = vsub.s32 4, %v3287
    %v3312 = vsel %vm3227, %v3311, %v3287
    %v3313 = vsel %vm3226, %v504, %v3310
    %v3314 = vsel %vm3226, 0, %v3312
    %v3315 = vcosq.f32.pop %v3313
    %v3316 = vsinq.f32.pop %v3313
    %vm3317 = vweird.f32 %v504
    %v3318 = vadd.s32 %v3314, 3
    %v3319 = vand.u32 %v3318, 3
    %vm3320 = vcmp.lt.s32.totalorder %v3319, 2
    %vm3321 = vcmp.eq.s32.totalorder %v3319, 0
    %v3322 = vxor.u32 %v3316, 2147483648
    %v3323 = vsel %vm3321, %v3315, %v3322
    %vm3324 = vcmp.eq.s32.totalorder %v3319, 2
    %v3325 = vxor.u32 %v3315, 2147483648
    %v3326 = vsel %vm3324, %v3325, %v3316
    %v3327 = vsel %vm3320, %v3323, %v3326
    %v3328 = vsel %vm3317, nan, %v3327
    %v3329 = vmul.f32 %v2485, %v3016
    %v3330 = vmul.f32 %v2486, %v3120
    %v3331 = vmul.f32 %v2487, %v3224
    %v3332 = vmul.f32 %v2488, %v3328
    %v3333 = vmul.f32 %v3329, %v433
    %v3334 = vmul.f32 %v3330, %v434
    %v3335 = vmul.f32 %v3331, %v435
    %v3336 = vmul.f32 %v3332, %v436
    %v3337 = vadd.f32 %v365, %v3333
    %v3338 = vadd.f32 %v366, %v3334
    %v3339 = vadd.f32 %v367, %v3335
    %v3340 = vadd.f32 %v368, %v3336
    %v3341 = vsel %vm725, %v297, %v2465
    %v3342 = vsel %vm726, %v298, %v2466
    %v3343 = vsel %vm727, %v299, %v2467
    %v3344 = vsel %vm728, %v300, %v2468
    %v3345 = vsel %vm721, %v2909, %v3341
    %v3346 = vsel %vm722, %v2910, %v3342
    %v3347 = vsel %vm723, %v2911, %v3343
    %v3348 = vsel %vm724, %v2912, %v3344
    %3349 = vst [vmem:[#allocation7] sm:$0xff] %v3345
    %3350 = vst [vmem:[#allocation7 + $0x8] sm:$0xff] %v3346
    %3351 = vst [vmem:[#allocation7 + $0x10] sm:$0xff] %v3347
    %3352 = vst [vmem:[#allocation7 + $0x18] sm:$0xff] %v3348
    %v3353 = vsel %vm725, %v365, %v2481
    %v3354 = vsel %vm726, %v366, %v2482
    %v3355 = vsel %vm727, %v367, %v2483
    %v3356 = vsel %vm728, %v368, %v2484
    %v3357 = vsel %vm721, %v3337, %v3353
    %v3358 = vsel %vm722, %v3338, %v3354
    %v3359 = vsel %vm723, %v3339, %v3355
    %v3360 = vsel %vm724, %v3340, %v3356
    %s3361 = scalar_lea.vmem [#allocation7], 32
    %3362 = vst [vmem:[%s3361] sm:$0xff] %v3357
    %3363 = vst [vmem:[%s3361 + $0x8] sm:$0xff] %v3358
    %3364 = vst [vmem:[%s3361 + $0x10] sm:$0xff] %v3359
    %3365 = vst [vmem:[%s3361 + $0x18] sm:$0xff] %v3360
    %v3366 = vsel %vm725, %v433, %v773
    %v3367 = vsel %vm726, %v434, %v774
    %v3368 = vsel %vm727, %v435, %v775
    %v3369 = vsel %vm728, %v436, %v776
    %v3370 = vsel %vm721, %v433, %v3366
    %v3371 = vsel %vm722, %v434, %v3367
    %v3372 = vsel %vm723, %v435, %v3368
    %v3373 = vsel %vm724, %v436, %v3369
    %s3374 = scalar_lea.vmem [#allocation7], 64
    %3375 = vst [vmem:[%s3374] sm:$0xff] %v3370
    %3376 = vst [vmem:[%s3374 + $0x8] sm:$0xff] %v3371
    %3377 = vst [vmem:[%s3374 + $0x10] sm:$0xff] %v3372
    %3378 = vst [vmem:[%s3374 + $0x18] sm:$0xff] %v3373
    %v3379 = vsel %vm725, %v569, %v573
    %v3380 = vsel %vm726, %v570, %v574
    %v3381 = vsel %vm727, %v571, %v575
    %v3382 = vsel %vm728, %v572, %v576
    %v3383 = vsel %vm721, %v569, %v3379
    %v3384 = vsel %vm722, %v570, %v3380
    %v3385 = vsel %vm723, %v571, %v3381
    %v3386 = vsel %vm724, %v572, %v3382
    %s3387 = scalar_lea.vmem [#allocation7], 96
    %3388 = vst [vmem:[%s3387] sm:$0xff] %v3383
    %3389 = vst [vmem:[%s3387 + $0x8] sm:$0xff] %v3384
    %3390 = vst [vmem:[%s3387 + $0x10] sm:$0xff] %v3385
    %3391 = vst [vmem:[%s3387 + $0x18] sm:$0xff] %v3386
    %v3392 = vsel %vm725, %v637, %v641
    %v3393 = vsel %vm726, %v638, %v642
    %v3394 = vsel %vm727, %v639, %v643
    %v3395 = vsel %vm728, %v640, %v644
    %v3396 = vsel %vm721, %v637, %v3392
    %v3397 = vsel %vm722, %v638, %v3393
    %v3398 = vsel %vm723, %v639, %v3394
    %v3399 = vsel %vm724, %v640, %v3395
    %s3400 = scalar_lea.vmem [#allocation7], 128
    %3401 = vst [vmem:[%s3400] sm:$0xff] %v3396
    %3402 = vst [vmem:[%s3400 + $0x8] sm:$0xff] %v3397
    %3403 = vst [vmem:[%s3400 + $0x10] sm:$0xff] %v3398
    %3404 = vst [vmem:[%s3400 + $0x18] sm:$0xff] %v3399
    %v3405 = vsel %vm725, %v501, %v781
    %v3406 = vsel %vm726, %v502, %v782
    %v3407 = vsel %vm727, %v503, %v783
    %v3408 = vsel %vm728, %v504, %v784
    %v3409 = vsel %vm721, %v501, %v3405
    %v3410 = vsel %vm722, %v502, %v3406
    %v3411 = vsel %vm723, %v503, %v3407
    %v3412 = vsel %vm724, %v504, %v3408
    %s3413 = scalar_lea.vmem [#allocation7], 160
    %3414 = vst [vmem:[%s3413] sm:$0xff] %v3409
    %3415 = vst [vmem:[%s3413 + $0x8] sm:$0xff] %v3410
    %3416 = vst [vmem:[%s3413 + $0x10] sm:$0xff] %v3411
    %3417 = vst [vmem:[%s3413 + $0x18] sm:$0xff] %v3412
    %v3418 = vsel %vm725, %v705, %v709
    %v3419 = vsel %vm726, %v706, %v710
    %v3420 = vsel %vm727, %v707, %v711
    %v3421 = vsel %vm728, %v708, %v712
    %v3422 = vsel %vm721, %v705, %v3418
    %v3423 = vsel %vm722, %v706, %v3419
    %v3424 = vsel %vm723, %v707, %v3420
    %v3425 = vsel %vm724, %v708, %v3421
    %s3426 = scalar_lea.vmem [#allocation7], 192
    %3427 = vst [vmem:[%s3426] sm:$0xff] %v3422
    %3428 = vst [vmem:[%s3426 + $0x8] sm:$0xff] %v3423
    %3429 = vst [vmem:[%s3426 + $0x10] sm:$0xff] %v3424
    %3430 = vst [vmem:[%s3426 + $0x18] sm:$0xff] %v3425
    // Predicated region
    $region18: #{_unicycle_pallas.1} parent=1 // pred_check
      _
    $region19: #{_unicycle_pallas.1} parent=1 // pred_check_branch
      %3432 = sbr.rel (0) target = $region21
    $region20: #{_unicycle_pallas.1} parent=1 // pred_region
      %s3434 = ssub.s32 3584, 3584
      %3435 = vsyncadd [#allocation4], %s3434
      %s3436 = sshll.u32 [#allocation7], 4
      %s3437 = int_to_ptr.vmem [resolvable:$true] %s3436
      %3442 = dma.vmem_to_hbm [thread:$0]  %s3437, 3584, %s2, [#allocation4], 128, 128, 8
    $region21: #{_unicycle_pallas.1} parent=1 // pred_fallthru
      _
    // Predicated region
    $region22: #{_unicycle_pallas.1} parent=1 // pred_check
      _
    $region23: #{_unicycle_pallas.1} parent=1 // pred_check_branch
      %3444 = sbr.rel (0) target = $region25
    $region24: #{_unicycle_pallas.1} parent=1 // pred_region
      %3445 = dma.done [#allocation4], 3584
    $region25: #{_unicycle_pallas.1} parent=1 // pred_fallthru
      _
    %3446 = vsyncpa [#allocation3], 1
    %3447 = vsyncpa [#allocation4], 1
    %3448 = vsyncpa [#allocation5], 1

</llo_original>
